<compile_context>
chip_gen: v7x
topology: tpu7x:2x2x1
jax: 0.10.0
libtpu: 0.0.40
codegen_flags: <defaults>
</compile_context>

<pallas_src>
import jax
import jax.numpy as jnp
from jax.experimental import pallas as pl
from jax.experimental.pallas import tpu as pltpu

VMEM_SPEC = pl.BlockSpec(memory_space=pltpu.MemorySpace.VMEM)


# ----------------------------- Pallas kernels ------------------------------

def _conv_relu_pool_kernel(p_ref, w_ref, b_ref, o_ref):
    # p: (4*n2p, 9*Cin) bf16 -- rows are the 4 pool taps (dy,dx) stacked, each
    #    block n2p rows (8-aligned) ordered (b, i, j); cols = folded 3x3*Cin.
    # w: (9*Cin, Cout) bf16   b: (1, Cout) f32   o: (n2p, Cout) bf16
    n2p = o_ref.shape[0]
    y = jnp.dot(p_ref[...], w_ref[...], preferred_element_type=jnp.float32)
    y = jnp.maximum(y + b_ref[...], 0.0)                       # bias + ReLU (f32)
    pooled = jnp.maximum(jnp.maximum(y[0 * n2p:1 * n2p], y[1 * n2p:2 * n2p]),
                         jnp.maximum(y[2 * n2p:3 * n2p], y[3 * n2p:4 * n2p]))
    o_ref[...] = pooled.astype(o_ref.dtype)


def _conv_relu_pool_mlp_kernel(p_ref, w3_ref, b3_ref, w1_ref, b1_ref,
                               w2_ref, b2_ref, o_ref, pool_ref, xs_ref):
    # Fused tail: conv3+bias+ReLU+pool, flatten, fc1+ReLU, fc2.
    # Everything (pooled map, flattened features, FC weights) stays in VMEM.
    n2p = pool_ref.shape[0]
    cout = w3_ref.shape[1]
    batch = o_ref.shape[0]
    rpos = xs_ref.shape[1] // cout          # H2*W2 spatial positions per image

    # conv3 as a single K=9*Cin matmul + fused bias/ReLU/2x2-max-pool epilogue
    y = jnp.dot(p_ref[...], w3_ref[...], preferred_element_type=jnp.float32)
    y = jnp.maximum(y + b3_ref[...], 0.0)
    pool_ref[...] = jnp.maximum(
        jnp.maximum(y[0 * n2p:1 * n2p], y[1 * n2p:2 * n2p]),
        jnp.maximum(y[2 * n2p:3 * n2p], y[3 * n2p:4 * n2p]))

    # Flatten to torch's x.view(B, -1) semantics.  fc1 weight rows were
    # pre-permuted to (i, j, c) order, so this is a per-image concat of the
    # rpos spatial rows into a (B, rpos*Cout) VMEM slab.
    for b in range(batch):
        for r in range(rpos):
            xs_ref[b:b + 1, r * cout:(r + 1) * cout] = \
                pool_ref[b * rpos + r:b * rpos + r + 1, :]

    # fc1 + ReLU + fc2 (weights resident in VMEM, bf16 MXU inputs, f32 accum)
    h = jnp.dot(xs_ref[...].astype(jnp.bfloat16), w1_ref[...],
                preferred_element_type=jnp.float32) + b1_ref[...]
    h = jnp.maximum(h, 0.0).astype(jnp.bfloat16)
    # TODO(synk): dropout(p=0.1) is identity at inference; training-mode dropout
    # would draw a mask with pltpu.prng_seed / pltpu.prng_random_bits here.
    o_ref[...] = jnp.dot(h, w2_ref[...],
                         preferred_element_type=jnp.float32) + b2_ref[...]


# ------------------------------ JAX glue ------------------------------------

def _im2col_tap_major(x):
    """x: (B,H,W,C) NHWC -> patches (4*n2p, 9*C) bf16.

    Rows are ordered (pool_dy, pool_dx, b, i, j) -- i.e. the four 2x2-pool taps
    stacked as contiguous blocks, each block padded to n2p (multiple of 8) rows
    so the in-kernel pool is three 8-aligned row-slice maxes.  Columns are the
    3x3*C conv taps folded into one contraction dim, ordered (ky, kx, c) to
    match w.reshape(9*C, Cout).  Only output pixels kept by the floor pool are
    materialized.
    """
    B, H, W, C = x.shape
    H2, W2 = H // 2, W // 2
    He, We = 2 * H2, 2 * W2
    n2 = B * H2 * W2
    n2p = ((n2 + 7) // 8) * 8
    xp = jnp.pad(x, ((0, 0), (1, 1), (1, 1), (0, 0)))          # SAME padding
    taps = [xp[:, ky:ky + He, kx:kx + We, :]
            for ky in range(3) for kx in range(3)]
    t = jnp.concatenate(taps, axis=-1)                         # (B, He, We, 9C)
    t = t.reshape(B, H2, 2, W2, 2, 9 * C)                      # h=(i,dy) w=(j,dx)
    t = jnp.transpose(t, (2, 4, 0, 1, 3, 5))                   # (dy,dx,b,i,j,9C)
    t = t.reshape(4, n2, 9 * C)
    t = jnp.pad(t, ((0, 0), (0, n2p - n2), (0, 0)))            # 8-align each tap block
    return t.reshape(4 * n2p, 9 * C).astype(jnp.bfloat16), n2p


def conv_relu_pool(x_nhwc, w_hwio, b):
    """3x3 SAME conv + bias + ReLU + 2x2 max-pool(floor) as ONE pallas_call."""
    B, H, W, Cin = x_nhwc.shape
    Cout = w_hwio.shape[-1]
    H2, W2 = H // 2, W // 2
    n2 = B * H2 * W2
    patches, n2p = _im2col_tap_major(x_nhwc)
    out = pl.pallas_call(
        _conv_relu_pool_kernel,
        out_shape=jax.ShapeDtypeStruct((n2p, Cout), jnp.bfloat16),
        in_specs=[VMEM_SPEC] * 3,
        out_specs=VMEM_SPEC,
    )(patches,
      w_hwio.reshape(9 * Cin, Cout).astype(jnp.bfloat16),
      b.reshape(1, Cout).astype(jnp.float32))
    return out[:n2].reshape(B, H2, W2, Cout)


def conv_relu_pool_mlp(x_nhwc, w3, b3, fc1_w, fc1_b, fc2_w, fc2_b):
    """Fused conv3(+ReLU+pool) + flatten + fc1(+ReLU) + fc2 as ONE pallas_call."""
    B, H, W, Cin = x_nhwc.shape
    Cout = w3.shape[-1]
    H2, W2 = H // 2, W // 2
    patches, n2p = _im2col_tap_major(x_nhwc)
    n_feat = H2 * W2 * Cout                                    # 3*3*32 = 288
    n_hidden = fc1_w.shape[1]
    n_out = fc2_w.shape[1]
    # fc1 rows: torch flatten order is (c, i, j); our flatten order is (i, j, c).
    w1p = jnp.transpose(fc1_w.reshape(Cout, H2 * W2, n_hidden),
                        (1, 0, 2)).reshape(n_feat, n_hidden)
    return pl.pallas_call(
        _conv_relu_pool_mlp_kernel,
        out_shape=jax.ShapeDtypeStruct((B, n_out), jnp.float32),
        in_specs=[VMEM_SPEC] * 7,
        out_specs=VMEM_SPEC,
        scratch_shapes=[pltpu.VMEM((n2p, Cout), jnp.float32),     # pooled conv3 map
                        pltpu.VMEM((B, n_feat), jnp.float32)],    # flattened features
    )(patches,
      w3.reshape(9 * Cin, Cout).astype(jnp.bfloat16),
      b3.reshape(1, Cout).astype(jnp.float32),
      w1p.astype(jnp.bfloat16),
      fc1_b.reshape(1, n_hidden).astype(jnp.float32),
      fc2_w.astype(jnp.bfloat16),
      fc2_b.reshape(1, n_out).astype(jnp.float32))


def convnet_forward(x_nchw, params):
    x = jnp.transpose(x_nchw, (0, 2, 3, 1)).astype(jnp.bfloat16)  # NCHW->NHWC
    x = conv_relu_pool(x, params["conv1_w"], params["conv1_b"])   # (B,14,14,8)
    x = conv_relu_pool(x, params["conv2_w"], params["conv2_b"])   # (B, 7, 7,16)
    return conv_relu_pool_mlp(x, params["conv3_w"], params["conv3_b"],
                              params["fc1_w"], params["fc1_b"],
                              params["fc2_w"], params["fc2_b"])   # (B, 10)


# ------------------------- Pure-JAX references -------------------------------

def _ref_core(x_nchw, params, cast):
    """Reference forward; `cast` maps matmul/conv inputs to the kernel dtype."""
    x = cast(jnp.transpose(x_nchw, (0, 2, 3, 1)))

    def conv(x, w, b):
        y = jax.lax.conv_general_dilated(
            cast(x), cast(w), window_strides=(1, 1), padding="SAME",
            dimension_numbers=("NHWC", "HWIO", "NHWC"),
            preferred_element_type=jnp.float32)
        return jax.nn.relu(y + b)

    def pool(x):
        return jax.lax.reduce_window(x, -jnp.inf, jax.lax.max,
                                     (1, 2, 2, 1), (1, 2, 2, 1), "VALID")

    x = cast(pool(conv(x, params["conv1_w"], params["conv1_b"])))
    x = cast(pool(conv(x, params["conv2_w"], params["conv2_b"])))
    x = pool(conv(x, params["conv3_w"], params["conv3_b"])).astype(jnp.float32)
    B = x.shape[0]
    x = jnp.transpose(x, (0, 3, 1, 2)).reshape(B, -1)             # torch flatten
    h = jax.nn.relu(jnp.dot(cast(x), cast(params["fc1_w"]),
                            preferred_element_type=jnp.float32) + params["fc1_b"])
    return jnp.dot(cast(h), cast(params["fc2_w"]),
                   preferred_element_type=jnp.float32) + params["fc2_b"]


def convnet_reference_bf16(x, params):
    # Mirrors the kernel's precision choices (bf16 matmul inputs, f32 accum).
    return _ref_core(x, params, lambda a: a.astype(jnp.bfloat16))


def convnet_reference_f32(x, params):
    return _ref_core(x, params, lambda a: a.astype(jnp.float32))


# --------------------------------- Main --------------------------------------

def init_params(key):
    ks = jax.random.split(key, 10)

    def n(k, shape, scale):
        return (scale * jax.random.normal(k, shape)).astype(jnp.float32)

    return {
        "conv1_w": n(ks[0], (3, 3, 1, 8), 0.3),
        "conv1_b": n(ks[1], (8,), 0.1),
        "conv2_w": n(ks[2], (3, 3, 8, 16), 0.1),
        "conv2_b": n(ks[3], (16,), 0.1),
        "conv3_w": n(ks[4], (3, 3, 16, 32), 0.08),
        "conv3_b": n(ks[5], (32,), 0.1),
        "fc1_w":   n(ks[6], (288, 64), 0.05),
        "fc1_b":   n(ks[7], (64,), 0.05),
        "fc2_w":   n(ks[8], (64, 10), 0.1),
        "fc2_b":   n(ks[9], (10,), 0.05),
    }


if __name__ == "__main__":
    key = jax.random.PRNGKey(0)
    pkey, xkey = jax.random.split(key)
    params = init_params(pkey)
    # batch=2, 1 input channel, 28x28 spatial (implied by fc1 = 32*3*3 inputs)
    x = jax.random.normal(xkey, (2, 1, 28, 28), dtype=jnp.float32)

    out = jax.block_until_ready(jax.jit(convnet_forward)(x, params))
    assert out.shape == (2, 10), out.shape
    assert out.dtype == jnp.float32, out.dtype

    # Tight check against a reference with identical precision choices
    # (bf16 matmul inputs, f32 accumulation) — proves the kernels' math.
    ref_bf16 = jax.block_until_ready(jax.jit(convnet_reference_bf16)(x, params))
    assert jnp.allclose(out, ref_bf16, atol=1e-2, rtol=1e-2), (out, ref_bf16)

    # Loose check against the full-f32 reference (bf16-class error accepted).
    ref_f32 = jax.block_until_ready(jax.jit(convnet_reference_f32)(x, params))
    assert jnp.allclose(out, ref_f32, atol=2e-1, rtol=2e-1), (out, ref_f32)

    print("KERNEL_OK")
</pallas_src>

<mosaic_0001>
module attributes {stable_mosaic.version = 11 : i64} {
  func.func @_conv_relu_pool_kernel(%arg0: memref<1568x9xbf16, #tpu.memory_space<vmem>>, %arg1: memref<9x8xbf16, #tpu.memory_space<vmem>>, %arg2: memref<1x8xf32, #tpu.memory_space<vmem>>, %arg3: memref<392x8xbf16, #tpu.memory_space<vmem>>) attributes {dimension_semantics = [], scalar_prefetch = 0 : i64, scratch_operands = 0 : i64, tpu.core_type = #tpu.core_type<tc>} {
    %c0 = arith.constant 0 : index
    %c0_0 = arith.constant 0 : index
    %0 = vector.load %arg0[%c0, %c0_0] : memref<1568x9xbf16, #tpu.memory_space<vmem>>, vector<1568x9xbf16>
    %c0_1 = arith.constant 0 : index
    %c0_2 = arith.constant 0 : index
    %1 = vector.load %arg1[%c0_1, %c0_2] : memref<9x8xbf16, #tpu.memory_space<vmem>>, vector<9x8xbf16>
    %cst = arith.constant dense<0.000000e+00> : vector<1568x8xf32>
    %2 = tpu.matmul %0, %1, %cst {dimension_numbers = #tpu.dot_dimension_numbers<[1], [0], [0], [1], [0, 0, 1, 1], [], []>} : vector<1568x9xbf16>, vector<9x8xbf16>, vector<1568x8xf32> -> vector<1568x8xf32>
    %c0_3 = arith.constant 0 : index
    %c0_4 = arith.constant 0 : index
    %3 = vector.load %arg2[%c0_3, %c0_4] : memref<1x8xf32, #tpu.memory_space<vmem>>, vector<1x8xf32>
    %4 = vector.broadcast %3 : vector<1x8xf32> to vector<1568x8xf32>
    %5 = arith.addf %2, %4 : vector<1568x8xf32>
    %cst_5 = arith.constant 0.000000e+00 : f32
    %6 = vector.broadcast %cst_5 : f32 to vector<1568x8xf32>
    %7 = arith.maximumf %5, %6 : vector<1568x8xf32>
    %8 = vector.extract_strided_slice %7 {offsets = [0, 0], sizes = [392, 8], strides = [1, 1]} : vector<1568x8xf32> to vector<392x8xf32>
    %9 = vector.extract_strided_slice %7 {offsets = [392, 0], sizes = [392, 8], strides = [1, 1]} : vector<1568x8xf32> to vector<392x8xf32>
    %10 = arith.maximumf %8, %9 : vector<392x8xf32>
    %11 = vector.extract_strided_slice %7 {offsets = [784, 0], sizes = [392, 8], strides = [1, 1]} : vector<1568x8xf32> to vector<392x8xf32>
    %12 = vector.extract_strided_slice %7 {offsets = [1176, 0], sizes = [392, 8], strides = [1, 1]} : vector<1568x8xf32> to vector<392x8xf32>
    %13 = arith.maximumf %11, %12 : vector<392x8xf32>
    %14 = arith.maximumf %10, %13 : vector<392x8xf32>
    %15 = arith.truncf %14 : vector<392x8xf32> to vector<392x8xbf16>
    %c0_6 = arith.constant 0 : index
    %c0_7 = arith.constant 0 : index
    %16 = vector.load %arg3[%c0_6, %c0_7] : memref<392x8xbf16, #tpu.memory_space<vmem>>, vector<392x8xbf16>
    tpu.vector_store %arg3[%c0_6, %c0_7], %15 {strides = array<i32>} : memref<392x8xbf16, #tpu.memory_space<vmem>>, vector<392x8xbf16>,
    return
  }
}

module attributes {stable_mosaic.version = 11 : i64} {
  func.func @_conv_relu_pool_kernel(%arg0: memref<416x72xbf16, #tpu.memory_space<vmem>>, %arg1: memref<72x16xbf16, #tpu.memory_space<vmem>>, %arg2: memref<1x16xf32, #tpu.memory_space<vmem>>, %arg3: memref<104x16xbf16, #tpu.memory_space<vmem>>) attributes {dimension_semantics = [], scalar_prefetch = 0 : i64, scratch_operands = 0 : i64, tpu.core_type = #tpu.core_type<tc>} {
    %c0 = arith.constant 0 : index
    %c0_0 = arith.constant 0 : index
    %0 = vector.load %arg0[%c0, %c0_0] : memref<416x72xbf16, #tpu.memory_space<vmem>>, vector<416x72xbf16>
    %c0_1 = arith.constant 0 : index
    %c0_2 = arith.constant 0 : index
    %1 = vector.load %arg1[%c0_1, %c0_2] : memref<72x16xbf16, #tpu.memory_space<vmem>>, vector<72x16xbf16>
    %cst = arith.constant dense<0.000000e+00> : vector<416x16xf32>
    %2 = tpu.matmul %0, %1, %cst {dimension_numbers = #tpu.dot_dimension_numbers<[1], [0], [0], [1], [0, 0, 1, 1], [], []>} : vector<416x72xbf16>, vector<72x16xbf16>, vector<416x16xf32> -> vector<416x16xf32>
    %c0_3 = arith.constant 0 : index
    %c0_4 = arith.constant 0 : index
    %3 = vector.load %arg2[%c0_3, %c0_4] : memref<1x16xf32, #tpu.memory_space<vmem>>, vector<1x16xf32>
    %4 = vector.broadcast %3 : vector<1x16xf32> to vector<416x16xf32>
    %5 = arith.addf %2, %4 : vector<416x16xf32>
    %cst_5 = arith.constant 0.000000e+00 : f32
    %6 = vector.broadcast %cst_5 : f32 to vector<416x16xf32>
    %7 = arith.maximumf %5, %6 : vector<416x16xf32>
    %8 = vector.extract_strided_slice %7 {offsets = [0, 0], sizes = [104, 16], strides = [1, 1]} : vector<416x16xf32> to vector<104x16xf32>
    %9 = vector.extract_strided_slice %7 {offsets = [104, 0], sizes = [104, 16], strides = [1, 1]} : vector<416x16xf32> to vector<104x16xf32>
    %10 = arith.maximumf %8, %9 : vector<104x16xf32>
    %11 = vector.extract_strided_slice %7 {offsets = [208, 0], sizes = [104, 16], strides = [1, 1]} : vector<416x16xf32> to vector<104x16xf32>
    %12 = vector.extract_strided_slice %7 {offsets = [312, 0], sizes = [104, 16], strides = [1, 1]} : vector<416x16xf32> to vector<104x16xf32>
    %13 = arith.maximumf %11, %12 : vector<104x16xf32>
    %14 = arith.maximumf %10, %13 : vector<104x16xf32>
    %15 = arith.truncf %14 : vector<104x16xf32> to vector<104x16xbf16>
    %c0_6 = arith.constant 0 : index
    %c0_7 = arith.constant 0 : index
    %16 = vector.load %arg3[%c0_6, %c0_7] : memref<104x16xbf16, #tpu.memory_space<vmem>>, vector<104x16xbf16>
    tpu.vector_store %arg3[%c0_6, %c0_7], %15 {strides = array<i32>} : memref<104x16xbf16, #tpu.memory_space<vmem>>, vector<104x16xbf16>,
    return
  }
}

module attributes {stable_mosaic.version = 11 : i64} {
  func.func @_conv_relu_pool_mlp_kernel(%arg0: memref<96x144xbf16, #tpu.memory_space<vmem>>, %arg1: memref<144x32xbf16, #tpu.memory_space<vmem>>, %arg2: memref<1x32xf32, #tpu.memory_space<vmem>>, %arg3: memref<288x64xbf16, #tpu.memory_space<vmem>>, %arg4: memref<1x64xf32, #tpu.memory_space<vmem>>, %arg5: memref<64x10xbf16, #tpu.memory_space<vmem>>, %arg6: memref<1x10xf32, #tpu.memory_space<vmem>>, %arg7: memref<2x10xf32, #tpu.memory_space<vmem>>, %arg8: memref<24x32xf32, #tpu.memory_space<vmem>>, %arg9: memref<2x288xf32, #tpu.memory_space<vmem>>) attributes {dimension_semantics = [], scalar_prefetch = 0 : i64, scratch_operands = 2 : i64, tpu.core_type = #tpu.core_type<tc>} {
    %c0 = arith.constant 0 : index
    %c0_0 = arith.constant 0 : index
    %0 = vector.load %arg0[%c0, %c0_0] : memref<96x144xbf16, #tpu.memory_space<vmem>>, vector<96x144xbf16>
    %c0_1 = arith.constant 0 : index
    %c0_2 = arith.constant 0 : index
    %1 = vector.load %arg1[%c0_1, %c0_2] : memref<144x32xbf16, #tpu.memory_space<vmem>>, vector<144x32xbf16>
    %cst = arith.constant dense<0.000000e+00> : vector<96x32xf32>
    %2 = tpu.matmul %0, %1, %cst {dimension_numbers = #tpu.dot_dimension_numbers<[1], [0], [0], [1], [0, 0, 1, 1], [], []>} : vector<96x144xbf16>, vector<144x32xbf16>, vector<96x32xf32> -> vector<96x32xf32>
    %c0_3 = arith.constant 0 : index
    %c0_4 = arith.constant 0 : index
    %3 = vector.load %arg2[%c0_3, %c0_4] : memref<1x32xf32, #tpu.memory_space<vmem>>, vector<1x32xf32>
    %4 = vector.broadcast %3 : vector<1x32xf32> to vector<96x32xf32>
    %5 = arith.addf %2, %4 : vector<96x32xf32>
    %cst_5 = arith.constant 0.000000e+00 : f32
    %6 = vector.broadcast %cst_5 : f32 to vector<96x32xf32>
    %7 = arith.maximumf %5, %6 : vector<96x32xf32>
    %8 = vector.extract_strided_slice %7 {offsets = [0, 0], sizes = [24, 32], strides = [1, 1]} : vector<96x32xf32> to vector<24x32xf32>
    %9 = vector.extract_strided_slice %7 {offsets = [24, 0], sizes = [24, 32], strides = [1, 1]} : vector<96x32xf32> to vector<24x32xf32>
    %10 = arith.maximumf %8, %9 : vector<24x32xf32>
    %11 = vector.extract_strided_slice %7 {offsets = [48, 0], sizes = [24, 32], strides = [1, 1]} : vector<96x32xf32> to vector<24x32xf32>
    %12 = vector.extract_strided_slice %7 {offsets = [72, 0], sizes = [24, 32], strides = [1, 1]} : vector<96x32xf32> to vector<24x32xf32>
    %13 = arith.maximumf %11, %12 : vector<24x32xf32>
    %14 = arith.maximumf %10, %13 : vector<24x32xf32>
    %c0_6 = arith.constant 0 : index
    %c0_7 = arith.constant 0 : index
    %15 = vector.load %arg8[%c0_6, %c0_7] : memref<24x32xf32, #tpu.memory_space<vmem>>, vector<24x32xf32>
    tpu.vector_store %arg8[%c0_6, %c0_7], %14 {strides = array<i32>} : memref<24x32xf32, #tpu.memory_space<vmem>>, vector<24x32xf32>,
    %c0_8 = arith.constant 0 : index
    %c0_9 = arith.constant 0 : index
    %16 = vector.load %arg8[%c0_8, %c0_9] : memref<24x32xf32, #tpu.memory_space<vmem>>, vector<1x32xf32>
    %c0_10 = arith.constant 0 : index
    %c0_11 = arith.constant 0 : index
    %17 = vector.load %arg9[%c0_10, %c0_11] : memref<2x288xf32, #tpu.memory_space<vmem>>, vector<1x32xf32>
    tpu.vector_store %arg9[%c0_10, %c0_11], %16 {strides = array<i32>} : memref<2x288xf32, #tpu.memory_space<vmem>>, vector<1x32xf32>,
    %c1 = arith.constant 1 : index
    %c0_12 = arith.constant 0 : index
    %18 = vector.load %arg8[%c1, %c0_12] : memref<24x32xf32, #tpu.memory_space<vmem>>, vector<1x32xf32>
    %c0_13 = arith.constant 0 : index
    %c32 = arith.constant 32 : index
    %19 = vector.load %arg9[%c0_13, %c32] : memref<2x288xf32, #tpu.memory_space<vmem>>, vector<1x32xf32>
    tpu.vector_store %arg9[%c0_13, %c32], %18 {strides = array<i32>} : memref<2x288xf32, #tpu.memory_space<vmem>>, vector<1x32xf32>,
    %c2 = arith.constant 2 : index
    %c0_14 = arith.constant 0 : index
    %20 = vector.load %arg8[%c2, %c0_14] : memref<24x32xf32, #tpu.memory_space<vmem>>, vector<1x32xf32>
    %c0_15 = arith.constant 0 : index
    %c64 = arith.constant 64 : index
    %21 = vector.load %arg9[%c0_15, %c64] : memref<2x288xf32, #tpu.memory_space<vmem>>, vector<1x32xf32>
    tpu.vector_store %arg9[%c0_15, %c64], %20 {strides = array<i32>} : memref<2x288xf32, #tpu.memory_space<vmem>>, vector<1x32xf32>,
    %c3 = arith.constant 3 : index
    %c0_16 = arith.constant 0 : index
    %22 = vector.load %arg8[%c3, %c0_16] : memref<24x32xf32, #tpu.memory_space<vmem>>, vector<1x32xf32>
    %c0_17 = arith.constant 0 : index
    %c96 = arith.constant 96 : index
    %23 = vector.load %arg9[%c0_17, %c96] : memref<2x288xf32, #tpu.memory_space<vmem>>, vector<1x32xf32>
    tpu.vector_store %arg9[%c0_17, %c96], %22 {strides = array<i32>} : memref<2x288xf32, #tpu.memory_space<vmem>>, vector<1x32xf32>,
    %c4 = arith.constant 4 : index
    %c0_18 = arith.constant 0 : index
    %24 = vector.load %arg8[%c4, %c0_18] : memref<24x32xf32, #tpu.memory_space<vmem>>, vector<1x32xf32>
    %c0_19 = arith.constant 0 : index
    %c128 = arith.constant 128 : index
    %25 = vector.load %arg9[%c0_19, %c128] : memref<2x288xf32, #tpu.memory_space<vmem>>, vector<1x32xf32>
    tpu.vector_store %arg9[%c0_19, %c128], %24 {strides = array<i32>} : memref<2x288xf32, #tpu.memory_space<vmem>>, vector<1x32xf32>,
    %c5 = arith.constant 5 : index
    %c0_20 = arith.constant 0 : index
    %26 = vector.load %arg8[%c5, %c0_20] : memref<24x32xf32, #tpu.memory_space<vmem>>, vector<1x32xf32>
    %c0_21 = arith.constant 0 : index
    %c160 = arith.constant 160 : index
    %27 = vector.load %arg9[%c0_21, %c160] : memref<2x288xf32, #tpu.memory_space<vmem>>, vector<1x32xf32>
    tpu.vector_store %arg9[%c0_21, %c160], %26 {strides = array<i32>} : memref<2x288xf32, #tpu.memory_space<vmem>>, vector<1x32xf32>,
    %c6 = arith.constant 6 : index
    %c0_22 = arith.constant 0 : index
    %28 = vector.load %arg8[%c6, %c0_22] : memref<24x32xf32, #tpu.memory_space<vmem>>, vector<1x32xf32>
    %c0_23 = arith.constant 0 : index
    %c192 = arith.constant 192 : index
    %29 = vector.load %arg9[%c0_23, %c192] : memref<2x288xf32, #tpu.memory_space<vmem>>, vector<1x32xf32>
    tpu.vector_store %arg9[%c0_23, %c192], %28 {strides = array<i32>} : memref<2x288xf32, #tpu.memory_space<vmem>>, vector<1x32xf32>,
    %c7 = arith.constant 7 : index
    %c0_24 = arith.constant 0 : index
    %30 = vector.load %arg8[%c7, %c0_24] : memref<24x32xf32, #tpu.memory_space<vmem>>, vector<1x32xf32>
    %c0_25 = arith.constant 0 : index
    %c224 = arith.constant 224 : index
    %31 = vector.load %arg9[%c0_25, %c224] : memref<2x288xf32, #tpu.memory_space<vmem>>, vector<1x32xf32>
    tpu.vector_store %arg9[%c0_25, %c224], %30 {strides = array<i32>} : memref<2x288xf32, #tpu.memory_space<vmem>>, vector<1x32xf32>,
    %c8 = arith.constant 8 : index
    %c0_26 = arith.constant 0 : index
    %32 = vector.load %arg8[%c8, %c0_26] : memref<24x32xf32, #tpu.memory_space<vmem>>, vector<1x32xf32>
    %c0_27 = arith.constant 0 : index
    %c256 = arith.constant 256 : index
    %33 = vector.load %arg9[%c0_27, %c256] : memref<2x288xf32, #tpu.memory_space<vmem>>, vector<1x32xf32>
    tpu.vector_store %arg9[%c0_27, %c256], %32 {strides = array<i32>} : memref<2x288xf32, #tpu.memory_space<vmem>>, vector<1x32xf32>,
    %c9 = arith.constant 9 : index
    %c0_28 = arith.constant 0 : index
    %34 = vector.load %arg8[%c9, %c0_28] : memref<24x32xf32, #tpu.memory_space<vmem>>, vector<1x32xf32>
    %c1_29 = arith.constant 1 : index
    %c0_30 = arith.constant 0 : index
    %35 = vector.load %arg9[%c1_29, %c0_30] : memref<2x288xf32, #tpu.memory_space<vmem>>, vector<1x32xf32>
    tpu.vector_store %arg9[%c1_29, %c0_30], %34 {strides = array<i32>} : memref<2x288xf32, #tpu.memory_space<vmem>>, vector<1x32xf32>,
    %c10 = arith.constant 10 : index
    %c0_31 = arith.constant 0 : index
    %36 = vector.load %arg8[%c10, %c0_31] : memref<24x32xf32, #tpu.memory_space<vmem>>, vector<1x32xf32>
    %c1_32 = arith.constant 1 : index
    %c32_33 = arith.constant 32 : index
    %37 = vector.load %arg9[%c1_32, %c32_33] : memref<2x288xf32, #tpu.memory_space<vmem>>, vector<1x32xf32>
    tpu.vector_store %arg9[%c1_32, %c32_33], %36 {strides = array<i32>} : memref<2x288xf32, #tpu.memory_space<vmem>>, vector<1x32xf32>,
    %c11 = arith.constant 11 : index
    %c0_34 = arith.constant 0 : index
    %38 = vector.load %arg8[%c11, %c0_34] : memref<24x32xf32, #tpu.memory_space<vmem>>, vector<1x32xf32>
    %c1_35 = arith.constant 1 : index
    %c64_36 = arith.constant 64 : index
    %39 = vector.load %arg9[%c1_35, %c64_36] : memref<2x288xf32, #tpu.memory_space<vmem>>, vector<1x32xf32>
    tpu.vector_store %arg9[%c1_35, %c64_36], %38 {strides = array<i32>} : memref<2x288xf32, #tpu.memory_space<vmem>>, vector<1x32xf32>,
    %c12 = arith.constant 12 : index
    %c0_37 = arith.constant 0 : index
    %40 = vector.load %arg8[%c12, %c0_37] : memref<24x32xf32, #tpu.memory_space<vmem>>, vector<1x32xf32>
    %c1_38 = arith.constant 1 : index
    %c96_39 = arith.constant 96 : index
    %41 = vector.load %arg9[%c1_38, %c96_39] : memref<2x288xf32, #tpu.memory_space<vmem>>, vector<1x32xf32>
    tpu.vector_store %arg9[%c1_38, %c96_39], %40 {strides = array<i32>} : memref<2x288xf32, #tpu.memory_space<vmem>>, vector<1x32xf32>,
    %c13 = arith.constant 13 : index
    %c0_40 = arith.constant 0 : index
    %42 = vector.load %arg8[%c13, %c0_40] : memref<24x32xf32, #tpu.memory_space<vmem>>, vector<1x32xf32>
    %c1_41 = arith.constant 1 : index
    %c128_42 = arith.constant 128 : index
    %43 = vector.load %arg9[%c1_41, %c128_42] : memref<2x288xf32, #tpu.memory_space<vmem>>, vector<1x32xf32>
    tpu.vector_store %arg9[%c1_41, %c128_42], %42 {strides = array<i32>} : memref<2x288xf32, #tpu.memory_space<vmem>>, vector<1x32xf32>,
    %c14 = arith.constant 14 : index
    %c0_43 = arith.constant 0 : index
    %44 = vector.load %arg8[%c14, %c0_43] : memref<24x32xf32, #tpu.memory_space<vmem>>, vector<1x32xf32>
    %c1_44 = arith.constant 1 : index
    %c160_45 = arith.constant 160 : index
    %45 = vector.load %arg9[%c1_44, %c160_45] : memref<2x288xf32, #tpu.memory_space<vmem>>, vector<1x32xf32>
    tpu.vector_store %arg9[%c1_44, %c160_45], %44 {strides = array<i32>} : memref<2x288xf32, #tpu.memory_space<vmem>>, vector<1x32xf32>,
    %c15 = arith.constant 15 : index
    %c0_46 = arith.constant 0 : index
    %46 = vector.load %arg8[%c15, %c0_46] : memref<24x32xf32, #tpu.memory_space<vmem>>, vector<1x32xf32>
    %c1_47 = arith.constant 1 : index
    %c192_48 = arith.constant 192 : index
    %47 = vector.load %arg9[%c1_47, %c192_48] : memref<2x288xf32, #tpu.memory_space<vmem>>, vector<1x32xf32>
    tpu.vector_store %arg9[%c1_47, %c192_48], %46 {strides = array<i32>} : memref<2x288xf32, #tpu.memory_space<vmem>>, vector<1x32xf32>,
    %c16 = arith.constant 16 : index
    %c0_49 = arith.constant 0 : index
    %48 = vector.load %arg8[%c16, %c0_49] : memref<24x32xf32, #tpu.memory_space<vmem>>, vector<1x32xf32>
    %c1_50 = arith.constant 1 : index
    %c224_51 = arith.constant 224 : index
    %49 = vector.load %arg9[%c1_50, %c224_51] : memref<2x288xf32, #tpu.memory_space<vmem>>, vector<1x32xf32>
    tpu.vector_store %arg9[%c1_50, %c224_51], %48 {strides = array<i32>} : memref<2x288xf32, #tpu.memory_space<vmem>>, vector<1x32xf32>,
    %c17 = arith.constant 17 : index
    %c0_52 = arith.constant 0 : index
    %50 = vector.load %arg8[%c17, %c0_52] : memref<24x32xf32, #tpu.memory_space<vmem>>, vector<1x32xf32>
    %c1_53 = arith.constant 1 : index
    %c256_54 = arith.constant 256 : index
    %51 = vector.load %arg9[%c1_53, %c256_54] : memref<2x288xf32, #tpu.memory_space<vmem>>, vector<1x32xf32>
    tpu.vector_store %arg9[%c1_53, %c256_54], %50 {strides = array<i32>} : memref<2x288xf32, #tpu.memory_space<vmem>>, vector<1x32xf32>,
    %c0_55 = arith.constant 0 : index
    %c0_56 = arith.constant 0 : index
    %52 = vector.load %arg9[%c0_55, %c0_56] : memref<2x288xf32, #tpu.memory_space<vmem>>, vector<2x288xf32>
    %53 = arith.truncf %52 : vector<2x288xf32> to vector<2x288xbf16>
    %c0_57 = arith.constant 0 : index
    %c0_58 = arith.constant 0 : index
    %54 = vector.load %arg3[%c0_57, %c0_58] : memref<288x64xbf16, #tpu.memory_space<vmem>>, vector<288x64xbf16>
    %cst_59 = arith.constant dense<0.000000e+00> : vector<2x64xf32>
    %55 = tpu.matmul %53, %54, %cst_59 {dimension_numbers = #tpu.dot_dimension_numbers<[1], [0], [0], [1], [0, 0, 1, 1], [], []>} : vector<2x288xbf16>, vector<288x64xbf16>, vector<2x64xf32> -> vector<2x64xf32>
    %c0_60 = arith.constant 0 : index
    %c0_61 = arith.constant 0 : index
    %56 = vector.load %arg4[%c0_60, %c0_61] : memref<1x64xf32, #tpu.memory_space<vmem>>, vector<1x64xf32>
    %57 = vector.broadcast %56 : vector<1x64xf32> to vector<2x64xf32>
    %58 = arith.addf %55, %57 : vector<2x64xf32>
    %cst_62 = arith.constant 0.000000e+00 : f32
    %59 = vector.broadcast %cst_62 : f32 to vector<2x64xf32>
    %60 = arith.maximumf %58, %59 : vector<2x64xf32>
    %61 = arith.truncf %60 : vector<2x64xf32> to vector<2x64xbf16>
    %c0_63 = arith.constant 0 : index
    %c0_64 = arith.constant 0 : index
    %62 = vector.load %arg5[%c0_63, %c0_64] : memref<64x10xbf16, #tpu.memory_space<vmem>>, vector<64x10xbf16>
    %cst_65 = arith.constant dense<0.000000e+00> : vector<2x10xf32>
    %63 = tpu.matmul %61, %62, %cst_65 {dimension_numbers = #tpu.dot_dimension_numbers<[1], [0], [0], [1], [0, 0, 1, 1], [], []>} : vector<2x64xbf16>, vector<64x10xbf16>, vector<2x10xf32> -> vector<2x10xf32>
    %c0_66 = arith.constant 0 : index
    %c0_67 = arith.constant 0 : index
    %64 = vector.load %arg6[%c0_66, %c0_67] : memref<1x10xf32, #tpu.memory_space<vmem>>, vector<1x10xf32>
    %65 = vector.broadcast %64 : vector<1x10xf32> to vector<2x10xf32>
    %66 = arith.addf %63, %65 : vector<2x10xf32>
    %c0_68 = arith.constant 0 : index
    %c0_69 = arith.constant 0 : index
    %67 = vector.load %arg7[%c0_68, %c0_69] : memref<2x10xf32, #tpu.memory_space<vmem>>, vector<2x10xf32>
    tpu.vector_store %arg7[%c0_68, %c0_69], %66 {strides = array<i32>} : memref<2x10xf32, #tpu.memory_space<vmem>>, vector<2x10xf32>,
    return
  }
}

</mosaic_0001>

<llo_original>
// kernel: convnet_forward.3
$region0: #{convnet_forward.3}
  #allocation0 [shape = 'u32[]', space=smem, size = 0x4, offset = 0x4, fixed_abs, tag = 'smem constant byte address 0x4 - core index']
  #allocation1 [shape = 'u32[144,128]{1,0:T(1,128)}', space=vmem, size = 0x12000, scoped, tag = 'internal scratch']
  %s0 = inlined_call_operand.vmem [shape: bf16[1568,9], index: 0, kind: input, shape index: {}]
  %s1 = inlined_call_operand.vmem [shape: bf16[9,8], index: 1, kind: input, shape index: {}]
  %s2 = inlined_call_operand.vmem [shape: f32[1,8], index: 2, kind: input, shape index: {}]
  %s3 = inlined_call_operand.vmem [shape: bf16[392,8], index: 3, kind: output, shape index: {}]
  %s4 = sld [smem:[#allocation0]]
  $region22: #{convnet_forward.3} parent=0
    _
  %s6 = ssub.s32 1, %s4
  %s7 = scalar_select 0, %s6, %s4
  // Predicated region
  $region2: #{convnet_forward.3} parent=0 // pred_check
    _
  $region3: #{convnet_forward.3} parent=0 // pred_check_branch
    %9 = sbr.rel (0) target = $region5
  $region4: #{convnet_forward.3} parent=0 // pred_region
    _
  $region5: #{convnet_forward.3} parent=0 // pred_fallthru
    _
  // Predicated region
  $region6: #{convnet_forward.3} parent=0 // pred_check
    _
  $region7: #{convnet_forward.3} parent=0 // pred_check_branch
    %11 = sbr.rel (0) target = $region9
  $region8: #{convnet_forward.3} parent=0 // pred_region
    _
  $region9: #{convnet_forward.3} parent=0 // pred_fallthru
    _
  // Predicated region
  $region10: #{convnet_forward.3} parent=0 // pred_check
    _
  $region11: #{convnet_forward.3} parent=0 // pred_check_branch
    %13 = sbr.rel (0) target = $region13
  $region12: #{convnet_forward.3} parent=0 // pred_region
    _
  $region13: #{convnet_forward.3} parent=0 // pred_fallthru
    _
  %v15 = vld [vmem:[%s0] sm:$0xf]
  %v16 = vld [vmem:[%s0 + $0x4] sm:$0xf]
  %v17 = vld [vmem:[%s0 + $0x8] sm:$0xf]
  %v18 = vld [vmem:[%s0 + $0xc] sm:$0xf]
  %v19 = vld [vmem:[%s0 + $0x10] sm:$0xf]
  %v20 = vld [vmem:[%s0 + $0x14] sm:$0xf]
  %v21 = vld [vmem:[%s0 + $0x18] sm:$0xf]
  %v22 = vld [vmem:[%s0 + $0x1c] sm:$0xf]
  %v23 = vld [vmem:[%s0 + $0x20] sm:$0xf]
  %v24 = vld [vmem:[%s0 + $0x24] sm:$0xf]
  %v25 = vld [vmem:[%s0 + $0x28] sm:$0xf]
  %v26 = vld [vmem:[%s0 + $0x2c] sm:$0xf]
  %v27 = vld [vmem:[%s0 + $0x30] sm:$0xf]
  %v28 = vld [vmem:[%s0 + $0x34] sm:$0xf]
  %v29 = vld [vmem:[%s0 + $0x38] sm:$0xf]
  %v30 = vld [vmem:[%s0 + $0x3c] sm:$0xf]
  %v31 = vld [vmem:[%s0 + $0x40] sm:$0xf]
  %v32 = vld [vmem:[%s0 + $0x44] sm:$0xf]
  %v33 = vld [vmem:[%s0 + $0x48] sm:$0xf]
  %v34 = vld [vmem:[%s0 + $0x4c] sm:$0xf]
  %v35 = vld [vmem:[%s0 + $0x50] sm:$0xf]
  %v36 = vld [vmem:[%s0 + $0x54] sm:$0xf]
  %v37 = vld [vmem:[%s0 + $0x58] sm:$0xf]
  %v38 = vld [vmem:[%s0 + $0x5c] sm:$0xf]
  %v39 = vld [vmem:[%s0 + $0x60] sm:$0xf]
  %v40 = vld [vmem:[%s0 + $0x64] sm:$0xf]
  %v41 = vld [vmem:[%s0 + $0x68] sm:$0xf]
  %v42 = vld [vmem:[%s0 + $0x6c] sm:$0xf]
  %v43 = vld [vmem:[%s0 + $0x70] sm:$0xf]
  %v44 = vld [vmem:[%s0 + $0x74] sm:$0xf]
  %v45 = vld [vmem:[%s0 + $0x78] sm:$0xf]
  %v46 = vld [vmem:[%s0 + $0x7c] sm:$0xf]
  %v47 = vld [vmem:[%s0 + $0x80] sm:$0xf]
  %v48 = vld [vmem:[%s0 + $0x84] sm:$0xf]
  %v49 = vld [vmem:[%s0 + $0x88] sm:$0xf]
  %v50 = vld [vmem:[%s0 + $0x8c] sm:$0xf]
  %v51 = vld [vmem:[%s0 + $0x90] sm:$0xf]
  %v52 = vld [vmem:[%s0 + $0x94] sm:$0xf]
  %v53 = vld [vmem:[%s0 + $0x98] sm:$0xf]
  %v54 = vld [vmem:[%s0 + $0x9c] sm:$0xf]
  %v55 = vld [vmem:[%s0 + $0xa0] sm:$0xf]
  %v56 = vld [vmem:[%s0 + $0xa4] sm:$0xf]
  %v57 = vld [vmem:[%s0 + $0xa8] sm:$0xf]
  %v58 = vld [vmem:[%s0 + $0xac] sm:$0xf]
  %v59 = vld [vmem:[%s0 + $0xb0] sm:$0xf]
  %v60 = vld [vmem:[%s0 + $0xb4] sm:$0xf]
  %v61 = vld [vmem:[%s0 + $0xb8] sm:$0xf]
  %v62 = vld [vmem:[%s0 + $0xbc] sm:$0xf]
  %v63 = vld [vmem:[%s0 + $0xc0] sm:$0xf]
  %v64 = vld [vmem:[%s0 + $0xc4] sm:$0xf]
  %v65 = vld [vmem:[%s0 + $0xc8] sm:$0xf]
  %v66 = vld [vmem:[%s0 + $0xcc] sm:$0xf]
  %v67 = vld [vmem:[%s0 + $0xd0] sm:$0xf]
  %v68 = vld [vmem:[%s0 + $0xd4] sm:$0xf]
  %v69 = vld [vmem:[%s0 + $0xd8] sm:$0xf]
  %v70 = vld [vmem:[%s0 + $0xdc] sm:$0xf]
  %v71 = vld [vmem:[%s0 + $0xe0] sm:$0xf]
  %v72 = vld [vmem:[%s0 + $0xe4] sm:$0xf]
  %v73 = vld [vmem:[%s0 + $0xe8] sm:$0xf]
  %v74 = vld [vmem:[%s0 + $0xec] sm:$0xf]
  %v75 = vld [vmem:[%s0 + $0xf0] sm:$0xf]
  %v76 = vld [vmem:[%s0 + $0xf4] sm:$0xf]
  %v77 = vld [vmem:[%s0 + $0xf8] sm:$0xf]
  %v78 = vld [vmem:[%s0 + $0xfc] sm:$0xf]
  %v79 = vld [vmem:[%s0 + $0x100] sm:$0xf]
  %v80 = vld [vmem:[%s0 + $0x104] sm:$0xf]
  %v81 = vld [vmem:[%s0 + $0x108] sm:$0xf]
  %v82 = vld [vmem:[%s0 + $0x10c] sm:$0xf]
  %v83 = vld [vmem:[%s0 + $0x110] sm:$0xf]
  %v84 = vld [vmem:[%s0 + $0x114] sm:$0xf]
  %v85 = vld [vmem:[%s0 + $0x118] sm:$0xf]
  %v86 = vld [vmem:[%s0 + $0x11c] sm:$0xf]
  %v87 = vld [vmem:[%s0 + $0x120] sm:$0xf]
  %v88 = vld [vmem:[%s0 + $0x124] sm:$0xf]
  %v89 = vld [vmem:[%s0 + $0x128] sm:$0xf]
  %v90 = vld [vmem:[%s0 + $0x12c] sm:$0xf]
  %v91 = vld [vmem:[%s0 + $0x130] sm:$0xf]
  %v92 = vld [vmem:[%s0 + $0x134] sm:$0xf]
  %v93 = vld [vmem:[%s0 + $0x138] sm:$0xf]
  %v94 = vld [vmem:[%s0 + $0x13c] sm:$0xf]
  %v95 = vld [vmem:[%s0 + $0x140] sm:$0xf]
  %v96 = vld [vmem:[%s0 + $0x144] sm:$0xf]
  %v97 = vld [vmem:[%s0 + $0x148] sm:$0xf]
  %v98 = vld [vmem:[%s0 + $0x14c] sm:$0xf]
  %v99 = vld [vmem:[%s0 + $0x150] sm:$0xf]
  %v100 = vld [vmem:[%s0 + $0x154] sm:$0xf]
  %v101 = vld [vmem:[%s0 + $0x158] sm:$0xf]
  %v102 = vld [vmem:[%s0 + $0x15c] sm:$0xf]
  %v103 = vld [vmem:[%s0 + $0x160] sm:$0xf]
  %v104 = vld [vmem:[%s0 + $0x164] sm:$0xf]
  %v105 = vld [vmem:[%s0 + $0x168] sm:$0xf]
  %v106 = vld [vmem:[%s0 + $0x16c] sm:$0xf]
  %v107 = vld [vmem:[%s0 + $0x170] sm:$0xf]
  %v108 = vld [vmem:[%s0 + $0x174] sm:$0xf]
  %v109 = vld [vmem:[%s0 + $0x178] sm:$0xf]
  %v110 = vld [vmem:[%s0 + $0x17c] sm:$0xf]
  %v111 = vld [vmem:[%s0 + $0x180] sm:$0xf]
  %v112 = vld [vmem:[%s0 + $0x184] sm:$0xf]
  %v113 = vld [vmem:[%s0 + $0x188] sm:$0xf]
  %v114 = vld [vmem:[%s0 + $0x18c] sm:$0xf]
  %v115 = vld [vmem:[%s0 + $0x190] sm:$0xf]
  %v116 = vld [vmem:[%s0 + $0x194] sm:$0xf]
  %v117 = vld [vmem:[%s0 + $0x198] sm:$0xf]
  %v118 = vld [vmem:[%s0 + $0x19c] sm:$0xf]
  %v119 = vld [vmem:[%s0 + $0x1a0] sm:$0xf]
  %v120 = vld [vmem:[%s0 + $0x1a4] sm:$0xf]
  %v121 = vld [vmem:[%s0 + $0x1a8] sm:$0xf]
  %v122 = vld [vmem:[%s0 + $0x1ac] sm:$0xf]
  %v123 = vld [vmem:[%s0 + $0x1b0] sm:$0xf]
  %v124 = vld [vmem:[%s0 + $0x1b4] sm:$0xf]
  %v125 = vld [vmem:[%s0 + $0x1b8] sm:$0xf]
  %v126 = vld [vmem:[%s0 + $0x1bc] sm:$0xf]
  %v127 = vld [vmem:[%s0 + $0x1c0] sm:$0xf]
  %v128 = vld [vmem:[%s0 + $0x1c4] sm:$0xf]
  %v129 = vld [vmem:[%s0 + $0x1c8] sm:$0xf]
  %v130 = vld [vmem:[%s0 + $0x1cc] sm:$0xf]
  %v131 = vld [vmem:[%s0 + $0x1d0] sm:$0xf]
  %v132 = vld [vmem:[%s0 + $0x1d4] sm:$0xf]
  %v133 = vld [vmem:[%s0 + $0x1d8] sm:$0xf]
  %v134 = vld [vmem:[%s0 + $0x1dc] sm:$0xf]
  %v135 = vld [vmem:[%s0 + $0x1e0] sm:$0xf]
  %v136 = vld [vmem:[%s0 + $0x1e4] sm:$0xf]
  %v137 = vld [vmem:[%s0 + $0x1e8] sm:$0xf]
  %v138 = vld [vmem:[%s0 + $0x1ec] sm:$0xf]
  %v139 = vld [vmem:[%s0 + $0x1f0] sm:$0xf]
  %v140 = vld [vmem:[%s0 + $0x1f4] sm:$0xf]
  %v141 = vld [vmem:[%s0 + $0x1f8] sm:$0xf]
  %v142 = vld [vmem:[%s0 + $0x1fc] sm:$0xf]
  %v143 = vld [vmem:[%s0 + $0x200] sm:$0xf]
  %v144 = vld [vmem:[%s0 + $0x204] sm:$0xf]
  %v145 = vld [vmem:[%s0 + $0x208] sm:$0xf]
  %v146 = vld [vmem:[%s0 + $0x20c] sm:$0xf]
  %v147 = vld [vmem:[%s0 + $0x210] sm:$0xf]
  %v148 = vld [vmem:[%s0 + $0x214] sm:$0xf]
  %v149 = vld [vmem:[%s0 + $0x218] sm:$0xf]
  %v150 = vld [vmem:[%s0 + $0x21c] sm:$0xf]
  %v151 = vld [vmem:[%s0 + $0x220] sm:$0xf]
  %v152 = vld [vmem:[%s0 + $0x224] sm:$0xf]
  %v153 = vld [vmem:[%s0 + $0x228] sm:$0xf]
  %v154 = vld [vmem:[%s0 + $0x22c] sm:$0xf]
  %v155 = vld [vmem:[%s0 + $0x230] sm:$0xf]
  %v156 = vld [vmem:[%s0 + $0x234] sm:$0xf]
  %v157 = vld [vmem:[%s0 + $0x238] sm:$0xf]
  %v158 = vld [vmem:[%s0 + $0x23c] sm:$0xf]
  %v159 = vld [vmem:[%s0 + $0x240] sm:$0xf]
  %v160 = vld [vmem:[%s0 + $0x244] sm:$0xf]
  %v161 = vld [vmem:[%s0 + $0x248] sm:$0xf]
  %v162 = vld [vmem:[%s0 + $0x24c] sm:$0xf]
  %v163 = vld [vmem:[%s0 + $0x250] sm:$0xf]
  %v164 = vld [vmem:[%s0 + $0x254] sm:$0xf]
  %v165 = vld [vmem:[%s0 + $0x258] sm:$0xf]
  %v166 = vld [vmem:[%s0 + $0x25c] sm:$0xf]
  %v167 = vld [vmem:[%s0 + $0x260] sm:$0xf]
  %v168 = vld [vmem:[%s0 + $0x264] sm:$0xf]
  %v169 = vld [vmem:[%s0 + $0x268] sm:$0xf]
  %v170 = vld [vmem:[%s0 + $0x26c] sm:$0xf]
  %v171 = vld [vmem:[%s0 + $0x270] sm:$0xf]
  %v172 = vld [vmem:[%s0 + $0x274] sm:$0xf]
  %v173 = vld [vmem:[%s0 + $0x278] sm:$0xf]
  %v174 = vld [vmem:[%s0 + $0x27c] sm:$0xf]
  %v175 = vld [vmem:[%s0 + $0x280] sm:$0xf]
  %v176 = vld [vmem:[%s0 + $0x284] sm:$0xf]
  %v177 = vld [vmem:[%s0 + $0x288] sm:$0xf]
  %v178 = vld [vmem:[%s0 + $0x28c] sm:$0xf]
  %v179 = vld [vmem:[%s0 + $0x290] sm:$0xf]
  %v180 = vld [vmem:[%s0 + $0x294] sm:$0xf]
  %v181 = vld [vmem:[%s0 + $0x298] sm:$0xf]
  %v182 = vld [vmem:[%s0 + $0x29c] sm:$0xf]
  %v183 = vld [vmem:[%s0 + $0x2a0] sm:$0xf]
  %v184 = vld [vmem:[%s0 + $0x2a4] sm:$0xf]
  %v185 = vld [vmem:[%s0 + $0x2a8] sm:$0xf]
  %v186 = vld [vmem:[%s0 + $0x2ac] sm:$0xf]
  %v187 = vld [vmem:[%s0 + $0x2b0] sm:$0xf]
  %v188 = vld [vmem:[%s0 + $0x2b4] sm:$0xf]
  %v189 = vld [vmem:[%s0 + $0x2b8] sm:$0xf]
  %v190 = vld [vmem:[%s0 + $0x2bc] sm:$0xf]
  %v191 = vld [vmem:[%s0 + $0x2c0] sm:$0xf]
  %v192 = vld [vmem:[%s0 + $0x2c4] sm:$0xf]
  %v193 = vld [vmem:[%s0 + $0x2c8] sm:$0xf]
  %v194 = vld [vmem:[%s0 + $0x2cc] sm:$0xf]
  %v195 = vld [vmem:[%s0 + $0x2d0] sm:$0xf]
  %v196 = vld [vmem:[%s0 + $0x2d4] sm:$0xf]
  %v197 = vld [vmem:[%s0 + $0x2d8] sm:$0xf]
  %v198 = vld [vmem:[%s0 + $0x2dc] sm:$0xf]
  %v199 = vld [vmem:[%s0 + $0x2e0] sm:$0xf]
  %v200 = vld [vmem:[%s0 + $0x2e4] sm:$0xf]
  %v201 = vld [vmem:[%s0 + $0x2e8] sm:$0xf]
  %v202 = vld [vmem:[%s0 + $0x2ec] sm:$0xf]
  %v203 = vld [vmem:[%s0 + $0x2f0] sm:$0xf]
  %v204 = vld [vmem:[%s0 + $0x2f4] sm:$0xf]
  %v205 = vld [vmem:[%s0 + $0x2f8] sm:$0xf]
  %v206 = vld [vmem:[%s0 + $0x2fc] sm:$0xf]
  %v207 = vld [vmem:[%s0 + $0x300] sm:$0xf]
  %v208 = vld [vmem:[%s0 + $0x304] sm:$0xf]
  %v209 = vld [vmem:[%s0 + $0x308] sm:$0xf]
  %v210 = vld [vmem:[%s0 + $0x30c] sm:$0xf]
  %v211 = vld [vmem:[%s1] sm:$0xf]
  %v212 = vld [vmem:[%s1 + $0x4] sm:$0x1]
  %v213 = vld [vmem:[%s2] sm:$0x1]
  %v215 = vlaneseq
  %v216 = vshrl.u32 %v215, 7
  %v217 = vsub.s32 0, %v216
  %v218 = vrot.slane %v213, %v217
  %v416 = vunpack.c.l.b16 %v15
  %v417 = vunpack.c.l.b16 %v16
  %v418 = vunpack.c.l.b16 %v17
  %v419 = vunpack.c.l.b16 %v18
  %v420 = vunpack.c.l.b16 %v19
  %v421 = vunpack.c.l.b16 %v20
  %v422 = vunpack.c.l.b16 %v21
  %v423 = vunpack.c.l.b16 %v22
  %v424 = vunpack.c.l.b16 %v23
  %v425 = vunpack.c.l.b16 %v24
  %v426 = vunpack.c.l.b16 %v25
  %v427 = vunpack.c.l.b16 %v26
  %v428 = vunpack.c.l.b16 %v27
  %v429 = vunpack.c.l.b16 %v28
  %v430 = vunpack.c.l.b16 %v29
  %v431 = vunpack.c.l.b16 %v30
  %v432 = vunpack.c.l.b16 %v31
  %v433 = vunpack.c.l.b16 %v32
  %v434 = vunpack.c.l.b16 %v33
  %v435 = vunpack.c.l.b16 %v34
  %v436 = vunpack.c.l.b16 %v35
  %v437 = vunpack.c.l.b16 %v36
  %v438 = vunpack.c.l.b16 %v37
  %v439 = vunpack.c.l.b16 %v38
  %v440 = vunpack.c.l.b16 %v39
  %v441 = vunpack.c.l.b16 %v40
  %v442 = vunpack.c.l.b16 %v41
  %v443 = vunpack.c.l.b16 %v42
  %v444 = vunpack.c.l.b16 %v43
  %v445 = vunpack.c.l.b16 %v44
  %v446 = vunpack.c.l.b16 %v45
  %v447 = vunpack.c.l.b16 %v46
  %v448 = vunpack.c.l.b16 %v47
  %v449 = vunpack.c.l.b16 %v48
  %v450 = vunpack.c.l.b16 %v49
  %v451 = vunpack.c.l.b16 %v50
  %v452 = vunpack.c.l.b16 %v51
  %v453 = vunpack.c.l.b16 %v52
  %v454 = vunpack.c.l.b16 %v53
  %v455 = vunpack.c.l.b16 %v54
  %v456 = vunpack.c.l.b16 %v55
  %v457 = vunpack.c.l.b16 %v56
  %v458 = vunpack.c.l.b16 %v57
  %v459 = vunpack.c.l.b16 %v58
  %v460 = vunpack.c.l.b16 %v59
  %v461 = vunpack.c.l.b16 %v60
  %v462 = vunpack.c.l.b16 %v61
  %v463 = vunpack.c.l.b16 %v62
  %v464 = vunpack.c.l.b16 %v63
  %v465 = vunpack.c.l.b16 %v64
  %v466 = vunpack.c.l.b16 %v65
  %v467 = vunpack.c.l.b16 %v66
  %v468 = vunpack.c.l.b16 %v67
  %v469 = vunpack.c.l.b16 %v68
  %v470 = vunpack.c.l.b16 %v69
  %v471 = vunpack.c.l.b16 %v70
  %v472 = vunpack.c.l.b16 %v71
  %v473 = vunpack.c.l.b16 %v72
  %v474 = vunpack.c.l.b16 %v73
  %v475 = vunpack.c.l.b16 %v74
  %v476 = vunpack.c.l.b16 %v75
  %v477 = vunpack.c.l.b16 %v76
  %v478 = vunpack.c.l.b16 %v77
  %v479 = vunpack.c.l.b16 %v78
  %v480 = vunpack.c.l.b16 %v79
  %v481 = vunpack.c.l.b16 %v80
  %v482 = vunpack.c.l.b16 %v81
  %v483 = vunpack.c.l.b16 %v82
  %v484 = vunpack.c.l.b16 %v83
  %v485 = vunpack.c.l.b16 %v84
  %v486 = vunpack.c.l.b16 %v85
  %v487 = vunpack.c.l.b16 %v86
  %v488 = vunpack.c.l.b16 %v87
  %v489 = vunpack.c.l.b16 %v88
  %v490 = vunpack.c.l.b16 %v89
  %v491 = vunpack.c.l.b16 %v90
  %v492 = vunpack.c.l.b16 %v91
  %v493 = vunpack.c.l.b16 %v92
  %v494 = vunpack.c.l.b16 %v93
  %v495 = vunpack.c.l.b16 %v94
  %v496 = vunpack.c.l.b16 %v95
  %v497 = vunpack.c.l.b16 %v96
  %v498 = vunpack.c.l.b16 %v97
  %v499 = vunpack.c.l.b16 %v98
  %v500 = vunpack.c.l.b16 %v99
  %v501 = vunpack.c.l.b16 %v100
  %v502 = vunpack.c.l.b16 %v101
  %v503 = vunpack.c.l.b16 %v102
  %v504 = vunpack.c.l.b16 %v103
  %v505 = vunpack.c.l.b16 %v104
  %v506 = vunpack.c.l.b16 %v105
  %v507 = vunpack.c.l.b16 %v106
  %v508 = vunpack.c.l.b16 %v107
  %v509 = vunpack.c.l.b16 %v108
  %v510 = vunpack.c.l.b16 %v109
  %v511 = vunpack.c.l.b16 %v110
  %v512 = vunpack.c.l.b16 %v111
  %v513 = vunpack.c.l.b16 %v112
  %v514 = vunpack.c.l.b16 %v113
  %v515 = vunpack.c.l.b16 %v114
  %v516 = vunpack.c.l.b16 %v115
  %v517 = vunpack.c.l.b16 %v116
  %v518 = vunpack.c.l.b16 %v117
  %v519 = vunpack.c.l.b16 %v118
  %v520 = vunpack.c.l.b16 %v119
  %v521 = vunpack.c.l.b16 %v120
  %v522 = vunpack.c.l.b16 %v121
  %v523 = vunpack.c.l.b16 %v122
  %v524 = vunpack.c.l.b16 %v123
  %v525 = vunpack.c.l.b16 %v124
  %v526 = vunpack.c.l.b16 %v125
  %v527 = vunpack.c.l.b16 %v126
  %v528 = vunpack.c.l.b16 %v127
  %v529 = vunpack.c.l.b16 %v128
  %v530 = vunpack.c.l.b16 %v129
  %v531 = vunpack.c.l.b16 %v130
  %v532 = vunpack.c.l.b16 %v131
  %v533 = vunpack.c.l.b16 %v132
  %v534 = vunpack.c.l.b16 %v133
  %v535 = vunpack.c.l.b16 %v134
  %v536 = vunpack.c.l.b16 %v135
  %v537 = vunpack.c.l.b16 %v136
  %v538 = vunpack.c.l.b16 %v137
  %v539 = vunpack.c.l.b16 %v138
  %v540 = vunpack.c.l.b16 %v139
  %v541 = vunpack.c.l.b16 %v140
  %v542 = vunpack.c.l.b16 %v141
  %v543 = vunpack.c.l.b16 %v142
  %v544 = vunpack.c.l.b16 %v143
  %v545 = vunpack.c.l.b16 %v144
  %v546 = vunpack.c.l.b16 %v145
  %v547 = vunpack.c.l.b16 %v146
  %v548 = vunpack.c.l.b16 %v147
  %v549 = vunpack.c.l.b16 %v148
  %v550 = vunpack.c.l.b16 %v149
  %v551 = vunpack.c.l.b16 %v150
  %v552 = vunpack.c.l.b16 %v151
  %v553 = vunpack.c.l.b16 %v152
  %v554 = vunpack.c.l.b16 %v153
  %v555 = vunpack.c.l.b16 %v154
  %v556 = vunpack.c.l.b16 %v155
  %v557 = vunpack.c.l.b16 %v156
  %v558 = vunpack.c.l.b16 %v157
  %v559 = vunpack.c.l.b16 %v158
  %v560 = vunpack.c.l.b16 %v159
  %v561 = vunpack.c.l.b16 %v160
  %v562 = vunpack.c.l.b16 %v161
  %v563 = vunpack.c.l.b16 %v162
  %v564 = vunpack.c.l.b16 %v163
  %v565 = vunpack.c.l.b16 %v164
  %v566 = vunpack.c.l.b16 %v165
  %v567 = vunpack.c.l.b16 %v166
  %v568 = vunpack.c.l.b16 %v167
  %v569 = vunpack.c.l.b16 %v168
  %v570 = vunpack.c.l.b16 %v169
  %v571 = vunpack.c.l.b16 %v170
  %v572 = vunpack.c.l.b16 %v171
  %v573 = vunpack.c.l.b16 %v172
  %v574 = vunpack.c.l.b16 %v173
  %v575 = vunpack.c.l.b16 %v174
  %v576 = vunpack.c.l.b16 %v175
  %v577 = vunpack.c.l.b16 %v176
  %v578 = vunpack.c.l.b16 %v177
  %v579 = vunpack.c.l.b16 %v178
  %v580 = vunpack.c.l.b16 %v179
  %v581 = vunpack.c.l.b16 %v180
  %v582 = vunpack.c.l.b16 %v181
  %v583 = vunpack.c.l.b16 %v182
  %v584 = vunpack.c.l.b16 %v183
  %v585 = vunpack.c.l.b16 %v184
  %v586 = vunpack.c.l.b16 %v185
  %v587 = vunpack.c.l.b16 %v186
  %v588 = vunpack.c.l.b16 %v187
  %v589 = vunpack.c.l.b16 %v188
  %v590 = vunpack.c.l.b16 %v189
  %v591 = vunpack.c.l.b16 %v190
  %v592 = vunpack.c.l.b16 %v191
  %v593 = vunpack.c.l.b16 %v192
  %v594 = vunpack.c.l.b16 %v193
  %v595 = vunpack.c.l.b16 %v194
  %v596 = vunpack.c.l.b16 %v195
  %v597 = vunpack.c.l.b16 %v196
  %v598 = vunpack.c.l.b16 %v197
  %v599 = vunpack.c.l.b16 %v198
  %v600 = vunpack.c.l.b16 %v199
  %v601 = vunpack.c.l.b16 %v200
  %v602 = vunpack.c.l.b16 %v201
  %v603 = vunpack.c.l.b16 %v202
  %v604 = vunpack.c.l.b16 %v203
  %v605 = vunpack.c.l.b16 %v204
  %v606 = vunpack.c.l.b16 %v205
  %v607 = vunpack.c.l.b16 %v206
  %v608 = vunpack.c.l.b16 %v207
  %v609 = vunpack.c.l.b16 %v208
  %v610 = vunpack.c.l.b16 %v209
  %v611 = vunpack.c.l.b16 %v210
  %v612 = vpack.c.b16 %v417, %v416
  %v613 = vpack.c.b16 %v419, %v418
  %v614 = vpack.c.b16 %v421, %v420
  %v615 = vpack.c.b16 %v423, %v422
  %v616 = vpack.c.b16 %v425, %v424
  %v617 = vpack.c.b16 %v427, %v426
  %v618 = vpack.c.b16 %v429, %v428
  %v619 = vpack.c.b16 %v431, %v430
  %v620 = vpack.c.b16 %v433, %v432
  %v621 = vpack.c.b16 %v435, %v434
  %v622 = vpack.c.b16 %v437, %v436
  %v623 = vpack.c.b16 %v439, %v438
  %v624 = vpack.c.b16 %v441, %v440
  %v625 = vpack.c.b16 %v443, %v442
  %v626 = vpack.c.b16 %v445, %v444
  %v627 = vpack.c.b16 %v447, %v446
  %v628 = vpack.c.b16 %v449, %v448
  %v629 = vpack.c.b16 %v451, %v450
  %v630 = vpack.c.b16 %v453, %v452
  %v631 = vpack.c.b16 %v455, %v454
  %v632 = vpack.c.b16 %v457, %v456
  %v633 = vpack.c.b16 %v459, %v458
  %v634 = vpack.c.b16 %v461, %v460
  %v635 = vpack.c.b16 %v463, %v462
  %v636 = vpack.c.b16 %v465, %v464
  %v637 = vpack.c.b16 %v467, %v466
  %v638 = vpack.c.b16 %v469, %v468
  %v639 = vpack.c.b16 %v471, %v470
  %v640 = vpack.c.b16 %v473, %v472
  %v641 = vpack.c.b16 %v475, %v474
  %v642 = vpack.c.b16 %v477, %v476
  %v643 = vpack.c.b16 %v479, %v478
  %v644 = vpack.c.b16 %v481, %v480
  %v645 = vpack.c.b16 %v483, %v482
  %v646 = vpack.c.b16 %v485, %v484
  %v647 = vpack.c.b16 %v487, %v486
  %v648 = vpack.c.b16 %v489, %v488
  %v649 = vpack.c.b16 %v491, %v490
  %v650 = vpack.c.b16 %v493, %v492
  %v651 = vpack.c.b16 %v495, %v494
  %v652 = vpack.c.b16 %v497, %v496
  %v653 = vpack.c.b16 %v499, %v498
  %v654 = vpack.c.b16 %v501, %v500
  %v655 = vpack.c.b16 %v503, %v502
  %v656 = vpack.c.b16 %v505, %v504
  %v657 = vpack.c.b16 %v507, %v506
  %v658 = vpack.c.b16 %v509, %v508
  %v659 = vpack.c.b16 %v511, %v510
  %v660 = vpack.c.b16 %v513, %v512
  %v661 = vpack.c.b16 %v515, %v514
  %v662 = vpack.c.b16 %v517, %v516
  %v663 = vpack.c.b16 %v519, %v518
  %v664 = vpack.c.b16 %v521, %v520
  %v665 = vpack.c.b16 %v523, %v522
  %v666 = vpack.c.b16 %v525, %v524
  %v667 = vpack.c.b16 %v527, %v526
  %v668 = vpack.c.b16 %v529, %v528
  %v669 = vpack.c.b16 %v531, %v530
  %v670 = vpack.c.b16 %v533, %v532
  %v671 = vpack.c.b16 %v535, %v534
  %v672 = vpack.c.b16 %v537, %v536
  %v673 = vpack.c.b16 %v539, %v538
  %v674 = vpack.c.b16 %v541, %v540
  %v675 = vpack.c.b16 %v543, %v542
  %v676 = vpack.c.b16 %v545, %v544
  %v677 = vpack.c.b16 %v547, %v546
  %v678 = vpack.c.b16 %v549, %v548
  %v679 = vpack.c.b16 %v551, %v550
  %v680 = vpack.c.b16 %v553, %v552
  %v681 = vpack.c.b16 %v555, %v554
  %v682 = vpack.c.b16 %v557, %v556
  %v683 = vpack.c.b16 %v559, %v558
  %v684 = vpack.c.b16 %v561, %v560
  %v685 = vpack.c.b16 %v563, %v562
  %v686 = vpack.c.b16 %v565, %v564
  %v687 = vpack.c.b16 %v567, %v566
  %v688 = vpack.c.b16 %v569, %v568
  %v689 = vpack.c.b16 %v571, %v570
  %v690 = vpack.c.b16 %v573, %v572
  %v691 = vpack.c.b16 %v575, %v574
  %v692 = vpack.c.b16 %v577, %v576
  %v693 = vpack.c.b16 %v579, %v578
  %v694 = vpack.c.b16 %v581, %v580
  %v695 = vpack.c.b16 %v583, %v582
  %v696 = vpack.c.b16 %v585, %v584
  %v697 = vpack.c.b16 %v587, %v586
  %v698 = vpack.c.b16 %v589, %v588
  %v699 = vpack.c.b16 %v591, %v590
  %v700 = vpack.c.b16 %v593, %v592
  %v701 = vpack.c.b16 %v595, %v594
  %v702 = vpack.c.b16 %v597, %v596
  %v703 = vpack.c.b16 %v599, %v598
  %v704 = vpack.c.b16 %v601, %v600
  %v705 = vpack.c.b16 %v603, %v602
  %v706 = vpack.c.b16 %v605, %v604
  %v707 = vpack.c.b16 %v607, %v606
  %v708 = vpack.c.b16 %v609, %v608
  %v709 = vpack.c.b16 %v611, %v610
  %v712 = vunpack.c.l.b16 %v211
  %v713 = vunpack.c.l.b16 %v212
  %v714 = vpack.c.b16 %v713, %v712
  %vm715 = vcmask 72704
  %v717 = vsel %vm715, %v612, 0
  %v720 = vsel %vm715, %v613, 0
  %v723 = vsel %vm715, %v614, 0
  %v726 = vsel %vm715, %v615, 0
  %v729 = vsel %vm715, %v616, 0
  %v732 = vsel %vm715, %v617, 0
  %v735 = vsel %vm715, %v618, 0
  %v738 = vsel %vm715, %v619, 0
  %v741 = vsel %vm715, %v620, 0
  %v744 = vsel %vm715, %v621, 0
  %v747 = vsel %vm715, %v622, 0
  %v750 = vsel %vm715, %v623, 0
  %v753 = vsel %vm715, %v624, 0
  %v756 = vsel %vm715, %v625, 0
  %v759 = vsel %vm715, %v626, 0
  %v762 = vsel %vm715, %v627, 0
  %v765 = vsel %vm715, %v628, 0
  %v768 = vsel %vm715, %v629, 0
  %v771 = vsel %vm715, %v630, 0
  %v774 = vsel %vm715, %v631, 0
  %v777 = vsel %vm715, %v632, 0
  %v780 = vsel %vm715, %v633, 0
  %v783 = vsel %vm715, %v634, 0
  %v786 = vsel %vm715, %v635, 0
  %v789 = vsel %vm715, %v636, 0
  %v792 = vsel %vm715, %v637, 0
  %v795 = vsel %vm715, %v638, 0
  %v798 = vsel %vm715, %v639, 0
  %v801 = vsel %vm715, %v640, 0
  %v804 = vsel %vm715, %v641, 0
  %v807 = vsel %vm715, %v642, 0
  %v810 = vsel %vm715, %v643, 0
  %v813 = vsel %vm715, %v644, 0
  %v816 = vsel %vm715, %v645, 0
  %v819 = vsel %vm715, %v646, 0
  %v822 = vsel %vm715, %v647, 0
  %v825 = vsel %vm715, %v648, 0
  %v828 = vsel %vm715, %v649, 0
  %v831 = vsel %vm715, %v650, 0
  %v834 = vsel %vm715, %v651, 0
  %v837 = vsel %vm715, %v652, 0
  %v840 = vsel %vm715, %v653, 0
  %v843 = vsel %vm715, %v654, 0
  %v846 = vsel %vm715, %v655, 0
  %v849 = vsel %vm715, %v656, 0
  %v852 = vsel %vm715, %v657, 0
  %v855 = vsel %vm715, %v658, 0
  %v858 = vsel %vm715, %v659, 0
  %v861 = vsel %vm715, %v660, 0
  %v864 = vsel %vm715, %v661, 0
  %v867 = vsel %vm715, %v662, 0
  %v870 = vsel %vm715, %v663, 0
  %v873 = vsel %vm715, %v664, 0
  %v876 = vsel %vm715, %v665, 0
  %v879 = vsel %vm715, %v666, 0
  %v882 = vsel %vm715, %v667, 0
  %v885 = vsel %vm715, %v668, 0
  %v888 = vsel %vm715, %v669, 0
  %v891 = vsel %vm715, %v670, 0
  %v894 = vsel %vm715, %v671, 0
  %v897 = vsel %vm715, %v672, 0
  %v900 = vsel %vm715, %v673, 0
  %v903 = vsel %vm715, %v674, 0
  %v906 = vsel %vm715, %v675, 0
  %v909 = vsel %vm715, %v676, 0
  %v912 = vsel %vm715, %v677, 0
  %v915 = vsel %vm715, %v678, 0
  %v918 = vsel %vm715, %v679, 0
  %v921 = vsel %vm715, %v680, 0
  %v924 = vsel %vm715, %v681, 0
  %v927 = vsel %vm715, %v682, 0
  %v930 = vsel %vm715, %v683, 0
  %v933 = vsel %vm715, %v684, 0
  %v936 = vsel %vm715, %v685, 0
  %v939 = vsel %vm715, %v686, 0
  %v942 = vsel %vm715, %v687, 0
  %v945 = vsel %vm715, %v688, 0
  %v948 = vsel %vm715, %v689, 0
  %v951 = vsel %vm715, %v690, 0
  %v954 = vsel %vm715, %v691, 0
  %v957 = vsel %vm715, %v692, 0
  %v960 = vsel %vm715, %v693, 0
  %v963 = vsel %vm715, %v694, 0
  %v966 = vsel %vm715, %v695, 0
  %v969 = vsel %vm715, %v696, 0
  %v972 = vsel %vm715, %v697, 0
  %v975 = vsel %vm715, %v698, 0
  %v978 = vsel %vm715, %v699, 0
  %v981 = vsel %vm715, %v700, 0
  %v984 = vsel %vm715, %v701, 0
  %v987 = vsel %vm715, %v702, 0
  %v990 = vsel %vm715, %v703, 0
  %v993 = vsel %vm715, %v704, 0
  %v996 = vsel %vm715, %v705, 0
  %v999 = vsel %vm715, %v706, 0
  %v1002 = vsel %vm715, %v707, 0
  %v1005 = vsel %vm715, %v708, 0
  %v1008 = vsel %vm715, %v709, 0
  %vm1010 = vcmask 1043456
  %vm1011 = vcmask 1044480
  %v1012 = vsel %vm1010, 4294967295, 65535
  %v1013 = vsel %vm1011, %v1012, 0
  %v1015 = vand.u32 %v714, %v1013
  %1017 = vmatprep.subr.bf16.mxu0 0
  %1018 = vmatpush1.bf16.msra.mxu0 %v1015
  %1019 = vmatprep.subr.bf16.mxu0 0
  %1020 = vmatpush1.bf16.msra.mxu0 0
  %1021 = vmatprep.subr.bf16.mxu0 0
  %1022 = vmatpush1.bf16.msra.mxu0 0
  %1023 = vmatprep.subr.bf16.mxu0 0
  %1024 = vmatpush1.bf16.msra.mxu0 0
  %1025 = vmatprep.subr.bf16.mxu0 0
  %1026 = vmatpush1.bf16.msra.mxu0 0
  %1027 = vmatprep.subr.bf16.mxu0 0
  %1028 = vmatpush1.bf16.msra.mxu0 0
  %1029 = vmatprep.subr.bf16.mxu0 0
  %1030 = vmatpush1.bf16.msra.mxu0 0
  %1031 = vmatprep.subr.bf16.mxu0 0
  %1032 = vmatpush1.bf16.msra.mxu0 0
  %1033 = vmatprep.subr.bf16.mxu0 0
  %1034 = vmatpush1.bf16.msra.mxu0 0
  %1035 = vmatprep.subr.bf16.mxu0 0
  %1036 = vmatpush1.bf16.msra.mxu0 0
  %1037 = vmatprep.subr.bf16.mxu0 0
  %1038 = vmatpush1.bf16.msra.mxu0 0
  %1039 = vmatprep.subr.bf16.mxu0 0
  %1040 = vmatpush1.bf16.msra.mxu0 0
  %1041 = vmatprep.subr.bf16.mxu0 0
  %1042 = vmatpush1.bf16.msra.mxu0 0
  %1043 = vmatprep.subr.bf16.mxu0 0
  %1044 = vmatpush1.bf16.msra.mxu0 0
  %1045 = vmatprep.subr.bf16.mxu0 0
  %1046 = vmatpush1.bf16.msra.mxu0 0
  %1047 = vmatprep.subr.bf16.mxu0 0
  %1048 = vmatpush1.bf16.msra.mxu0 0
  %1049 = vmatprep.mubr.bf16.mxu0 0
  %1050 = vmatmul.mubr.bf16.gmra.mrb[0].mxu0 %v717
  %v1051 = vpop.f32.mrb[0].mxu0
  %v1052 = vadd.f32 %v218, %v1051
  %v1053 = vpop.f32.mrb[0].mxu0
  %v1054 = vpop.f32.mrb[0].mxu0
  %v1055 = vadd.f32 %v218, %v1054
  %v1056 = vpop.f32.mrb[0].mxu0
  %1057 = vmatprep.mubr.bf16.mxu0 0
  %1058 = vmatmul.mubr.bf16.gmra.mrb[0].mxu0 %v720
  %v1059 = vpop.f32.mrb[0].mxu0
  %v1060 = vadd.f32 %v218, %v1059
  %v1061 = vpop.f32.mrb[0].mxu0
  %v1062 = vpop.f32.mrb[0].mxu0
  %v1063 = vadd.f32 %v218, %v1062
  %v1064 = vpop.f32.mrb[0].mxu0
  %1065 = vmatprep.mubr.bf16.mxu0 0
  %1066 = vmatmul.mubr.bf16.gmra.mrb[0].mxu0 %v723
  %v1067 = vpop.f32.mrb[0].mxu0
  %v1068 = vadd.f32 %v218, %v1067
  %v1069 = vpop.f32.mrb[0].mxu0
  %v1070 = vpop.f32.mrb[0].mxu0
  %v1071 = vadd.f32 %v218, %v1070
  %v1072 = vpop.f32.mrb[0].mxu0
  %1073 = vmatprep.mubr.bf16.mxu0 0
  %1074 = vmatmul.mubr.bf16.gmra.mrb[0].mxu0 %v726
  %v1075 = vpop.f32.mrb[0].mxu0
  %v1076 = vadd.f32 %v218, %v1075
  %v1077 = vpop.f32.mrb[0].mxu0
  %v1078 = vpop.f32.mrb[0].mxu0
  %v1079 = vadd.f32 %v218, %v1078
  %v1080 = vpop.f32.mrb[0].mxu0
  %1081 = vmatprep.mubr.bf16.mxu0 0
  %1082 = vmatmul.mubr.bf16.gmra.mrb[0].mxu0 %v729
  %v1083 = vpop.f32.mrb[0].mxu0
  %v1084 = vadd.f32 %v218, %v1083
  %v1085 = vpop.f32.mrb[0].mxu0
  %v1086 = vpop.f32.mrb[0].mxu0
  %v1087 = vadd.f32 %v218, %v1086
  %v1088 = vpop.f32.mrb[0].mxu0
  %1089 = vmatprep.mubr.bf16.mxu0 0
  %1090 = vmatmul.mubr.bf16.gmra.mrb[0].mxu0 %v732
  %v1091 = vpop.f32.mrb[0].mxu0
  %v1092 = vadd.f32 %v218, %v1091
  %v1093 = vpop.f32.mrb[0].mxu0
  %v1094 = vpop.f32.mrb[0].mxu0
  %v1095 = vadd.f32 %v218, %v1094
  %v1096 = vpop.f32.mrb[0].mxu0
  %1097 = vmatprep.mubr.bf16.mxu0 0
  %1098 = vmatmul.mubr.bf16.gmra.mrb[0].mxu0 %v735
  %v1099 = vpop.f32.mrb[0].mxu0
  %v1100 = vadd.f32 %v218, %v1099
  %v1101 = vpop.f32.mrb[0].mxu0
  %v1102 = vpop.f32.mrb[0].mxu0
  %v1103 = vadd.f32 %v218, %v1102
  %v1104 = vpop.f32.mrb[0].mxu0
  %1105 = vmatprep.mubr.bf16.mxu0 0
  %1106 = vmatmul.mubr.bf16.gmra.mrb[0].mxu0 %v738
  %v1107 = vpop.f32.mrb[0].mxu0
  %v1108 = vadd.f32 %v218, %v1107
  %v1109 = vpop.f32.mrb[0].mxu0
  %v1110 = vpop.f32.mrb[0].mxu0
  %v1111 = vadd.f32 %v218, %v1110
  %v1112 = vpop.f32.mrb[0].mxu0
  %1113 = vmatprep.mubr.bf16.mxu0 0
  %1114 = vmatmul.mubr.bf16.gmra.mrb[0].mxu0 %v741
  %v1115 = vpop.f32.mrb[0].mxu0
  %v1116 = vadd.f32 %v218, %v1115
  %v1117 = vpop.f32.mrb[0].mxu0
  %v1118 = vpop.f32.mrb[0].mxu0
  %v1119 = vadd.f32 %v218, %v1118
  %v1120 = vpop.f32.mrb[0].mxu0
  %1121 = vmatprep.mubr.bf16.mxu0 0
  %1122 = vmatmul.mubr.bf16.gmra.mrb[0].mxu0 %v744
  %v1123 = vpop.f32.mrb[0].mxu0
  %v1124 = vadd.f32 %v218, %v1123
  %v1125 = vpop.f32.mrb[0].mxu0
  %v1126 = vpop.f32.mrb[0].mxu0
  %v1127 = vadd.f32 %v218, %v1126
  %v1128 = vpop.f32.mrb[0].mxu0
  %1129 = vmatprep.mubr.bf16.mxu0 0
  %1130 = vmatmul.mubr.bf16.gmra.mrb[0].mxu0 %v747
  %v1131 = vpop.f32.mrb[0].mxu0
  %v1132 = vadd.f32 %v218, %v1131
  %v1133 = vpop.f32.mrb[0].mxu0
  %v1134 = vpop.f32.mrb[0].mxu0
  %v1135 = vadd.f32 %v218, %v1134
  %v1136 = vpop.f32.mrb[0].mxu0
  %1137 = vmatprep.mubr.bf16.mxu0 0
  %1138 = vmatmul.mubr.bf16.gmra.mrb[0].mxu0 %v750
  %v1139 = vpop.f32.mrb[0].mxu0
  %v1140 = vadd.f32 %v218, %v1139
  %v1141 = vpop.f32.mrb[0].mxu0
  %v1142 = vpop.f32.mrb[0].mxu0
  %v1143 = vadd.f32 %v218, %v1142
  %v1144 = vpop.f32.mrb[0].mxu0
  %1145 = vmatprep.mubr.bf16.mxu0 0
  %1146 = vmatmul.mubr.bf16.gmra.mrb[0].mxu0 %v753
  %v1147 = vpop.f32.mrb[0].mxu0
  %v1148 = vadd.f32 %v218, %v1147
  %v1149 = vpop.f32.mrb[0].mxu0
  %v1150 = vpop.f32.mrb[0].mxu0
  %v1151 = vadd.f32 %v218, %v1150
  %v1152 = vpop.f32.mrb[0].mxu0
  %1153 = vmatprep.mubr.bf16.mxu0 0
  %1154 = vmatmul.mubr.bf16.gmra.mrb[0].mxu0 %v756
  %v1155 = vpop.f32.mrb[0].mxu0
  %v1156 = vadd.f32 %v218, %v1155
  %v1157 = vpop.f32.mrb[0].mxu0
  %v1158 = vpop.f32.mrb[0].mxu0
  %v1159 = vadd.f32 %v218, %v1158
  %v1160 = vpop.f32.mrb[0].mxu0
  %1161 = vmatprep.mubr.bf16.mxu0 0
  %1162 = vmatmul.mubr.bf16.gmra.mrb[0].mxu0 %v759
  %v1163 = vpop.f32.mrb[0].mxu0
  %v1164 = vadd.f32 %v218, %v1163
  %v1165 = vpop.f32.mrb[0].mxu0
  %v1166 = vpop.f32.mrb[0].mxu0
  %v1167 = vadd.f32 %v218, %v1166
  %v1168 = vpop.f32.mrb[0].mxu0
  %1169 = vmatprep.mubr.bf16.mxu0 0
  %1170 = vmatmul.mubr.bf16.gmra.mrb[0].mxu0 %v762
  %v1171 = vpop.f32.mrb[0].mxu0
  %v1172 = vadd.f32 %v218, %v1171
  %v1173 = vpop.f32.mrb[0].mxu0
  %v1174 = vpop.f32.mrb[0].mxu0
  %v1175 = vadd.f32 %v218, %v1174
  %v1176 = vpop.f32.mrb[0].mxu0
  %1177 = vmatprep.mubr.bf16.mxu0 0
  %1178 = vmatmul.mubr.bf16.gmra.mrb[0].mxu0 %v765
  %v1179 = vpop.f32.mrb[0].mxu0
  %v1180 = vadd.f32 %v218, %v1179
  %v1181 = vpop.f32.mrb[0].mxu0
  %v1182 = vpop.f32.mrb[0].mxu0
  %v1183 = vadd.f32 %v218, %v1182
  %v1184 = vpop.f32.mrb[0].mxu0
  %1185 = vmatprep.mubr.bf16.mxu0 0
  %1186 = vmatmul.mubr.bf16.gmra.mrb[0].mxu0 %v768
  %v1187 = vpop.f32.mrb[0].mxu0
  %v1188 = vadd.f32 %v218, %v1187
  %v1189 = vpop.f32.mrb[0].mxu0
  %v1190 = vpop.f32.mrb[0].mxu0
  %v1191 = vadd.f32 %v218, %v1190
  %v1192 = vpop.f32.mrb[0].mxu0
  %1193 = vmatprep.mubr.bf16.mxu0 0
  %1194 = vmatmul.mubr.bf16.gmra.mrb[0].mxu0 %v771
  %v1195 = vpop.f32.mrb[0].mxu0
  %v1196 = vadd.f32 %v218, %v1195
  %v1197 = vpop.f32.mrb[0].mxu0
  %v1198 = vpop.f32.mrb[0].mxu0
  %v1199 = vadd.f32 %v218, %v1198
  %v1200 = vpop.f32.mrb[0].mxu0
  %1201 = vmatprep.mubr.bf16.mxu0 0
  %1202 = vmatmul.mubr.bf16.gmra.mrb[0].mxu0 %v774
  %v1203 = vpop.f32.mrb[0].mxu0
  %v1204 = vadd.f32 %v218, %v1203
  %v1205 = vpop.f32.mrb[0].mxu0
  %v1206 = vpop.f32.mrb[0].mxu0
  %v1207 = vadd.f32 %v218, %v1206
  %v1208 = vpop.f32.mrb[0].mxu0
  %1209 = vmatprep.mubr.bf16.mxu0 0
  %1210 = vmatmul.mubr.bf16.gmra.mrb[0].mxu0 %v777
  %v1211 = vpop.f32.mrb[0].mxu0
  %v1212 = vadd.f32 %v218, %v1211
  %v1213 = vpop.f32.mrb[0].mxu0
  %v1214 = vpop.f32.mrb[0].mxu0
  %v1215 = vadd.f32 %v218, %v1214
  %v1216 = vpop.f32.mrb[0].mxu0
  %1217 = vmatprep.mubr.bf16.mxu0 0
  %1218 = vmatmul.mubr.bf16.gmra.mrb[0].mxu0 %v780
  %v1219 = vpop.f32.mrb[0].mxu0
  %v1220 = vadd.f32 %v218, %v1219
  %v1221 = vpop.f32.mrb[0].mxu0
  %v1222 = vpop.f32.mrb[0].mxu0
  %v1223 = vadd.f32 %v218, %v1222
  %v1224 = vpop.f32.mrb[0].mxu0
  %1225 = vmatprep.mubr.bf16.mxu0 0
  %1226 = vmatmul.mubr.bf16.gmra.mrb[0].mxu0 %v783
  %v1227 = vpop.f32.mrb[0].mxu0
  %v1228 = vadd.f32 %v218, %v1227
  %v1229 = vpop.f32.mrb[0].mxu0
  %v1230 = vpop.f32.mrb[0].mxu0
  %v1231 = vadd.f32 %v218, %v1230
  %v1232 = vpop.f32.mrb[0].mxu0
  %1233 = vmatprep.mubr.bf16.mxu0 0
  %1234 = vmatmul.mubr.bf16.gmra.mrb[0].mxu0 %v786
  %v1235 = vpop.f32.mrb[0].mxu0
  %v1236 = vadd.f32 %v218, %v1235
  %v1237 = vpop.f32.mrb[0].mxu0
  %v1238 = vpop.f32.mrb[0].mxu0
  %v1239 = vadd.f32 %v218, %v1238
  %v1240 = vpop.f32.mrb[0].mxu0
  %1241 = vmatprep.mubr.bf16.mxu0 0
  %1242 = vmatmul.mubr.bf16.gmra.mrb[0].mxu0 %v789
  %v1243 = vpop.f32.mrb[0].mxu0
  %v1244 = vadd.f32 %v218, %v1243
  %v1245 = vpop.f32.mrb[0].mxu0
  %v1246 = vpop.f32.mrb[0].mxu0
  %v1247 = vadd.f32 %v218, %v1246
  %v1248 = vpop.f32.mrb[0].mxu0
  %1249 = vmatprep.mubr.bf16.mxu0 0
  %1250 = vmatmul.mubr.bf16.gmra.mrb[0].mxu0 %v792
  %v1251 = vpop.f32.mrb[0].mxu0
  %v1252 = vadd.f32 %v218, %v1251
  %v1253 = vpop.f32.mrb[0].mxu0
  %v1254 = vpop.f32.mrb[0].mxu0
  %v1255 = vadd.f32 %v218, %v1254
  %v1256 = vpop.f32.mrb[0].mxu0
  %1257 = vmatprep.mubr.bf16.mxu0 0
  %1258 = vmatmul.mubr.bf16.gmra.mrb[0].mxu0 %v795
  %v1259 = vpop.f32.mrb[0].mxu0
  %v1260 = vadd.f32 %v218, %v1259
  %v1261 = vpop.f32.mrb[0].mxu0
  %v1262 = vpop.f32.mrb[0].mxu0
  %v1263 = vadd.f32 %v218, %v1262
  %v1264 = vpop.f32.mrb[0].mxu0
  %1265 = vmatprep.mubr.bf16.mxu0 0
  %1266 = vmatmul.mubr.bf16.gmra.mrb[0].mxu0 %v798
  %v1267 = vpop.f32.mrb[0].mxu0
  %v1268 = vadd.f32 %v218, %v1267
  %v1269 = vpop.f32.mrb[0].mxu0
  %v1270 = vpop.f32.mrb[0].mxu0
  %v1271 = vadd.f32 %v218, %v1270
  %v1272 = vpop.f32.mrb[0].mxu0
  %1273 = vmatprep.mubr.bf16.mxu0 0
  %1274 = vmatmul.mubr.bf16.gmra.mrb[0].mxu0 %v801
  %v1275 = vpop.f32.mrb[0].mxu0
  %v1276 = vadd.f32 %v218, %v1275
  %v1277 = vpop.f32.mrb[0].mxu0
  %v1278 = vpop.f32.mrb[0].mxu0
  %v1279 = vadd.f32 %v218, %v1278
  %v1280 = vpop.f32.mrb[0].mxu0
  %1281 = vmatprep.mubr.bf16.mxu0 0
  %1282 = vmatmul.mubr.bf16.gmra.mrb[0].mxu0 %v804
  %v1283 = vpop.f32.mrb[0].mxu0
  %v1284 = vadd.f32 %v218, %v1283
  %v1285 = vpop.f32.mrb[0].mxu0
  %v1286 = vpop.f32.mrb[0].mxu0
  %v1287 = vadd.f32 %v218, %v1286
  %v1288 = vpop.f32.mrb[0].mxu0
  %1289 = vmatprep.mubr.bf16.mxu0 0
  %1290 = vmatmul.mubr.bf16.gmra.mrb[0].mxu0 %v807
  %v1291 = vpop.f32.mrb[0].mxu0
  %v1292 = vadd.f32 %v218, %v1291
  %v1293 = vpop.f32.mrb[0].mxu0
  %v1294 = vpop.f32.mrb[0].mxu0
  %v1295 = vadd.f32 %v218, %v1294
  %v1296 = vpop.f32.mrb[0].mxu0
  %1297 = vmatprep.mubr.bf16.mxu0 0
  %1298 = vmatmul.mubr.bf16.gmra.mrb[0].mxu0 %v810
  %v1299 = vpop.f32.mrb[0].mxu0
  %v1300 = vadd.f32 %v218, %v1299
  %v1301 = vpop.f32.mrb[0].mxu0
  %v1302 = vpop.f32.mrb[0].mxu0
  %v1303 = vadd.f32 %v218, %v1302
  %v1304 = vpop.f32.mrb[0].mxu0
  %1305 = vmatprep.mubr.bf16.mxu0 0
  %1306 = vmatmul.mubr.bf16.gmra.mrb[0].mxu0 %v813
  %v1307 = vpop.f32.mrb[0].mxu0
  %v1308 = vadd.f32 %v218, %v1307
  %v1309 = vpop.f32.mrb[0].mxu0
  %v1310 = vpop.f32.mrb[0].mxu0
  %v1311 = vadd.f32 %v218, %v1310
  %v1312 = vpop.f32.mrb[0].mxu0
  %1313 = vmatprep.mubr.bf16.mxu0 0
  %1314 = vmatmul.mubr.bf16.gmra.mrb[0].mxu0 %v816
  %v1315 = vpop.f32.mrb[0].mxu0
  %v1316 = vadd.f32 %v218, %v1315
  %v1317 = vpop.f32.mrb[0].mxu0
  %v1318 = vpop.f32.mrb[0].mxu0
  %v1319 = vadd.f32 %v218, %v1318
  %v1320 = vpop.f32.mrb[0].mxu0
  %1321 = vmatprep.mubr.bf16.mxu0 0
  %1322 = vmatmul.mubr.bf16.gmra.mrb[0].mxu0 %v819
  %v1323 = vpop.f32.mrb[0].mxu0
  %v1324 = vadd.f32 %v218, %v1323
  %v1325 = vpop.f32.mrb[0].mxu0
  %v1326 = vpop.f32.mrb[0].mxu0
  %v1327 = vadd.f32 %v218, %v1326
  %v1328 = vpop.f32.mrb[0].mxu0
  %1329 = vmatprep.mubr.bf16.mxu0 0
  %1330 = vmatmul.mubr.bf16.gmra.mrb[0].mxu0 %v822
  %v1331 = vpop.f32.mrb[0].mxu0
  %v1332 = vadd.f32 %v218, %v1331
  %v1333 = vpop.f32.mrb[0].mxu0
  %v1334 = vpop.f32.mrb[0].mxu0
  %v1335 = vadd.f32 %v218, %v1334
  %v1336 = vpop.f32.mrb[0].mxu0
  %1337 = vmatprep.mubr.bf16.mxu0 0
  %1338 = vmatmul.mubr.bf16.gmra.mrb[0].mxu0 %v825
  %v1339 = vpop.f32.mrb[0].mxu0
  %v1340 = vadd.f32 %v218, %v1339
  %v1341 = vpop.f32.mrb[0].mxu0
  %v1342 = vpop.f32.mrb[0].mxu0
  %v1343 = vadd.f32 %v218, %v1342
  %v1344 = vpop.f32.mrb[0].mxu0
  %1345 = vmatprep.mubr.bf16.mxu0 0
  %1346 = vmatmul.mubr.bf16.gmra.mrb[0].mxu0 %v828
  %v1347 = vpop.f32.mrb[0].mxu0
  %v1348 = vadd.f32 %v218, %v1347
  %v1349 = vpop.f32.mrb[0].mxu0
  %v1350 = vpop.f32.mrb[0].mxu0
  %v1351 = vadd.f32 %v218, %v1350
  %v1352 = vpop.f32.mrb[0].mxu0
  %1353 = vmatprep.mubr.bf16.mxu0 0
  %1354 = vmatmul.mubr.bf16.gmra.mrb[0].mxu0 %v831
  %v1355 = vpop.f32.mrb[0].mxu0
  %v1356 = vadd.f32 %v218, %v1355
  %v1357 = vpop.f32.mrb[0].mxu0
  %v1358 = vpop.f32.mrb[0].mxu0
  %v1359 = vadd.f32 %v218, %v1358
  %v1360 = vpop.f32.mrb[0].mxu0
  %1361 = vmatprep.mubr.bf16.mxu0 0
  %1362 = vmatmul.mubr.bf16.gmra.mrb[0].mxu0 %v834
  %v1363 = vpop.f32.mrb[0].mxu0
  %v1364 = vadd.f32 %v218, %v1363
  %v1365 = vpop.f32.mrb[0].mxu0
  %v1366 = vpop.f32.mrb[0].mxu0
  %v1367 = vadd.f32 %v218, %v1366
  %v1368 = vpop.f32.mrb[0].mxu0
  %1369 = vmatprep.mubr.bf16.mxu0 0
  %1370 = vmatmul.mubr.bf16.gmra.mrb[0].mxu0 %v837
  %v1371 = vpop.f32.mrb[0].mxu0
  %v1372 = vadd.f32 %v218, %v1371
  %v1373 = vpop.f32.mrb[0].mxu0
  %v1374 = vpop.f32.mrb[0].mxu0
  %v1375 = vadd.f32 %v218, %v1374
  %v1376 = vpop.f32.mrb[0].mxu0
  %1377 = vmatprep.mubr.bf16.mxu0 0
  %1378 = vmatmul.mubr.bf16.gmra.mrb[0].mxu0 %v840
  %v1379 = vpop.f32.mrb[0].mxu0
  %v1380 = vadd.f32 %v218, %v1379
  %v1381 = vpop.f32.mrb[0].mxu0
  %v1382 = vpop.f32.mrb[0].mxu0
  %v1383 = vadd.f32 %v218, %v1382
  %v1384 = vpop.f32.mrb[0].mxu0
  %1385 = vmatprep.mubr.bf16.mxu0 0
  %1386 = vmatmul.mubr.bf16.gmra.mrb[0].mxu0 %v843
  %v1387 = vpop.f32.mrb[0].mxu0
  %v1388 = vadd.f32 %v218, %v1387
  %v1389 = vpop.f32.mrb[0].mxu0
  %v1390 = vpop.f32.mrb[0].mxu0
  %v1391 = vadd.f32 %v218, %v1390
  %v1392 = vpop.f32.mrb[0].mxu0
  %1393 = vmatprep.mubr.bf16.mxu0 0
  %1394 = vmatmul.mubr.bf16.gmra.mrb[0].mxu0 %v846
  %v1395 = vpop.f32.mrb[0].mxu0
  %v1396 = vadd.f32 %v218, %v1395
  %v1397 = vpop.f32.mrb[0].mxu0
  %v1398 = vpop.f32.mrb[0].mxu0
  %v1399 = vadd.f32 %v218, %v1398
  %v1400 = vpop.f32.mrb[0].mxu0
  %1401 = vmatprep.mubr.bf16.mxu0 0
  %1402 = vmatmul.mubr.bf16.gmra.mrb[0].mxu0 %v849
  %v1403 = vpop.f32.mrb[0].mxu0
  %v1404 = vadd.f32 %v218, %v1403
  %v1405 = vpop.f32.mrb[0].mxu0
  %v1406 = vpop.f32.mrb[0].mxu0
  %v1407 = vadd.f32 %v218, %v1406
  %v1408 = vpop.f32.mrb[0].mxu0
  %1409 = vmatprep.mubr.bf16.mxu0 0
  %1410 = vmatmul.mubr.bf16.gmra.mrb[0].mxu0 %v852
  %v1411 = vpop.f32.mrb[0].mxu0
  %v1412 = vadd.f32 %v218, %v1411
  %v1413 = vpop.f32.mrb[0].mxu0
  %v1414 = vpop.f32.mrb[0].mxu0
  %v1415 = vadd.f32 %v218, %v1414
  %v1416 = vpop.f32.mrb[0].mxu0
  %1417 = vmatprep.mubr.bf16.mxu0 0
  %1418 = vmatmul.mubr.bf16.gmra.mrb[0].mxu0 %v855
  %v1419 = vpop.f32.mrb[0].mxu0
  %v1420 = vadd.f32 %v218, %v1419
  %v1421 = vpop.f32.mrb[0].mxu0
  %v1422 = vpop.f32.mrb[0].mxu0
  %v1423 = vadd.f32 %v218, %v1422
  %v1424 = vpop.f32.mrb[0].mxu0
  %1425 = vmatprep.mubr.bf16.mxu0 0
  %1426 = vmatmul.mubr.bf16.gmra.mrb[0].mxu0 %v858
  %v1427 = vpop.f32.mrb[0].mxu0
  %v1428 = vadd.f32 %v218, %v1427
  %v1429 = vpop.f32.mrb[0].mxu0
  %v1430 = vpop.f32.mrb[0].mxu0
  %v1431 = vadd.f32 %v218, %v1430
  %v1432 = vpop.f32.mrb[0].mxu0
  %1433 = vmatprep.mubr.bf16.mxu0 0
  %1434 = vmatmul.mubr.bf16.gmra.mrb[0].mxu0 %v861
  %v1435 = vpop.f32.mrb[0].mxu0
  %v1436 = vadd.f32 %v218, %v1435
  %v1437 = vpop.f32.mrb[0].mxu0
  %v1438 = vpop.f32.mrb[0].mxu0
  %v1439 = vadd.f32 %v218, %v1438
  %v1440 = vpop.f32.mrb[0].mxu0
  %1441 = vmatprep.mubr.bf16.mxu0 0
  %1442 = vmatmul.mubr.bf16.gmra.mrb[0].mxu0 %v864
  %v1443 = vpop.f32.mrb[0].mxu0
  %v1444 = vadd.f32 %v218, %v1443
  %v1445 = vpop.f32.mrb[0].mxu0
  %v1446 = vpop.f32.mrb[0].mxu0
  %v1447 = vadd.f32 %v218, %v1446
  %v1448 = vpop.f32.mrb[0].mxu0
  %1449 = vmatprep.mubr.bf16.mxu0 0
  %1450 = vmatmul.mubr.bf16.gmra.mrb[0].mxu0 %v867
  %v1451 = vpop.f32.mrb[0].mxu0
  %v1452 = vadd.f32 %v218, %v1451
  %v1453 = vpop.f32.mrb[0].mxu0
  %v1454 = vpop.f32.mrb[0].mxu0
  %v1455 = vadd.f32 %v218, %v1454
  %v1456 = vpop.f32.mrb[0].mxu0
  %1457 = vmatprep.mubr.bf16.mxu0 0
  %1458 = vmatmul.mubr.bf16.gmra.mrb[0].mxu0 %v870
  %v1459 = vpop.f32.mrb[0].mxu0
  %v1460 = vadd.f32 %v218, %v1459
  %v1461 = vpop.f32.mrb[0].mxu0
  %v1462 = vpop.f32.mrb[0].mxu0
  %v1463 = vadd.f32 %v218, %v1462
  %v1464 = vpop.f32.mrb[0].mxu0
  %1465 = vmatprep.mubr.bf16.mxu0 0
  %1466 = vmatmul.mubr.bf16.gmra.mrb[0].mxu0 %v873
  %v1467 = vpop.f32.mrb[0].mxu0
  %v1468 = vadd.f32 %v218, %v1467
  %v1469 = vpop.f32.mrb[0].mxu0
  %v1470 = vpop.f32.mrb[0].mxu0
  %v1471 = vadd.f32 %v218, %v1470
  %v1472 = vpop.f32.mrb[0].mxu0
  %1473 = vmatprep.mubr.bf16.mxu0 0
  %1474 = vmatmul.mubr.bf16.gmra.mrb[0].mxu0 %v876
  %v1475 = vpop.f32.mrb[0].mxu0
  %v1476 = vadd.f32 %v218, %v1475
  %v1477 = vpop.f32.mrb[0].mxu0
  %v1478 = vpop.f32.mrb[0].mxu0
  %v1479 = vadd.f32 %v218, %v1478
  %v1480 = vpop.f32.mrb[0].mxu0
  %1481 = vmatprep.mubr.bf16.mxu0 0
  %1482 = vmatmul.mubr.bf16.gmra.mrb[0].mxu0 %v879
  %v1483 = vpop.f32.mrb[0].mxu0
  %v1484 = vadd.f32 %v218, %v1483
  %v1485 = vpop.f32.mrb[0].mxu0
  %v1486 = vpop.f32.mrb[0].mxu0
  %v1487 = vadd.f32 %v218, %v1486
  %v1488 = vpop.f32.mrb[0].mxu0
  %1489 = vmatprep.mubr.bf16.mxu0 0
  %1490 = vmatmul.mubr.bf16.gmra.mrb[0].mxu0 %v882
  %v1491 = vpop.f32.mrb[0].mxu0
  %v1492 = vadd.f32 %v218, %v1491
  %v1493 = vpop.f32.mrb[0].mxu0
  %v1494 = vpop.f32.mrb[0].mxu0
  %v1495 = vadd.f32 %v218, %v1494
  %v1496 = vpop.f32.mrb[0].mxu0
  %1497 = vmatprep.mubr.bf16.mxu0 0
  %1498 = vmatmul.mubr.bf16.gmra.mrb[0].mxu0 %v885
  %v1499 = vpop.f32.mrb[0].mxu0
  %v1500 = vadd.f32 %v218, %v1499
  %v1501 = vpop.f32.mrb[0].mxu0
  %v1502 = vpop.f32.mrb[0].mxu0
  %v1503 = vadd.f32 %v218, %v1502
  %v1504 = vpop.f32.mrb[0].mxu0
  %1505 = vmatprep.mubr.bf16.mxu0 0
  %1506 = vmatmul.mubr.bf16.gmra.mrb[0].mxu0 %v888
  %v1507 = vpop.f32.mrb[0].mxu0
  %v1508 = vadd.f32 %v218, %v1507
  %v1509 = vpop.f32.mrb[0].mxu0
  %v1510 = vpop.f32.mrb[0].mxu0
  %v1511 = vadd.f32 %v218, %v1510
  %v1512 = vpop.f32.mrb[0].mxu0
  %1513 = vmatprep.mubr.bf16.mxu0 0
  %1514 = vmatmul.mubr.bf16.gmra.mrb[0].mxu0 %v891
  %v1515 = vpop.f32.mrb[0].mxu0
  %v1516 = vadd.f32 %v218, %v1515
  %v1517 = vpop.f32.mrb[0].mxu0
  %v1518 = vpop.f32.mrb[0].mxu0
  %v1519 = vadd.f32 %v218, %v1518
  %v1520 = vpop.f32.mrb[0].mxu0
  %1521 = vmatprep.mubr.bf16.mxu0 0
  %1522 = vmatmul.mubr.bf16.gmra.mrb[0].mxu0 %v894
  %v1523 = vpop.f32.mrb[0].mxu0
  %v1524 = vadd.f32 %v218, %v1523
  %v1525 = vpop.f32.mrb[0].mxu0
  %v1526 = vpop.f32.mrb[0].mxu0
  %v1527 = vadd.f32 %v218, %v1526
  %v1528 = vpop.f32.mrb[0].mxu0
  %1529 = vmatprep.mubr.bf16.mxu0 0
  %1530 = vmatmul.mubr.bf16.gmra.mrb[0].mxu0 %v897
  %v1531 = vpop.f32.mrb[0].mxu0
  %v1532 = vadd.f32 %v218, %v1531
  %v1533 = vpop.f32.mrb[0].mxu0
  %v1534 = vpop.f32.mrb[0].mxu0
  %v1535 = vadd.f32 %v218, %v1534
  %v1536 = vpop.f32.mrb[0].mxu0
  %1537 = vmatprep.mubr.bf16.mxu0 0
  %1538 = vmatmul.mubr.bf16.gmra.mrb[0].mxu0 %v900
  %v1539 = vpop.f32.mrb[0].mxu0
  %v1540 = vadd.f32 %v218, %v1539
  %v1541 = vpop.f32.mrb[0].mxu0
  %v1542 = vpop.f32.mrb[0].mxu0
  %v1543 = vadd.f32 %v218, %v1542
  %v1544 = vpop.f32.mrb[0].mxu0
  %1545 = vmatprep.mubr.bf16.mxu0 0
  %1546 = vmatmul.mubr.bf16.gmra.mrb[0].mxu0 %v903
  %v1547 = vpop.f32.mrb[0].mxu0
  %v1548 = vadd.f32 %v218, %v1547
  %v1549 = vpop.f32.mrb[0].mxu0
  %v1550 = vpop.f32.mrb[0].mxu0
  %v1551 = vadd.f32 %v218, %v1550
  %v1552 = vpop.f32.mrb[0].mxu0
  %1553 = vmatprep.mubr.bf16.mxu0 0
  %1554 = vmatmul.mubr.bf16.gmra.mrb[0].mxu0 %v906
  %v1555 = vpop.f32.mrb[0].mxu0
  %v1556 = vadd.f32 %v218, %v1555
  %v1557 = vpop.f32.mrb[0].mxu0
  %v1558 = vpop.f32.mrb[0].mxu0
  %v1559 = vadd.f32 %v218, %v1558
  %v1560 = vpop.f32.mrb[0].mxu0
  %1561 = vmatprep.mubr.bf16.mxu0 0
  %1562 = vmatmul.mubr.bf16.gmra.mrb[0].mxu0 %v909
  %v1563 = vpop.f32.mrb[0].mxu0
  %v1564 = vadd.f32 %v218, %v1563
  %v1565 = vpop.f32.mrb[0].mxu0
  %v1566 = vpop.f32.mrb[0].mxu0
  %v1567 = vadd.f32 %v218, %v1566
  %v1568 = vpop.f32.mrb[0].mxu0
  %1569 = vmatprep.mubr.bf16.mxu0 0
  %1570 = vmatmul.mubr.bf16.gmra.mrb[0].mxu0 %v912
  %v1571 = vpop.f32.mrb[0].mxu0
  %v1572 = vadd.f32 %v218, %v1571
  %v1573 = vpop.f32.mrb[0].mxu0
  %v1574 = vpop.f32.mrb[0].mxu0
  %v1575 = vadd.f32 %v218, %v1574
  %v1576 = vpop.f32.mrb[0].mxu0
  %1577 = vmatprep.mubr.bf16.mxu0 0
  %1578 = vmatmul.mubr.bf16.gmra.mrb[0].mxu0 %v915
  %v1579 = vpop.f32.mrb[0].mxu0
  %v1580 = vadd.f32 %v218, %v1579
  %v1581 = vpop.f32.mrb[0].mxu0
  %v1582 = vpop.f32.mrb[0].mxu0
  %v1583 = vadd.f32 %v218, %v1582
  %v1584 = vpop.f32.mrb[0].mxu0
  %1585 = vmatprep.mubr.bf16.mxu0 0
  %1586 = vmatmul.mubr.bf16.gmra.mrb[0].mxu0 %v918
  %v1587 = vpop.f32.mrb[0].mxu0
  %v1588 = vadd.f32 %v218, %v1587
  %v1589 = vpop.f32.mrb[0].mxu0
  %v1590 = vpop.f32.mrb[0].mxu0
  %v1591 = vadd.f32 %v218, %v1590
  %v1592 = vpop.f32.mrb[0].mxu0
  %1593 = vmatprep.mubr.bf16.mxu0 0
  %1594 = vmatmul.mubr.bf16.gmra.mrb[0].mxu0 %v921
  %v1595 = vpop.f32.mrb[0].mxu0
  %v1596 = vadd.f32 %v218, %v1595
  %v1597 = vpop.f32.mrb[0].mxu0
  %v1598 = vpop.f32.mrb[0].mxu0
  %v1599 = vadd.f32 %v218, %v1598
  %v1600 = vpop.f32.mrb[0].mxu0
  %1601 = vmatprep.mubr.bf16.mxu0 0
  %1602 = vmatmul.mubr.bf16.gmra.mrb[0].mxu0 %v924
  %v1603 = vpop.f32.mrb[0].mxu0
  %v1604 = vadd.f32 %v218, %v1603
  %v1605 = vpop.f32.mrb[0].mxu0
  %v1606 = vpop.f32.mrb[0].mxu0
  %v1607 = vadd.f32 %v218, %v1606
  %v1608 = vpop.f32.mrb[0].mxu0
  %1609 = vmatprep.mubr.bf16.mxu0 0
  %1610 = vmatmul.mubr.bf16.gmra.mrb[0].mxu0 %v927
  %v1611 = vpop.f32.mrb[0].mxu0
  %v1612 = vadd.f32 %v218, %v1611
  %v1613 = vpop.f32.mrb[0].mxu0
  %v1614 = vpop.f32.mrb[0].mxu0
  %v1615 = vadd.f32 %v218, %v1614
  %v1616 = vpop.f32.mrb[0].mxu0
  %1617 = vmatprep.mubr.bf16.mxu0 0
  %1618 = vmatmul.mubr.bf16.gmra.mrb[0].mxu0 %v930
  %v1619 = vpop.f32.mrb[0].mxu0
  %v1620 = vadd.f32 %v218, %v1619
  %v1621 = vpop.f32.mrb[0].mxu0
  %v1622 = vpop.f32.mrb[0].mxu0
  %v1623 = vadd.f32 %v218, %v1622
  %v1624 = vpop.f32.mrb[0].mxu0
  %1625 = vmatprep.mubr.bf16.mxu0 0
  %1626 = vmatmul.mubr.bf16.gmra.mrb[0].mxu0 %v933
  %v1627 = vpop.f32.mrb[0].mxu0
  %v1628 = vadd.f32 %v218, %v1627
  %v1629 = vpop.f32.mrb[0].mxu0
  %v1630 = vpop.f32.mrb[0].mxu0
  %v1631 = vadd.f32 %v218, %v1630
  %v1632 = vpop.f32.mrb[0].mxu0
  %1633 = vmatprep.mubr.bf16.mxu0 0
  %1634 = vmatmul.mubr.bf16.gmra.mrb[0].mxu0 %v936
  %v1635 = vpop.f32.mrb[0].mxu0
  %v1636 = vadd.f32 %v218, %v1635
  %v1637 = vpop.f32.mrb[0].mxu0
  %v1638 = vpop.f32.mrb[0].mxu0
  %v1639 = vadd.f32 %v218, %v1638
  %v1640 = vpop.f32.mrb[0].mxu0
  %1641 = vmatprep.mubr.bf16.mxu0 0
  %1642 = vmatmul.mubr.bf16.gmra.mrb[0].mxu0 %v939
  %v1643 = vpop.f32.mrb[0].mxu0
  %v1644 = vadd.f32 %v218, %v1643
  %v1645 = vpop.f32.mrb[0].mxu0
  %v1646 = vpop.f32.mrb[0].mxu0
  %v1647 = vadd.f32 %v218, %v1646
  %v1648 = vpop.f32.mrb[0].mxu0
  %1649 = vmatprep.mubr.bf16.mxu0 0
  %1650 = vmatmul.mubr.bf16.gmra.mrb[0].mxu0 %v942
  %v1651 = vpop.f32.mrb[0].mxu0
  %v1652 = vadd.f32 %v218, %v1651
  %v1653 = vpop.f32.mrb[0].mxu0
  %v1654 = vpop.f32.mrb[0].mxu0
  %v1655 = vadd.f32 %v218, %v1654
  %v1656 = vpop.f32.mrb[0].mxu0
  %1657 = vmatprep.mubr.bf16.mxu0 0
  %1658 = vmatmul.mubr.bf16.gmra.mrb[0].mxu0 %v945
  %v1659 = vpop.f32.mrb[0].mxu0
  %v1660 = vadd.f32 %v218, %v1659
  %v1661 = vpop.f32.mrb[0].mxu0
  %v1662 = vpop.f32.mrb[0].mxu0
  %v1663 = vadd.f32 %v218, %v1662
  %v1664 = vpop.f32.mrb[0].mxu0
  %1665 = vmatprep.mubr.bf16.mxu0 0
  %1666 = vmatmul.mubr.bf16.gmra.mrb[0].mxu0 %v948
  %v1667 = vpop.f32.mrb[0].mxu0
  %v1668 = vadd.f32 %v218, %v1667
  %v1669 = vpop.f32.mrb[0].mxu0
  %v1670 = vpop.f32.mrb[0].mxu0
  %v1671 = vadd.f32 %v218, %v1670
  %v1672 = vpop.f32.mrb[0].mxu0
  %1673 = vmatprep.mubr.bf16.mxu0 0
  %1674 = vmatmul.mubr.bf16.gmra.mrb[0].mxu0 %v951
  %v1675 = vpop.f32.mrb[0].mxu0
  %v1676 = vadd.f32 %v218, %v1675
  %v1677 = vpop.f32.mrb[0].mxu0
  %v1678 = vpop.f32.mrb[0].mxu0
  %v1679 = vadd.f32 %v218, %v1678
  %v1680 = vpop.f32.mrb[0].mxu0
  %1681 = vmatprep.mubr.bf16.mxu0 0
  %1682 = vmatmul.mubr.bf16.gmra.mrb[0].mxu0 %v954
  %v1683 = vpop.f32.mrb[0].mxu0
  %v1684 = vadd.f32 %v218, %v1683
  %v1685 = vpop.f32.mrb[0].mxu0
  %v1686 = vpop.f32.mrb[0].mxu0
  %v1687 = vadd.f32 %v218, %v1686
  %v1688 = vpop.f32.mrb[0].mxu0
  %1689 = vmatprep.mubr.bf16.mxu0 0
  %1690 = vmatmul.mubr.bf16.gmra.mrb[0].mxu0 %v957
  %v1691 = vpop.f32.mrb[0].mxu0
  %v1692 = vadd.f32 %v218, %v1691
  %v1693 = vpop.f32.mrb[0].mxu0
  %v1694 = vpop.f32.mrb[0].mxu0
  %v1695 = vadd.f32 %v218, %v1694
  %v1696 = vpop.f32.mrb[0].mxu0
  %1697 = vmatprep.mubr.bf16.mxu0 0
  %1698 = vmatmul.mubr.bf16.gmra.mrb[0].mxu0 %v960
  %v1699 = vpop.f32.mrb[0].mxu0
  %v1700 = vadd.f32 %v218, %v1699
  %v1701 = vpop.f32.mrb[0].mxu0
  %v1702 = vpop.f32.mrb[0].mxu0
  %v1703 = vadd.f32 %v218, %v1702
  %v1704 = vpop.f32.mrb[0].mxu0
  %1705 = vmatprep.mubr.bf16.mxu0 0
  %1706 = vmatmul.mubr.bf16.gmra.mrb[0].mxu0 %v963
  %v1707 = vpop.f32.mrb[0].mxu0
  %v1708 = vadd.f32 %v218, %v1707
  %v1709 = vpop.f32.mrb[0].mxu0
  %v1710 = vpop.f32.mrb[0].mxu0
  %v1711 = vadd.f32 %v218, %v1710
  %v1712 = vpop.f32.mrb[0].mxu0
  %1713 = vmatprep.mubr.bf16.mxu0 0
  %1714 = vmatmul.mubr.bf16.gmra.mrb[0].mxu0 %v966
  %v1715 = vpop.f32.mrb[0].mxu0
  %v1716 = vadd.f32 %v218, %v1715
  %v1717 = vpop.f32.mrb[0].mxu0
  %v1718 = vpop.f32.mrb[0].mxu0
  %v1719 = vadd.f32 %v218, %v1718
  %v1720 = vpop.f32.mrb[0].mxu0
  %1721 = vmatprep.mubr.bf16.mxu0 0
  %1722 = vmatmul.mubr.bf16.gmra.mrb[0].mxu0 %v969
  %v1723 = vpop.f32.mrb[0].mxu0
  %v1724 = vadd.f32 %v218, %v1723
  %v1725 = vpop.f32.mrb[0].mxu0
  %v1726 = vpop.f32.mrb[0].mxu0
  %v1727 = vadd.f32 %v218, %v1726
  %v1728 = vpop.f32.mrb[0].mxu0
  %1729 = vmatprep.mubr.bf16.mxu0 0
  %1730 = vmatmul.mubr.bf16.gmra.mrb[0].mxu0 %v972
  %v1731 = vpop.f32.mrb[0].mxu0
  %v1732 = vadd.f32 %v218, %v1731
  %v1733 = vpop.f32.mrb[0].mxu0
  %v1734 = vpop.f32.mrb[0].mxu0
  %v1735 = vadd.f32 %v218, %v1734
  %v1736 = vpop.f32.mrb[0].mxu0
  %1737 = vmatprep.mubr.bf16.mxu0 0
  %1738 = vmatmul.mubr.bf16.gmra.mrb[0].mxu0 %v975
  %v1739 = vpop.f32.mrb[0].mxu0
  %v1740 = vadd.f32 %v218, %v1739
  %v1741 = vpop.f32.mrb[0].mxu0
  %v1742 = vpop.f32.mrb[0].mxu0
  %v1743 = vadd.f32 %v218, %v1742
  %v1744 = vpop.f32.mrb[0].mxu0
  %1745 = vmatprep.mubr.bf16.mxu0 0
  %1746 = vmatmul.mubr.bf16.gmra.mrb[0].mxu0 %v978
  %v1747 = vpop.f32.mrb[0].mxu0
  %v1748 = vadd.f32 %v218, %v1747
  %v1749 = vpop.f32.mrb[0].mxu0
  %v1750 = vpop.f32.mrb[0].mxu0
  %v1751 = vadd.f32 %v218, %v1750
  %v1752 = vpop.f32.mrb[0].mxu0
  %1753 = vmatprep.mubr.bf16.mxu0 0
  %1754 = vmatmul.mubr.bf16.gmra.mrb[0].mxu0 %v981
  %v1755 = vpop.f32.mrb[0].mxu0
  %v1756 = vadd.f32 %v218, %v1755
  %v1757 = vpop.f32.mrb[0].mxu0
  %v1758 = vpop.f32.mrb[0].mxu0
  %v1759 = vadd.f32 %v218, %v1758
  %v1760 = vpop.f32.mrb[0].mxu0
  %1761 = vmatprep.mubr.bf16.mxu0 0
  %1762 = vmatmul.mubr.bf16.gmra.mrb[0].mxu0 %v984
  %v1763 = vpop.f32.mrb[0].mxu0
  %v1764 = vadd.f32 %v218, %v1763
  %v1765 = vpop.f32.mrb[0].mxu0
  %v1766 = vpop.f32.mrb[0].mxu0
  %v1767 = vadd.f32 %v218, %v1766
  %v1768 = vpop.f32.mrb[0].mxu0
  %1769 = vmatprep.mubr.bf16.mxu0 0
  %1770 = vmatmul.mubr.bf16.gmra.mrb[0].mxu0 %v987
  %v1771 = vpop.f32.mrb[0].mxu0
  %v1772 = vadd.f32 %v218, %v1771
  %v1773 = vpop.f32.mrb[0].mxu0
  %v1774 = vpop.f32.mrb[0].mxu0
  %v1775 = vadd.f32 %v218, %v1774
  %v1776 = vpop.f32.mrb[0].mxu0
  %1777 = vmatprep.mubr.bf16.mxu0 0
  %1778 = vmatmul.mubr.bf16.gmra.mrb[0].mxu0 %v990
  %v1779 = vpop.f32.mrb[0].mxu0
  %v1780 = vadd.f32 %v218, %v1779
  %v1781 = vpop.f32.mrb[0].mxu0
  %v1782 = vpop.f32.mrb[0].mxu0
  %v1783 = vadd.f32 %v218, %v1782
  %v1784 = vpop.f32.mrb[0].mxu0
  %1785 = vmatprep.mubr.bf16.mxu0 0
  %1786 = vmatmul.mubr.bf16.gmra.mrb[0].mxu0 %v993
  %v1787 = vpop.f32.mrb[0].mxu0
  %v1788 = vadd.f32 %v218, %v1787
  %v1789 = vpop.f32.mrb[0].mxu0
  %v1790 = vpop.f32.mrb[0].mxu0
  %v1791 = vadd.f32 %v218, %v1790
  %v1792 = vpop.f32.mrb[0].mxu0
  %1793 = vmatprep.mubr.bf16.mxu0 0
  %1794 = vmatmul.mubr.bf16.gmra.mrb[0].mxu0 %v996
  %v1795 = vpop.f32.mrb[0].mxu0
  %v1796 = vadd.f32 %v218, %v1795
  %v1797 = vpop.f32.mrb[0].mxu0
  %v1798 = vpop.f32.mrb[0].mxu0
  %v1799 = vadd.f32 %v218, %v1798
  %v1800 = vpop.f32.mrb[0].mxu0
  %1801 = vmatprep.mubr.bf16.mxu0 0
  %1802 = vmatmul.mubr.bf16.gmra.mrb[0].mxu0 %v999
  %v1803 = vpop.f32.mrb[0].mxu0
  %v1804 = vadd.f32 %v218, %v1803
  %v1805 = vpop.f32.mrb[0].mxu0
  %v1806 = vpop.f32.mrb[0].mxu0
  %v1807 = vadd.f32 %v218, %v1806
  %v1808 = vpop.f32.mrb[0].mxu0
  %1809 = vmatprep.mubr.bf16.mxu0 0
  %1810 = vmatmul.mubr.bf16.gmra.mrb[0].mxu0 %v1002
  %v1811 = vpop.f32.mrb[0].mxu0
  %v1812 = vadd.f32 %v218, %v1811
  %v1813 = vpop.f32.mrb[0].mxu0
  %v1814 = vpop.f32.mrb[0].mxu0
  %v1815 = vadd.f32 %v218, %v1814
  %v1816 = vpop.f32.mrb[0].mxu0
  %1817 = vmatprep.mubr.bf16.mxu0 0
  %1818 = vmatmul.mubr.bf16.gmra.mrb[0].mxu0 %v1005
  %v1819 = vpop.f32.mrb[0].mxu0
  %v1820 = vadd.f32 %v218, %v1819
  %v1821 = vpop.f32.mrb[0].mxu0
  %v1822 = vpop.f32.mrb[0].mxu0
  %v1823 = vadd.f32 %v218, %v1822
  %v1824 = vpop.f32.mrb[0].mxu0
  %1825 = vmatprep.mubr.bf16.mxu0 0
  %1826 = vmatmul.mubr.bf16.gmra.mrb[0].mxu0 %v1008
  %v1827 = vpop.f32.mrb[0].mxu0
  %v1828 = vadd.f32 %v218, %v1827
  %v1829 = vpop.f32.mrb[0].mxu0
  %v1830 = vpop.f32.mrb[0].mxu0
  %v1831 = vadd.f32 %v218, %v1830
  %v1832 = vpop.f32.mrb[0].mxu0
  %1833 = vdwg.mxu0
  %v1834 = vmax.f32 %v1052, 0.0
  %v1835 = vmax.f32 %v1055, 0.0
  %v1836 = vmax.f32 %v1060, 0.0
  %v1837 = vmax.f32 %v1063, 0.0
  %v1838 = vmax.f32 %v1068, 0.0
  %v1839 = vmax.f32 %v1071, 0.0
  %v1840 = vmax.f32 %v1076, 0.0
  %v1841 = vmax.f32 %v1079, 0.0
  %v1842 = vmax.f32 %v1084, 0.0
  %v1843 = vmax.f32 %v1087, 0.0
  %v1844 = vmax.f32 %v1092, 0.0
  %v1845 = vmax.f32 %v1095, 0.0
  %v1846 = vmax.f32 %v1100, 0.0
  %v1847 = vmax.f32 %v1103, 0.0
  %v1848 = vmax.f32 %v1108, 0.0
  %v1849 = vmax.f32 %v1111, 0.0
  %v1850 = vmax.f32 %v1116, 0.0
  %v1851 = vmax.f32 %v1119, 0.0
  %v1852 = vmax.f32 %v1124, 0.0
  %v1853 = vmax.f32 %v1127, 0.0
  %v1854 = vmax.f32 %v1132, 0.0
  %v1855 = vmax.f32 %v1135, 0.0
  %v1856 = vmax.f32 %v1140, 0.0
  %v1857 = vmax.f32 %v1143, 0.0
  %v1858 = vmax.f32 %v1148, 0.0
  %v1859 = vmax.f32 %v1151, 0.0
  %v1860 = vmax.f32 %v1156, 0.0
  %v1861 = vmax.f32 %v1159, 0.0
  %v1862 = vmax.f32 %v1164, 0.0
  %v1863 = vmax.f32 %v1167, 0.0
  %v1864 = vmax.f32 %v1172, 0.0
  %v1865 = vmax.f32 %v1175, 0.0
  %v1866 = vmax.f32 %v1180, 0.0
  %v1867 = vmax.f32 %v1183, 0.0
  %v1868 = vmax.f32 %v1188, 0.0
  %v1869 = vmax.f32 %v1191, 0.0
  %v1870 = vmax.f32 %v1196, 0.0
  %v1871 = vmax.f32 %v1199, 0.0
  %v1872 = vmax.f32 %v1204, 0.0
  %v1873 = vmax.f32 %v1207, 0.0
  %v1874 = vmax.f32 %v1212, 0.0
  %v1875 = vmax.f32 %v1215, 0.0
  %v1876 = vmax.f32 %v1220, 0.0
  %v1877 = vmax.f32 %v1223, 0.0
  %v1878 = vmax.f32 %v1228, 0.0
  %v1879 = vmax.f32 %v1231, 0.0
  %v1880 = vmax.f32 %v1236, 0.0
  %v1881 = vmax.f32 %v1239, 0.0
  %v1882 = vmax.f32 %v1244, 0.0
  %v1883 = vmax.f32 %v1247, 0.0
  %v1884 = vmax.f32 %v1252, 0.0
  %v1885 = vmax.f32 %v1255, 0.0
  %v1886 = vmax.f32 %v1260, 0.0
  %v1887 = vmax.f32 %v1263, 0.0
  %v1888 = vmax.f32 %v1268, 0.0
  %v1889 = vmax.f32 %v1271, 0.0
  %v1890 = vmax.f32 %v1276, 0.0
  %v1891 = vmax.f32 %v1279, 0.0
  %v1892 = vmax.f32 %v1284, 0.0
  %v1893 = vmax.f32 %v1287, 0.0
  %v1894 = vmax.f32 %v1292, 0.0
  %v1895 = vmax.f32 %v1295, 0.0
  %v1896 = vmax.f32 %v1300, 0.0
  %v1897 = vmax.f32 %v1303, 0.0
  %v1898 = vmax.f32 %v1308, 0.0
  %v1899 = vmax.f32 %v1311, 0.0
  %v1900 = vmax.f32 %v1316, 0.0
  %v1901 = vmax.f32 %v1319, 0.0
  %v1902 = vmax.f32 %v1324, 0.0
  %v1903 = vmax.f32 %v1327, 0.0
  %v1904 = vmax.f32 %v1332, 0.0
  %v1905 = vmax.f32 %v1335, 0.0
  %v1906 = vmax.f32 %v1340, 0.0
  %v1907 = vmax.f32 %v1343, 0.0
  %v1908 = vmax.f32 %v1348, 0.0
  %v1909 = vmax.f32 %v1351, 0.0
  %v1910 = vmax.f32 %v1356, 0.0
  %v1911 = vmax.f32 %v1359, 0.0
  %v1912 = vmax.f32 %v1364, 0.0
  %v1913 = vmax.f32 %v1367, 0.0
  %v1914 = vmax.f32 %v1372, 0.0
  %v1915 = vmax.f32 %v1375, 0.0
  %v1916 = vmax.f32 %v1380, 0.0
  %v1917 = vmax.f32 %v1383, 0.0
  %v1918 = vmax.f32 %v1388, 0.0
  %v1919 = vmax.f32 %v1391, 0.0
  %v1920 = vmax.f32 %v1396, 0.0
  %v1921 = vmax.f32 %v1399, 0.0
  %v1922 = vmax.f32 %v1404, 0.0
  %v1923 = vmax.f32 %v1407, 0.0
  %v1924 = vmax.f32 %v1412, 0.0
  %v1925 = vmax.f32 %v1415, 0.0
  %v1926 = vmax.f32 %v1420, 0.0
  %v1927 = vmax.f32 %v1423, 0.0
  %v1928 = vmax.f32 %v1428, 0.0
  %v1929 = vmax.f32 %v1431, 0.0
  %v1930 = vmax.f32 %v1436, 0.0
  %v1931 = vmax.f32 %v1439, 0.0
  %v1932 = vmax.f32 %v1444, 0.0
  %v1933 = vmax.f32 %v1447, 0.0
  %v1934 = vmax.f32 %v1452, 0.0
  %v1935 = vmax.f32 %v1455, 0.0
  %v1936 = vmax.f32 %v1460, 0.0
  %v1937 = vmax.f32 %v1463, 0.0
  %v1938 = vmax.f32 %v1468, 0.0
  %v1939 = vmax.f32 %v1471, 0.0
  %v1940 = vmax.f32 %v1476, 0.0
  %v1941 = vmax.f32 %v1479, 0.0
  %v1942 = vmax.f32 %v1484, 0.0
  %v1943 = vmax.f32 %v1487, 0.0
  %v1944 = vmax.f32 %v1492, 0.0
  %v1945 = vmax.f32 %v1495, 0.0
  %v1946 = vmax.f32 %v1500, 0.0
  %v1947 = vmax.f32 %v1503, 0.0
  %v1948 = vmax.f32 %v1508, 0.0
  %v1949 = vmax.f32 %v1511, 0.0
  %v1950 = vmax.f32 %v1516, 0.0
  %v1951 = vmax.f32 %v1519, 0.0
  %v1952 = vmax.f32 %v1524, 0.0
  %v1953 = vmax.f32 %v1527, 0.0
  %v1954 = vmax.f32 %v1532, 0.0
  %v1955 = vmax.f32 %v1535, 0.0
  %v1956 = vmax.f32 %v1540, 0.0
  %v1957 = vmax.f32 %v1543, 0.0
  %v1958 = vmax.f32 %v1548, 0.0
  %v1959 = vmax.f32 %v1551, 0.0
  %v1960 = vmax.f32 %v1556, 0.0
  %v1961 = vmax.f32 %v1559, 0.0
  %v1962 = vmax.f32 %v1564, 0.0
  %v1963 = vmax.f32 %v1567, 0.0
  %v1964 = vmax.f32 %v1572, 0.0
  %v1965 = vmax.f32 %v1575, 0.0
  %v1966 = vmax.f32 %v1580, 0.0
  %v1967 = vmax.f32 %v1583, 0.0
  %v1968 = vmax.f32 %v1588, 0.0
  %v1969 = vmax.f32 %v1591, 0.0
  %v1970 = vmax.f32 %v1596, 0.0
  %v1971 = vmax.f32 %v1599, 0.0
  %v1972 = vmax.f32 %v1604, 0.0
  %v1973 = vmax.f32 %v1607, 0.0
  %v1974 = vmax.f32 %v1612, 0.0
  %v1975 = vmax.f32 %v1615, 0.0
  %v1976 = vmax.f32 %v1620, 0.0
  %v1977 = vmax.f32 %v1623, 0.0
  %v1978 = vmax.f32 %v1628, 0.0
  %v1979 = vmax.f32 %v1631, 0.0
  %v1980 = vmax.f32 %v1636, 0.0
  %v1981 = vmax.f32 %v1639, 0.0
  %v1982 = vmax.f32 %v1644, 0.0
  %v1983 = vmax.f32 %v1647, 0.0
  %v1984 = vmax.f32 %v1652, 0.0
  %v1985 = vmax.f32 %v1655, 0.0
  %v1986 = vmax.f32 %v1660, 0.0
  %v1987 = vmax.f32 %v1663, 0.0
  %v1988 = vmax.f32 %v1668, 0.0
  %v1989 = vmax.f32 %v1671, 0.0
  %v1990 = vmax.f32 %v1676, 0.0
  %v1991 = vmax.f32 %v1679, 0.0
  %v1992 = vmax.f32 %v1684, 0.0
  %v1993 = vmax.f32 %v1687, 0.0
  %v1994 = vmax.f32 %v1692, 0.0
  %v1995 = vmax.f32 %v1695, 0.0
  %v1996 = vmax.f32 %v1700, 0.0
  %v1997 = vmax.f32 %v1703, 0.0
  %v1998 = vmax.f32 %v1708, 0.0
  %v1999 = vmax.f32 %v1711, 0.0
  %v2000 = vmax.f32 %v1716, 0.0
  %v2001 = vmax.f32 %v1719, 0.0
  %v2002 = vmax.f32 %v1724, 0.0
  %v2003 = vmax.f32 %v1727, 0.0
  %v2004 = vmax.f32 %v1732, 0.0
  %v2005 = vmax.f32 %v1735, 0.0
  %v2006 = vmax.f32 %v1740, 0.0
  %v2007 = vmax.f32 %v1743, 0.0
  %v2008 = vmax.f32 %v1748, 0.0
  %v2009 = vmax.f32 %v1751, 0.0
  %v2010 = vmax.f32 %v1756, 0.0
  %v2011 = vmax.f32 %v1759, 0.0
  %v2012 = vmax.f32 %v1764, 0.0
  %v2013 = vmax.f32 %v1767, 0.0
  %v2014 = vmax.f32 %v1772, 0.0
  %v2015 = vmax.f32 %v1775, 0.0
  %v2016 = vmax.f32 %v1780, 0.0
  %v2017 = vmax.f32 %v1783, 0.0
  %v2018 = vmax.f32 %v1788, 0.0
  %v2019 = vmax.f32 %v1791, 0.0
  %v2020 = vmax.f32 %v1796, 0.0
  %v2021 = vmax.f32 %v1799, 0.0
  %v2022 = vmax.f32 %v1804, 0.0
  %v2023 = vmax.f32 %v1807, 0.0
  %v2024 = vmax.f32 %v1812, 0.0
  %v2025 = vmax.f32 %v1815, 0.0
  %v2026 = vmax.f32 %v1820, 0.0
  %v2027 = vmax.f32 %v1823, 0.0
  %v2028 = vmax.f32 %v1828, 0.0
  %v2029 = vmax.f32 %v1831, 0.0
  %v2030 = vmax.f32 %v1834, %v1883
  %v2031 = vmax.f32 %v1835, %v1884
  %v2032 = vmax.f32 %v1836, %v1885
  %v2033 = vmax.f32 %v1837, %v1886
  %v2034 = vmax.f32 %v1838, %v1887
  %v2035 = vmax.f32 %v1839, %v1888
  %v2036 = vmax.f32 %v1840, %v1889
  %v2037 = vmax.f32 %v1841, %v1890
  %v2038 = vmax.f32 %v1842, %v1891
  %v2039 = vmax.f32 %v1843, %v1892
  %v2040 = vmax.f32 %v1844, %v1893
  %v2041 = vmax.f32 %v1845, %v1894
  %v2042 = vmax.f32 %v1846, %v1895
  %v2043 = vmax.f32 %v1847, %v1896
  %v2044 = vmax.f32 %v1848, %v1897
  %v2045 = vmax.f32 %v1849, %v1898
  %v2046 = vmax.f32 %v1850, %v1899
  %v2047 = vmax.f32 %v1851, %v1900
  %v2048 = vmax.f32 %v1852, %v1901
  %v2049 = vmax.f32 %v1853, %v1902
  %v2050 = vmax.f32 %v1854, %v1903
  %v2051 = vmax.f32 %v1855, %v1904
  %v2052 = vmax.f32 %v1856, %v1905
  %v2053 = vmax.f32 %v1857, %v1906
  %v2054 = vmax.f32 %v1858, %v1907
  %v2055 = vmax.f32 %v1859, %v1908
  %v2056 = vmax.f32 %v1860, %v1909
  %v2057 = vmax.f32 %v1861, %v1910
  %v2058 = vmax.f32 %v1862, %v1911
  %v2059 = vmax.f32 %v1863, %v1912
  %v2060 = vmax.f32 %v1864, %v1913
  %v2061 = vmax.f32 %v1865, %v1914
  %v2062 = vmax.f32 %v1866, %v1915
  %v2063 = vmax.f32 %v1867, %v1916
  %v2064 = vmax.f32 %v1868, %v1917
  %v2065 = vmax.f32 %v1869, %v1918
  %v2066 = vmax.f32 %v1870, %v1919
  %v2067 = vmax.f32 %v1871, %v1920
  %v2068 = vmax.f32 %v1872, %v1921
  %v2069 = vmax.f32 %v1873, %v1922
  %v2070 = vmax.f32 %v1874, %v1923
  %v2071 = vmax.f32 %v1875, %v1924
  %v2072 = vmax.f32 %v1876, %v1925
  %v2073 = vmax.f32 %v1877, %v1926
  %v2074 = vmax.f32 %v1878, %v1927
  %v2075 = vmax.f32 %v1879, %v1928
  %v2076 = vmax.f32 %v1880, %v1929
  %v2077 = vmax.f32 %v1881, %v1930
  %v2078 = vmax.f32 %v1882, %v1931
  %v2079 = vmax.f32 %v1932, %v1981
  %v2080 = vmax.f32 %v1933, %v1982
  %v2081 = vmax.f32 %v1934, %v1983
  %v2082 = vmax.f32 %v1935, %v1984
  %v2083 = vmax.f32 %v1936, %v1985
  %v2084 = vmax.f32 %v1937, %v1986
  %v2085 = vmax.f32 %v1938, %v1987
  %v2086 = vmax.f32 %v1939, %v1988
  %v2087 = vmax.f32 %v1940, %v1989
  %v2088 = vmax.f32 %v1941, %v1990
  %v2089 = vmax.f32 %v1942, %v1991
  %v2090 = vmax.f32 %v1943, %v1992
  %v2091 = vmax.f32 %v1944, %v1993
  %v2092 = vmax.f32 %v1945, %v1994
  %v2093 = vmax.f32 %v1946, %v1995
  %v2094 = vmax.f32 %v1947, %v1996
  %v2095 = vmax.f32 %v1948, %v1997
  %v2096 = vmax.f32 %v1949, %v1998
  %v2097 = vmax.f32 %v1950, %v1999
  %v2098 = vmax.f32 %v1951, %v2000
  %v2099 = vmax.f32 %v1952, %v2001
  %v2100 = vmax.f32 %v1953, %v2002
  %v2101 = vmax.f32 %v1954, %v2003
  %v2102 = vmax.f32 %v1955, %v2004
  %v2103 = vmax.f32 %v1956, %v2005
  %v2104 = vmax.f32 %v1957, %v2006
  %v2105 = vmax.f32 %v1958, %v2007
  %v2106 = vmax.f32 %v1959, %v2008
  %v2107 = vmax.f32 %v1960, %v2009
  %v2108 = vmax.f32 %v1961, %v2010
  %v2109 = vmax.f32 %v1962, %v2011
  %v2110 = vmax.f32 %v1963, %v2012
  %v2111 = vmax.f32 %v1964, %v2013
  %v2112 = vmax.f32 %v1965, %v2014
  %v2113 = vmax.f32 %v1966, %v2015
  %v2114 = vmax.f32 %v1967, %v2016
  %v2115 = vmax.f32 %v1968, %v2017
  %v2116 = vmax.f32 %v1969, %v2018
  %v2117 = vmax.f32 %v1970, %v2019
  %v2118 = vmax.f32 %v1971, %v2020
  %v2119 = vmax.f32 %v1972, %v2021
  %v2120 = vmax.f32 %v1973, %v2022
  %v2121 = vmax.f32 %v1974, %v2023
  %v2122 = vmax.f32 %v1975, %v2024
  %v2123 = vmax.f32 %v1976, %v2025
  %v2124 = vmax.f32 %v1977, %v2026
  %v2125 = vmax.f32 %v1978, %v2027
  %v2126 = vmax.f32 %v1979, %v2028
  %v2127 = vmax.f32 %v1980, %v2029
  %v2128 = vmax.f32 %v2030, %v2079
  %v2129 = vmax.f32 %v2031, %v2080
  %v2130 = vmax.f32 %v2032, %v2081
  %v2131 = vmax.f32 %v2033, %v2082
  %v2132 = vmax.f32 %v2034, %v2083
  %v2133 = vmax.f32 %v2035, %v2084
  %v2134 = vmax.f32 %v2036, %v2085
  %v2135 = vmax.f32 %v2037, %v2086
  %v2136 = vmax.f32 %v2038, %v2087
  %v2137 = vmax.f32 %v2039, %v2088
  %v2138 = vmax.f32 %v2040, %v2089
  %v2139 = vmax.f32 %v2041, %v2090
  %v2140 = vmax.f32 %v2042, %v2091
  %v2141 = vmax.f32 %v2043, %v2092
  %v2142 = vmax.f32 %v2044, %v2093
  %v2143 = vmax.f32 %v2045, %v2094
  %v2144 = vmax.f32 %v2046, %v2095
  %v2145 = vmax.f32 %v2047, %v2096
  %v2146 = vmax.f32 %v2048, %v2097
  %v2147 = vmax.f32 %v2049, %v2098
  %v2148 = vmax.f32 %v2050, %v2099
  %v2149 = vmax.f32 %v2051, %v2100
  %v2150 = vmax.f32 %v2052, %v2101
  %v2151 = vmax.f32 %v2053, %v2102
  %v2152 = vmax.f32 %v2054, %v2103
  %v2153 = vmax.f32 %v2055, %v2104
  %v2154 = vmax.f32 %v2056, %v2105
  %v2155 = vmax.f32 %v2057, %v2106
  %v2156 = vmax.f32 %v2058, %v2107
  %v2157 = vmax.f32 %v2059, %v2108
  %v2158 = vmax.f32 %v2060, %v2109
  %v2159 = vmax.f32 %v2061, %v2110
  %v2160 = vmax.f32 %v2062, %v2111
  %v2161 = vmax.f32 %v2063, %v2112
  %v2162 = vmax.f32 %v2064, %v2113
  %v2163 = vmax.f32 %v2065, %v2114
  %v2164 = vmax.f32 %v2066, %v2115
  %v2165 = vmax.f32 %v2067, %v2116
  %v2166 = vmax.f32 %v2068, %v2117
  %v2167 = vmax.f32 %v2069, %v2118
  %v2168 = vmax.f32 %v2070, %v2119
  %v2169 = vmax.f32 %v2071, %v2120
  %v2170 = vmax.f32 %v2072, %v2121
  %v2171 = vmax.f32 %v2073, %v2122
  %v2172 = vmax.f32 %v2074, %v2123
  %v2173 = vmax.f32 %v2075, %v2124
  %v2174 = vmax.f32 %v2076, %v2125
  %v2175 = vmax.f32 %v2077, %v2126
  %v2176 = vmax.f32 %v2078, %v2127
  %v2177 = vpack.c.bf16 %v2129, %v2128
  %v2178 = vpack.c.bf16 %v2131, %v2130
  %v2179 = vpack.c.bf16 %v2133, %v2132
  %v2180 = vpack.c.bf16 %v2135, %v2134
  %v2181 = vpack.c.bf16 %v2137, %v2136
  %v2182 = vpack.c.bf16 %v2139, %v2138
  %v2183 = vpack.c.bf16 %v2141, %v2140
  %v2184 = vpack.c.bf16 %v2143, %v2142
  %v2185 = vpack.c.bf16 %v2145, %v2144
  %v2186 = vpack.c.bf16 %v2147, %v2146
  %v2187 = vpack.c.bf16 %v2149, %v2148
  %v2188 = vpack.c.bf16 %v2151, %v2150
  %v2189 = vpack.c.bf16 %v2153, %v2152
  %v2190 = vpack.c.bf16 %v2155, %v2154
  %v2191 = vpack.c.bf16 %v2157, %v2156
  %v2192 = vpack.c.bf16 %v2159, %v2158
  %v2193 = vpack.c.bf16 %v2161, %v2160
  %v2194 = vpack.c.bf16 %v2163, %v2162
  %v2195 = vpack.c.bf16 %v2165, %v2164
  %v2196 = vpack.c.bf16 %v2167, %v2166
  %v2197 = vpack.c.bf16 %v2169, %v2168
  %v2198 = vpack.c.bf16 %v2171, %v2170
  %v2199 = vpack.c.bf16 %v2173, %v2172
  %v2200 = vpack.c.bf16 %v2175, %v2174
  %v2201 = vpack.c.bf16 %v2176, %v2176
  %v2227 = vunpack.c.l.b16 %v2177
  %v2228 = vunpack.c.h.b16 %v2177
  %v2229 = vunpack.c.l.b16 %v2178
  %v2230 = vunpack.c.h.b16 %v2178
  %v2231 = vunpack.c.l.b16 %v2179
  %v2232 = vunpack.c.h.b16 %v2179
  %v2233 = vunpack.c.l.b16 %v2180
  %v2234 = vunpack.c.h.b16 %v2180
  %v2235 = vunpack.c.l.b16 %v2181
  %v2236 = vunpack.c.h.b16 %v2181
  %v2237 = vunpack.c.l.b16 %v2182
  %v2238 = vunpack.c.h.b16 %v2182
  %v2239 = vunpack.c.l.b16 %v2183
  %v2240 = vunpack.c.h.b16 %v2183
  %v2241 = vunpack.c.l.b16 %v2184
  %v2242 = vunpack.c.h.b16 %v2184
  %v2243 = vunpack.c.l.b16 %v2185
  %v2244 = vunpack.c.h.b16 %v2185
  %v2245 = vunpack.c.l.b16 %v2186
  %v2246 = vunpack.c.h.b16 %v2186
  %v2247 = vunpack.c.l.b16 %v2187
  %v2248 = vunpack.c.h.b16 %v2187
  %v2249 = vunpack.c.l.b16 %v2188
  %v2250 = vunpack.c.h.b16 %v2188
  %v2251 = vunpack.c.l.b16 %v2189
  %v2252 = vunpack.c.h.b16 %v2189
  %v2253 = vunpack.c.l.b16 %v2190
  %v2254 = vunpack.c.h.b16 %v2190
  %v2255 = vunpack.c.l.b16 %v2191
  %v2256 = vunpack.c.h.b16 %v2191
  %v2257 = vunpack.c.l.b16 %v2192
  %v2258 = vunpack.c.h.b16 %v2192
  %v2259 = vunpack.c.l.b16 %v2193
  %v2260 = vunpack.c.h.b16 %v2193
  %v2261 = vunpack.c.l.b16 %v2194
  %v2262 = vunpack.c.h.b16 %v2194
  %v2263 = vunpack.c.l.b16 %v2195
  %v2264 = vunpack.c.h.b16 %v2195
  %v2265 = vunpack.c.l.b16 %v2196
  %v2266 = vunpack.c.h.b16 %v2196
  %v2267 = vunpack.c.l.b16 %v2197
  %v2268 = vunpack.c.h.b16 %v2197
  %v2269 = vunpack.c.l.b16 %v2198
  %v2270 = vunpack.c.h.b16 %v2198
  %v2271 = vunpack.c.l.b16 %v2199
  %v2272 = vunpack.c.h.b16 %v2199
  %v2273 = vunpack.c.l.b16 %v2200
  %v2274 = vunpack.c.h.b16 %v2200
  %v2275 = vunpack.c.l.b16 %v2201
  %v2276 = vpack.c.b16 %v2227, %v2227
  %v2277 = vpack.c.b16 %v2228, %v2228
  %v2278 = vpack.c.b16 %v2229, %v2229
  %v2279 = vpack.c.b16 %v2230, %v2230
  %v2280 = vpack.c.b16 %v2231, %v2231
  %v2281 = vpack.c.b16 %v2232, %v2232
  %v2282 = vpack.c.b16 %v2233, %v2233
  %v2283 = vpack.c.b16 %v2234, %v2234
  %v2284 = vpack.c.b16 %v2235, %v2235
  %v2285 = vpack.c.b16 %v2236, %v2236
  %v2286 = vpack.c.b16 %v2237, %v2237
  %v2287 = vpack.c.b16 %v2238, %v2238
  %v2288 = vpack.c.b16 %v2239, %v2239
  %v2289 = vpack.c.b16 %v2240, %v2240
  %v2290 = vpack.c.b16 %v2241, %v2241
  %v2291 = vpack.c.b16 %v2242, %v2242
  %v2292 = vpack.c.b16 %v2243, %v2243
  %v2293 = vpack.c.b16 %v2244, %v2244
  %v2294 = vpack.c.b16 %v2245, %v2245
  %v2295 = vpack.c.b16 %v2246, %v2246
  %v2296 = vpack.c.b16 %v2247, %v2247
  %v2297 = vpack.c.b16 %v2248, %v2248
  %v2298 = vpack.c.b16 %v2249, %v2249
  %v2299 = vpack.c.b16 %v2250, %v2250
  %v2300 = vpack.c.b16 %v2251, %v2251
  %v2301 = vpack.c.b16 %v2252, %v2252
  %v2302 = vpack.c.b16 %v2253, %v2253
  %v2303 = vpack.c.b16 %v2254, %v2254
  %v2304 = vpack.c.b16 %v2255, %v2255
  %v2305 = vpack.c.b16 %v2256, %v2256
  %v2306 = vpack.c.b16 %v2257, %v2257
  %v2307 = vpack.c.b16 %v2258, %v2258
  %v2308 = vpack.c.b16 %v2259, %v2259
  %v2309 = vpack.c.b16 %v2260, %v2260
  %v2310 = vpack.c.b16 %v2261, %v2261
  %v2311 = vpack.c.b16 %v2262, %v2262
  %v2312 = vpack.c.b16 %v2263, %v2263
  %v2313 = vpack.c.b16 %v2264, %v2264
  %v2314 = vpack.c.b16 %v2265, %v2265
  %v2315 = vpack.c.b16 %v2266, %v2266
  %v2316 = vpack.c.b16 %v2267, %v2267
  %v2317 = vpack.c.b16 %v2268, %v2268
  %v2318 = vpack.c.b16 %v2269, %v2269
  %v2319 = vpack.c.b16 %v2270, %v2270
  %v2320 = vpack.c.b16 %v2271, %v2271
  %v2321 = vpack.c.b16 %v2272, %v2272
  %v2322 = vpack.c.b16 %v2273, %v2273
  %v2323 = vpack.c.b16 %v2274, %v2274
  %v2324 = vpack.c.b16 %v2275, %v2275
  %vm2374 = vcmask 60416
  %2375 = vst.msk [vmem:[%s3] sm:$0xf] %vm2374, %v2276
  %2376 = vst.msk [vmem:[%s3 + $0x4] sm:$0xf] %vm2374, %v2277
  %2377 = vst.msk [vmem:[%s3 + $0x8] sm:$0xf] %vm2374, %v2278
  %2378 = vst.msk [vmem:[%s3 + $0xc] sm:$0xf] %vm2374, %v2279
  %2379 = vst.msk [vmem:[%s3 + $0x10] sm:$0xf] %vm2374, %v2280
  %2380 = vst.msk [vmem:[%s3 + $0x14] sm:$0xf] %vm2374, %v2281
  %2381 = vst.msk [vmem:[%s3 + $0x18] sm:$0xf] %vm2374, %v2282
  %2382 = vst.msk [vmem:[%s3 + $0x1c] sm:$0xf] %vm2374, %v2283
  %2383 = vst.msk [vmem:[%s3 + $0x20] sm:$0xf] %vm2374, %v2284
  %2384 = vst.msk [vmem:[%s3 + $0x24] sm:$0xf] %vm2374, %v2285
  %2385 = vst.msk [vmem:[%s3 + $0x28] sm:$0xf] %vm2374, %v2286
  %2386 = vst.msk [vmem:[%s3 + $0x2c] sm:$0xf] %vm2374, %v2287
  %2387 = vst.msk [vmem:[%s3 + $0x30] sm:$0xf] %vm2374, %v2288
  %2388 = vst.msk [vmem:[%s3 + $0x34] sm:$0xf] %vm2374, %v2289
  %2389 = vst.msk [vmem:[%s3 + $0x38] sm:$0xf] %vm2374, %v2290
  %2390 = vst.msk [vmem:[%s3 + $0x3c] sm:$0xf] %vm2374, %v2291
  %2391 = vst.msk [vmem:[%s3 + $0x40] sm:$0xf] %vm2374, %v2292
  %2392 = vst.msk [vmem:[%s3 + $0x44] sm:$0xf] %vm2374, %v2293
  %2393 = vst.msk [vmem:[%s3 + $0x48] sm:$0xf] %vm2374, %v2294
  %2394 = vst.msk [vmem:[%s3 + $0x4c] sm:$0xf] %vm2374, %v2295
  %2395 = vst.msk [vmem:[%s3 + $0x50] sm:$0xf] %vm2374, %v2296
  %2396 = vst.msk [vmem:[%s3 + $0x54] sm:$0xf] %vm2374, %v2297
  %2397 = vst.msk [vmem:[%s3 + $0x58] sm:$0xf] %vm2374, %v2298
  %2398 = vst.msk [vmem:[%s3 + $0x5c] sm:$0xf] %vm2374, %v2299
  %2399 = vst.msk [vmem:[%s3 + $0x60] sm:$0xf] %vm2374, %v2300
  %2400 = vst.msk [vmem:[%s3 + $0x64] sm:$0xf] %vm2374, %v2301
  %2401 = vst.msk [vmem:[%s3 + $0x68] sm:$0xf] %vm2374, %v2302
  %2402 = vst.msk [vmem:[%s3 + $0x6c] sm:$0xf] %vm2374, %v2303
  %2403 = vst.msk [vmem:[%s3 + $0x70] sm:$0xf] %vm2374, %v2304
  %2404 = vst.msk [vmem:[%s3 + $0x74] sm:$0xf] %vm2374, %v2305
  %2405 = vst.msk [vmem:[%s3 + $0x78] sm:$0xf] %vm2374, %v2306
  %2406 = vst.msk [vmem:[%s3 + $0x7c] sm:$0xf] %vm2374, %v2307
  %2407 = vst.msk [vmem:[%s3 + $0x80] sm:$0xf] %vm2374, %v2308
  %2408 = vst.msk [vmem:[%s3 + $0x84] sm:$0xf] %vm2374, %v2309
  %2409 = vst.msk [vmem:[%s3 + $0x88] sm:$0xf] %vm2374, %v2310
  %2410 = vst.msk [vmem:[%s3 + $0x8c] sm:$0xf] %vm2374, %v2311
  %2411 = vst.msk [vmem:[%s3 + $0x90] sm:$0xf] %vm2374, %v2312
  %2412 = vst.msk [vmem:[%s3 + $0x94] sm:$0xf] %vm2374, %v2313
  %2413 = vst.msk [vmem:[%s3 + $0x98] sm:$0xf] %vm2374, %v2314
  %2414 = vst.msk [vmem:[%s3 + $0x9c] sm:$0xf] %vm2374, %v2315
  %2415 = vst.msk [vmem:[%s3 + $0xa0] sm:$0xf] %vm2374, %v2316
  %2416 = vst.msk [vmem:[%s3 + $0xa4] sm:$0xf] %vm2374, %v2317
  %2417 = vst.msk [vmem:[%s3 + $0xa8] sm:$0xf] %vm2374, %v2318
  %2418 = vst.msk [vmem:[%s3 + $0xac] sm:$0xf] %vm2374, %v2319
  %2419 = vst.msk [vmem:[%s3 + $0xb0] sm:$0xf] %vm2374, %v2320
  %2420 = vst.msk [vmem:[%s3 + $0xb4] sm:$0xf] %vm2374, %v2321
  %2421 = vst.msk [vmem:[%s3 + $0xb8] sm:$0xf] %vm2374, %v2322
  %2422 = vst.msk [vmem:[%s3 + $0xbc] sm:$0xf] %vm2374, %v2323
  %2423 = vst.msk [vmem:[%s3 + $0xc0] sm:$0xf] %vm2374, %v2324
  // Predicated region
  $region14: #{convnet_forward.3} parent=0 // pred_check
    _
  $region15: #{convnet_forward.3} parent=0 // pred_check_branch
    %2425 = sbr.rel (0) target = $region17
  $region16: #{convnet_forward.3} parent=0 // pred_region
    _
  $region17: #{convnet_forward.3} parent=0 // pred_fallthru
    _
  // Predicated region
  $region18: #{convnet_forward.3} parent=0 // pred_check
    _
  $region19: #{convnet_forward.3} parent=0 // pred_check_branch
    %2427 = sbr.rel (0) target = $region21
  $region20: #{convnet_forward.3} parent=0 // pred_region
    _
  $region21: #{convnet_forward.3} parent=0 // pred_fallthru
    _

// kernel: convnet_forward.4
$region0: #{convnet_forward.4}
  #allocation0 [shape = 'u32[]', space=smem, size = 0x4, offset = 0x4, fixed_abs, tag = 'smem constant byte address 0x4 - core index']
  #allocation1 [shape = 'u32[144,128]{1,0:T(1,128)}', space=vmem, size = 0x12000, scoped, tag = 'internal scratch']
  %s0 = inlined_call_operand.vmem [shape: bf16[416,72], index: 0, kind: input, shape index: {}]
  %s1 = inlined_call_operand.vmem [shape: bf16[72,16], index: 1, kind: input, shape index: {}]
  %s2 = inlined_call_operand.vmem [shape: f32[1,16], index: 2, kind: input, shape index: {}]
  %s3 = inlined_call_operand.vmem [shape: bf16[104,16], index: 3, kind: output, shape index: {}]
  %s4 = sld [smem:[#allocation0]]
  $region22: #{convnet_forward.4} parent=0
    _
  %s6 = ssub.s32 1, %s4
  %s7 = scalar_select 0, %s6, %s4
  // Predicated region
  $region2: #{convnet_forward.4} parent=0 // pred_check
    _
  $region3: #{convnet_forward.4} parent=0 // pred_check_branch
    %9 = sbr.rel (0) target = $region5
  $region4: #{convnet_forward.4} parent=0 // pred_region
    _
  $region5: #{convnet_forward.4} parent=0 // pred_fallthru
    _
  // Predicated region
  $region6: #{convnet_forward.4} parent=0 // pred_check
    _
  $region7: #{convnet_forward.4} parent=0 // pred_check_branch
    %11 = sbr.rel (0) target = $region9
  $region8: #{convnet_forward.4} parent=0 // pred_region
    _
  $region9: #{convnet_forward.4} parent=0 // pred_fallthru
    _
  // Predicated region
  $region10: #{convnet_forward.4} parent=0 // pred_check
    _
  $region11: #{convnet_forward.4} parent=0 // pred_check_branch
    %13 = sbr.rel (0) target = $region13
  $region12: #{convnet_forward.4} parent=0 // pred_region
    _
  $region13: #{convnet_forward.4} parent=0 // pred_fallthru
    _
  %v15 = vld [vmem:[%s0] sm:$0xf]
  %v16 = vld [vmem:[%s0 + $0x4] sm:$0xf]
  %v17 = vld [vmem:[%s0 + $0x8] sm:$0xf]
  %v18 = vld [vmem:[%s0 + $0xc] sm:$0xf]
  %v19 = vld [vmem:[%s0 + $0x10] sm:$0xf]
  %v20 = vld [vmem:[%s0 + $0x14] sm:$0xf]
  %v21 = vld [vmem:[%s0 + $0x18] sm:$0xf]
  %v22 = vld [vmem:[%s0 + $0x1c] sm:$0xf]
  %v23 = vld [vmem:[%s0 + $0x20] sm:$0xf]
  %v24 = vld [vmem:[%s0 + $0x24] sm:$0xf]
  %v25 = vld [vmem:[%s0 + $0x28] sm:$0xf]
  %v26 = vld [vmem:[%s0 + $0x2c] sm:$0xf]
  %v27 = vld [vmem:[%s0 + $0x30] sm:$0xf]
  %v28 = vld [vmem:[%s0 + $0x34] sm:$0xf]
  %v29 = vld [vmem:[%s0 + $0x38] sm:$0xf]
  %v30 = vld [vmem:[%s0 + $0x3c] sm:$0xf]
  %v31 = vld [vmem:[%s0 + $0x40] sm:$0xf]
  %v32 = vld [vmem:[%s0 + $0x44] sm:$0xf]
  %v33 = vld [vmem:[%s0 + $0x48] sm:$0xf]
  %v34 = vld [vmem:[%s0 + $0x4c] sm:$0xf]
  %v35 = vld [vmem:[%s0 + $0x50] sm:$0xf]
  %v36 = vld [vmem:[%s0 + $0x54] sm:$0xf]
  %v37 = vld [vmem:[%s0 + $0x58] sm:$0xf]
  %v38 = vld [vmem:[%s0 + $0x5c] sm:$0xf]
  %v39 = vld [vmem:[%s0 + $0x60] sm:$0xf]
  %v40 = vld [vmem:[%s0 + $0x64] sm:$0xf]
  %v41 = vld [vmem:[%s0 + $0x68] sm:$0xf]
  %v42 = vld [vmem:[%s0 + $0x6c] sm:$0xf]
  %v43 = vld [vmem:[%s0 + $0x70] sm:$0xf]
  %v44 = vld [vmem:[%s0 + $0x74] sm:$0xf]
  %v45 = vld [vmem:[%s0 + $0x78] sm:$0xf]
  %v46 = vld [vmem:[%s0 + $0x7c] sm:$0xf]
  %v47 = vld [vmem:[%s0 + $0x80] sm:$0xf]
  %v48 = vld [vmem:[%s0 + $0x84] sm:$0xf]
  %v49 = vld [vmem:[%s0 + $0x88] sm:$0xf]
  %v50 = vld [vmem:[%s0 + $0x8c] sm:$0xf]
  %v51 = vld [vmem:[%s0 + $0x90] sm:$0xf]
  %v52 = vld [vmem:[%s0 + $0x94] sm:$0xf]
  %v53 = vld [vmem:[%s0 + $0x98] sm:$0xf]
  %v54 = vld [vmem:[%s0 + $0x9c] sm:$0xf]
  %v55 = vld [vmem:[%s0 + $0xa0] sm:$0xf]
  %v56 = vld [vmem:[%s0 + $0xa4] sm:$0xf]
  %v57 = vld [vmem:[%s0 + $0xa8] sm:$0xf]
  %v58 = vld [vmem:[%s0 + $0xac] sm:$0xf]
  %v59 = vld [vmem:[%s0 + $0xb0] sm:$0xf]
  %v60 = vld [vmem:[%s0 + $0xb4] sm:$0xf]
  %v61 = vld [vmem:[%s0 + $0xb8] sm:$0xf]
  %v62 = vld [vmem:[%s0 + $0xbc] sm:$0xf]
  %v63 = vld [vmem:[%s0 + $0xc0] sm:$0xf]
  %v64 = vld [vmem:[%s0 + $0xc4] sm:$0xf]
  %v65 = vld [vmem:[%s0 + $0xc8] sm:$0xf]
  %v66 = vld [vmem:[%s0 + $0xcc] sm:$0xf]
  %v67 = vld [vmem:[%s1] sm:$0xf]
  %v68 = vld [vmem:[%s1 + $0x4] sm:$0xf]
  %v69 = vld [vmem:[%s1 + $0x8] sm:$0xf]
  %v70 = vld [vmem:[%s1 + $0xc] sm:$0xf]
  %v71 = vld [vmem:[%s1 + $0x10] sm:$0xf]
  %v72 = vld [vmem:[%s1 + $0x14] sm:$0xf]
  %v73 = vld [vmem:[%s1 + $0x18] sm:$0xf]
  %v74 = vld [vmem:[%s1 + $0x1c] sm:$0xf]
  %v75 = vld [vmem:[%s1 + $0x20] sm:$0xf]
  %v76 = vld [vmem:[%s2] sm:$0x1]
  %v78 = vlaneseq
  %v79 = vshrl.u32 %v78, 7
  %v80 = vsub.s32 0, %v79
  %v81 = vrot.slane %v76, %v80
  %v135 = vunpack.c.l.b16 %v15
  %v136 = vunpack.c.l.b16 %v16
  %v137 = vunpack.c.l.b16 %v17
  %v138 = vunpack.c.l.b16 %v18
  %v139 = vunpack.c.l.b16 %v19
  %v140 = vunpack.c.l.b16 %v20
  %v141 = vunpack.c.l.b16 %v21
  %v142 = vunpack.c.l.b16 %v22
  %v143 = vunpack.c.l.b16 %v23
  %v144 = vunpack.c.l.b16 %v24
  %v145 = vunpack.c.l.b16 %v25
  %v146 = vunpack.c.l.b16 %v26
  %v147 = vunpack.c.l.b16 %v27
  %v148 = vunpack.c.l.b16 %v28
  %v149 = vunpack.c.l.b16 %v29
  %v150 = vunpack.c.l.b16 %v30
  %v151 = vunpack.c.l.b16 %v31
  %v152 = vunpack.c.l.b16 %v32
  %v153 = vunpack.c.l.b16 %v33
  %v154 = vunpack.c.l.b16 %v34
  %v155 = vunpack.c.l.b16 %v35
  %v156 = vunpack.c.l.b16 %v36
  %v157 = vunpack.c.l.b16 %v37
  %v158 = vunpack.c.l.b16 %v38
  %v159 = vunpack.c.l.b16 %v39
  %v160 = vunpack.c.l.b16 %v40
  %v161 = vunpack.c.l.b16 %v41
  %v162 = vunpack.c.l.b16 %v42
  %v163 = vunpack.c.l.b16 %v43
  %v164 = vunpack.c.l.b16 %v44
  %v165 = vunpack.c.l.b16 %v45
  %v166 = vunpack.c.l.b16 %v46
  %v167 = vunpack.c.l.b16 %v47
  %v168 = vunpack.c.l.b16 %v48
  %v169 = vunpack.c.l.b16 %v49
  %v170 = vunpack.c.l.b16 %v50
  %v171 = vunpack.c.l.b16 %v51
  %v172 = vunpack.c.l.b16 %v52
  %v173 = vunpack.c.l.b16 %v53
  %v174 = vunpack.c.l.b16 %v54
  %v175 = vunpack.c.l.b16 %v55
  %v176 = vunpack.c.l.b16 %v56
  %v177 = vunpack.c.l.b16 %v57
  %v178 = vunpack.c.l.b16 %v58
  %v179 = vunpack.c.l.b16 %v59
  %v180 = vunpack.c.l.b16 %v60
  %v181 = vunpack.c.l.b16 %v61
  %v182 = vunpack.c.l.b16 %v62
  %v183 = vunpack.c.l.b16 %v63
  %v184 = vunpack.c.l.b16 %v64
  %v185 = vunpack.c.l.b16 %v65
  %v186 = vunpack.c.l.b16 %v66
  %v187 = vpack.c.b16 %v136, %v135
  %v188 = vpack.c.b16 %v138, %v137
  %v189 = vpack.c.b16 %v140, %v139
  %v190 = vpack.c.b16 %v142, %v141
  %v191 = vpack.c.b16 %v144, %v143
  %v192 = vpack.c.b16 %v146, %v145
  %v193 = vpack.c.b16 %v148, %v147
  %v194 = vpack.c.b16 %v150, %v149
  %v195 = vpack.c.b16 %v152, %v151
  %v196 = vpack.c.b16 %v154, %v153
  %v197 = vpack.c.b16 %v156, %v155
  %v198 = vpack.c.b16 %v158, %v157
  %v199 = vpack.c.b16 %v160, %v159
  %v200 = vpack.c.b16 %v162, %v161
  %v201 = vpack.c.b16 %v164, %v163
  %v202 = vpack.c.b16 %v166, %v165
  %v203 = vpack.c.b16 %v168, %v167
  %v204 = vpack.c.b16 %v170, %v169
  %v205 = vpack.c.b16 %v172, %v171
  %v206 = vpack.c.b16 %v174, %v173
  %v207 = vpack.c.b16 %v176, %v175
  %v208 = vpack.c.b16 %v178, %v177
  %v209 = vpack.c.b16 %v180, %v179
  %v210 = vpack.c.b16 %v182, %v181
  %v211 = vpack.c.b16 %v184, %v183
  %v212 = vpack.c.b16 %v186, %v185
  %v222 = vunpack.c.l.b16 %v67
  %v223 = vunpack.c.l.b16 %v68
  %v224 = vunpack.c.l.b16 %v69
  %v225 = vunpack.c.l.b16 %v70
  %v226 = vunpack.c.l.b16 %v71
  %v227 = vunpack.c.l.b16 %v72
  %v228 = vunpack.c.l.b16 %v73
  %v229 = vunpack.c.l.b16 %v74
  %v230 = vunpack.c.l.b16 %v75
  %v231 = vpack.c.b16 %v223, %v222
  %v232 = vpack.c.b16 %v225, %v224
  %v233 = vpack.c.b16 %v227, %v226
  %v234 = vpack.c.b16 %v229, %v228
  %v235 = vpack.c.b16 %v230, %v230
  %vm240 = vcmask 588800
  %v242 = vsel %vm240, %v187, 0
  %v245 = vsel %vm240, %v188, 0
  %v248 = vsel %vm240, %v189, 0
  %v251 = vsel %vm240, %v190, 0
  %v254 = vsel %vm240, %v191, 0
  %v257 = vsel %vm240, %v192, 0
  %v260 = vsel %vm240, %v193, 0
  %v263 = vsel %vm240, %v194, 0
  %v266 = vsel %vm240, %v195, 0
  %v269 = vsel %vm240, %v196, 0
  %v272 = vsel %vm240, %v197, 0
  %v275 = vsel %vm240, %v198, 0
  %v278 = vsel %vm240, %v199, 0
  %v281 = vsel %vm240, %v200, 0
  %v284 = vsel %vm240, %v201, 0
  %v287 = vsel %vm240, %v202, 0
  %v290 = vsel %vm240, %v203, 0
  %v293 = vsel %vm240, %v204, 0
  %v296 = vsel %vm240, %v205, 0
  %v299 = vsel %vm240, %v206, 0
  %v302 = vsel %vm240, %v207, 0
  %v305 = vsel %vm240, %v208, 0
  %v308 = vsel %vm240, %v209, 0
  %v311 = vsel %vm240, %v210, 0
  %v314 = vsel %vm240, %v211, 0
  %v317 = vsel %vm240, %v212, 0
  %vm319 = vcmask 1043456
  %v321 = vsel %vm319, %v235, 0
  %323 = vmatprep.subr.bf16.mxu0 0
  %324 = vmatpush1.bf16.msra.mxu0 %v231
  %325 = vmatprep.subr.bf16.mxu0 0
  %326 = vmatpush1.bf16.msra.mxu0 %v232
  %327 = vmatprep.subr.bf16.mxu0 0
  %328 = vmatpush1.bf16.msra.mxu0 %v233
  %329 = vmatprep.subr.bf16.mxu0 0
  %330 = vmatpush1.bf16.msra.mxu0 %v234
  %331 = vmatprep.subr.bf16.mxu0 0
  %332 = vmatpush1.bf16.msra.mxu0 %v321
  %333 = vmatprep.subr.bf16.mxu0 0
  %334 = vmatpush1.bf16.msra.mxu0 0
  %335 = vmatprep.subr.bf16.mxu0 0
  %336 = vmatpush1.bf16.msra.mxu0 0
  %337 = vmatprep.subr.bf16.mxu0 0
  %338 = vmatpush1.bf16.msra.mxu0 0
  %339 = vmatprep.subr.bf16.mxu0 0
  %340 = vmatpush1.bf16.msra.mxu0 0
  %341 = vmatprep.subr.bf16.mxu0 0
  %342 = vmatpush1.bf16.msra.mxu0 0
  %343 = vmatprep.subr.bf16.mxu0 0
  %344 = vmatpush1.bf16.msra.mxu0 0
  %345 = vmatprep.subr.bf16.mxu0 0
  %346 = vmatpush1.bf16.msra.mxu0 0
  %347 = vmatprep.subr.bf16.mxu0 0
  %348 = vmatpush1.bf16.msra.mxu0 0
  %349 = vmatprep.subr.bf16.mxu0 0
  %350 = vmatpush1.bf16.msra.mxu0 0
  %351 = vmatprep.subr.bf16.mxu0 0
  %352 = vmatpush1.bf16.msra.mxu0 0
  %353 = vmatprep.subr.bf16.mxu0 0
  %354 = vmatpush1.bf16.msra.mxu0 0
  %355 = vmatprep.mubr.bf16.mxu0 0
  %356 = vmatmul.mubr.bf16.gmra.mrb[0].mxu0 %v242
  %v357 = vpop.f32.mrb[0].mxu0
  %v358 = vadd.f32 %v81, %v357
  %v359 = vpop.f32.mrb[0].mxu0
  %v360 = vpop.f32.mrb[0].mxu0
  %v361 = vadd.f32 %v81, %v360
  %v362 = vpop.f32.mrb[0].mxu0
  %363 = vmatprep.mubr.bf16.mxu0 0
  %364 = vmatmul.mubr.bf16.gmra.mrb[0].mxu0 %v245
  %v365 = vpop.f32.mrb[0].mxu0
  %v366 = vadd.f32 %v81, %v365
  %v367 = vpop.f32.mrb[0].mxu0
  %v368 = vpop.f32.mrb[0].mxu0
  %v369 = vadd.f32 %v81, %v368
  %v370 = vpop.f32.mrb[0].mxu0
  %371 = vmatprep.mubr.bf16.mxu0 0
  %372 = vmatmul.mubr.bf16.gmra.mrb[0].mxu0 %v248
  %v373 = vpop.f32.mrb[0].mxu0
  %v374 = vadd.f32 %v81, %v373
  %v375 = vpop.f32.mrb[0].mxu0
  %v376 = vpop.f32.mrb[0].mxu0
  %v377 = vadd.f32 %v81, %v376
  %v378 = vpop.f32.mrb[0].mxu0
  %379 = vmatprep.mubr.bf16.mxu0 0
  %380 = vmatmul.mubr.bf16.gmra.mrb[0].mxu0 %v251
  %v381 = vpop.f32.mrb[0].mxu0
  %v382 = vadd.f32 %v81, %v381
  %v383 = vpop.f32.mrb[0].mxu0
  %v384 = vpop.f32.mrb[0].mxu0
  %v385 = vadd.f32 %v81, %v384
  %v386 = vpop.f32.mrb[0].mxu0
  %387 = vmatprep.mubr.bf16.mxu0 0
  %388 = vmatmul.mubr.bf16.gmra.mrb[0].mxu0 %v254
  %v389 = vpop.f32.mrb[0].mxu0
  %v390 = vadd.f32 %v81, %v389
  %v391 = vpop.f32.mrb[0].mxu0
  %v392 = vpop.f32.mrb[0].mxu0
  %v393 = vadd.f32 %v81, %v392
  %v394 = vpop.f32.mrb[0].mxu0
  %395 = vmatprep.mubr.bf16.mxu0 0
  %396 = vmatmul.mubr.bf16.gmra.mrb[0].mxu0 %v257
  %v397 = vpop.f32.mrb[0].mxu0
  %v398 = vadd.f32 %v81, %v397
  %v399 = vpop.f32.mrb[0].mxu0
  %v400 = vpop.f32.mrb[0].mxu0
  %v401 = vadd.f32 %v81, %v400
  %v402 = vpop.f32.mrb[0].mxu0
  %403 = vmatprep.mubr.bf16.mxu0 0
  %404 = vmatmul.mubr.bf16.gmra.mrb[0].mxu0 %v260
  %v405 = vpop.f32.mrb[0].mxu0
  %v406 = vadd.f32 %v81, %v405
  %v407 = vpop.f32.mrb[0].mxu0
  %v408 = vpop.f32.mrb[0].mxu0
  %v409 = vadd.f32 %v81, %v408
  %v410 = vpop.f32.mrb[0].mxu0
  %411 = vmatprep.mubr.bf16.mxu0 0
  %412 = vmatmul.mubr.bf16.gmra.mrb[0].mxu0 %v263
  %v413 = vpop.f32.mrb[0].mxu0
  %v414 = vadd.f32 %v81, %v413
  %v415 = vpop.f32.mrb[0].mxu0
  %v416 = vpop.f32.mrb[0].mxu0
  %v417 = vadd.f32 %v81, %v416
  %v418 = vpop.f32.mrb[0].mxu0
  %419 = vmatprep.mubr.bf16.mxu0 0
  %420 = vmatmul.mubr.bf16.gmra.mrb[0].mxu0 %v266
  %v421 = vpop.f32.mrb[0].mxu0
  %v422 = vadd.f32 %v81, %v421
  %v423 = vpop.f32.mrb[0].mxu0
  %v424 = vpop.f32.mrb[0].mxu0
  %v425 = vadd.f32 %v81, %v424
  %v426 = vpop.f32.mrb[0].mxu0
  %427 = vmatprep.mubr.bf16.mxu0 0
  %428 = vmatmul.mubr.bf16.gmra.mrb[0].mxu0 %v269
  %v429 = vpop.f32.mrb[0].mxu0
  %v430 = vadd.f32 %v81, %v429
  %v431 = vpop.f32.mrb[0].mxu0
  %v432 = vpop.f32.mrb[0].mxu0
  %v433 = vadd.f32 %v81, %v432
  %v434 = vpop.f32.mrb[0].mxu0
  %435 = vmatprep.mubr.bf16.mxu0 0
  %436 = vmatmul.mubr.bf16.gmra.mrb[0].mxu0 %v272
  %v437 = vpop.f32.mrb[0].mxu0
  %v438 = vadd.f32 %v81, %v437
  %v439 = vpop.f32.mrb[0].mxu0
  %v440 = vpop.f32.mrb[0].mxu0
  %v441 = vadd.f32 %v81, %v440
  %v442 = vpop.f32.mrb[0].mxu0
  %443 = vmatprep.mubr.bf16.mxu0 0
  %444 = vmatmul.mubr.bf16.gmra.mrb[0].mxu0 %v275
  %v445 = vpop.f32.mrb[0].mxu0
  %v446 = vadd.f32 %v81, %v445
  %v447 = vpop.f32.mrb[0].mxu0
  %v448 = vpop.f32.mrb[0].mxu0
  %v449 = vadd.f32 %v81, %v448
  %v450 = vpop.f32.mrb[0].mxu0
  %451 = vmatprep.mubr.bf16.mxu0 0
  %452 = vmatmul.mubr.bf16.gmra.mrb[0].mxu0 %v278
  %v453 = vpop.f32.mrb[0].mxu0
  %v454 = vadd.f32 %v81, %v453
  %v455 = vpop.f32.mrb[0].mxu0
  %v456 = vpop.f32.mrb[0].mxu0
  %v457 = vadd.f32 %v81, %v456
  %v458 = vpop.f32.mrb[0].mxu0
  %459 = vmatprep.mubr.bf16.mxu0 0
  %460 = vmatmul.mubr.bf16.gmra.mrb[0].mxu0 %v281
  %v461 = vpop.f32.mrb[0].mxu0
  %v462 = vadd.f32 %v81, %v461
  %v463 = vpop.f32.mrb[0].mxu0
  %v464 = vpop.f32.mrb[0].mxu0
  %v465 = vadd.f32 %v81, %v464
  %v466 = vpop.f32.mrb[0].mxu0
  %467 = vmatprep.mubr.bf16.mxu0 0
  %468 = vmatmul.mubr.bf16.gmra.mrb[0].mxu0 %v284
  %v469 = vpop.f32.mrb[0].mxu0
  %v470 = vadd.f32 %v81, %v469
  %v471 = vpop.f32.mrb[0].mxu0
  %v472 = vpop.f32.mrb[0].mxu0
  %v473 = vadd.f32 %v81, %v472
  %v474 = vpop.f32.mrb[0].mxu0
  %475 = vmatprep.mubr.bf16.mxu0 0
  %476 = vmatmul.mubr.bf16.gmra.mrb[0].mxu0 %v287
  %v477 = vpop.f32.mrb[0].mxu0
  %v478 = vadd.f32 %v81, %v477
  %v479 = vpop.f32.mrb[0].mxu0
  %v480 = vpop.f32.mrb[0].mxu0
  %v481 = vadd.f32 %v81, %v480
  %v482 = vpop.f32.mrb[0].mxu0
  %483 = vmatprep.mubr.bf16.mxu0 0
  %484 = vmatmul.mubr.bf16.gmra.mrb[0].mxu0 %v290
  %v485 = vpop.f32.mrb[0].mxu0
  %v486 = vadd.f32 %v81, %v485
  %v487 = vpop.f32.mrb[0].mxu0
  %v488 = vpop.f32.mrb[0].mxu0
  %v489 = vadd.f32 %v81, %v488
  %v490 = vpop.f32.mrb[0].mxu0
  %491 = vmatprep.mubr.bf16.mxu0 0
  %492 = vmatmul.mubr.bf16.gmra.mrb[0].mxu0 %v293
  %v493 = vpop.f32.mrb[0].mxu0
  %v494 = vadd.f32 %v81, %v493
  %v495 = vpop.f32.mrb[0].mxu0
  %v496 = vpop.f32.mrb[0].mxu0
  %v497 = vadd.f32 %v81, %v496
  %v498 = vpop.f32.mrb[0].mxu0
  %499 = vmatprep.mubr.bf16.mxu0 0
  %500 = vmatmul.mubr.bf16.gmra.mrb[0].mxu0 %v296
  %v501 = vpop.f32.mrb[0].mxu0
  %v502 = vadd.f32 %v81, %v501
  %v503 = vpop.f32.mrb[0].mxu0
  %v504 = vpop.f32.mrb[0].mxu0
  %v505 = vadd.f32 %v81, %v504
  %v506 = vpop.f32.mrb[0].mxu0
  %507 = vmatprep.mubr.bf16.mxu0 0
  %508 = vmatmul.mubr.bf16.gmra.mrb[0].mxu0 %v299
  %v509 = vpop.f32.mrb[0].mxu0
  %v510 = vadd.f32 %v81, %v509
  %v511 = vpop.f32.mrb[0].mxu0
  %v512 = vpop.f32.mrb[0].mxu0
  %v513 = vadd.f32 %v81, %v512
  %v514 = vpop.f32.mrb[0].mxu0
  %515 = vmatprep.mubr.bf16.mxu0 0
  %516 = vmatmul.mubr.bf16.gmra.mrb[0].mxu0 %v302
  %v517 = vpop.f32.mrb[0].mxu0
  %v518 = vadd.f32 %v81, %v517
  %v519 = vpop.f32.mrb[0].mxu0
  %v520 = vpop.f32.mrb[0].mxu0
  %v521 = vadd.f32 %v81, %v520
  %v522 = vpop.f32.mrb[0].mxu0
  %523 = vmatprep.mubr.bf16.mxu0 0
  %524 = vmatmul.mubr.bf16.gmra.mrb[0].mxu0 %v305
  %v525 = vpop.f32.mrb[0].mxu0
  %v526 = vadd.f32 %v81, %v525
  %v527 = vpop.f32.mrb[0].mxu0
  %v528 = vpop.f32.mrb[0].mxu0
  %v529 = vadd.f32 %v81, %v528
  %v530 = vpop.f32.mrb[0].mxu0
  %531 = vmatprep.mubr.bf16.mxu0 0
  %532 = vmatmul.mubr.bf16.gmra.mrb[0].mxu0 %v308
  %v533 = vpop.f32.mrb[0].mxu0
  %v534 = vadd.f32 %v81, %v533
  %v535 = vpop.f32.mrb[0].mxu0
  %v536 = vpop.f32.mrb[0].mxu0
  %v537 = vadd.f32 %v81, %v536
  %v538 = vpop.f32.mrb[0].mxu0
  %539 = vmatprep.mubr.bf16.mxu0 0
  %540 = vmatmul.mubr.bf16.gmra.mrb[0].mxu0 %v311
  %v541 = vpop.f32.mrb[0].mxu0
  %v542 = vadd.f32 %v81, %v541
  %v543 = vpop.f32.mrb[0].mxu0
  %v544 = vpop.f32.mrb[0].mxu0
  %v545 = vadd.f32 %v81, %v544
  %v546 = vpop.f32.mrb[0].mxu0
  %547 = vmatprep.mubr.bf16.mxu0 0
  %548 = vmatmul.mubr.bf16.gmra.mrb[0].mxu0 %v314
  %v549 = vpop.f32.mrb[0].mxu0
  %v550 = vadd.f32 %v81, %v549
  %v551 = vpop.f32.mrb[0].mxu0
  %v552 = vpop.f32.mrb[0].mxu0
  %v553 = vadd.f32 %v81, %v552
  %v554 = vpop.f32.mrb[0].mxu0
  %555 = vmatprep.mubr.bf16.mxu0 0
  %556 = vmatmul.mubr.bf16.gmra.mrb[0].mxu0 %v317
  %v557 = vpop.f32.mrb[0].mxu0
  %v558 = vadd.f32 %v81, %v557
  %v559 = vpop.f32.mrb[0].mxu0
  %v560 = vpop.f32.mrb[0].mxu0
  %v561 = vadd.f32 %v81, %v560
  %v562 = vpop.f32.mrb[0].mxu0
  %563 = vdwg.mxu0
  %v564 = vmax.f32 %v358, 0.0
  %v565 = vmax.f32 %v361, 0.0
  %v566 = vmax.f32 %v366, 0.0
  %v567 = vmax.f32 %v369, 0.0
  %v568 = vmax.f32 %v374, 0.0
  %v569 = vmax.f32 %v377, 0.0
  %v570 = vmax.f32 %v382, 0.0
  %v571 = vmax.f32 %v385, 0.0
  %v572 = vmax.f32 %v390, 0.0
  %v573 = vmax.f32 %v393, 0.0
  %v574 = vmax.f32 %v398, 0.0
  %v575 = vmax.f32 %v401, 0.0
  %v576 = vmax.f32 %v406, 0.0
  %v577 = vmax.f32 %v409, 0.0
  %v578 = vmax.f32 %v414, 0.0
  %v579 = vmax.f32 %v417, 0.0
  %v580 = vmax.f32 %v422, 0.0
  %v581 = vmax.f32 %v425, 0.0
  %v582 = vmax.f32 %v430, 0.0
  %v583 = vmax.f32 %v433, 0.0
  %v584 = vmax.f32 %v438, 0.0
  %v585 = vmax.f32 %v441, 0.0
  %v586 = vmax.f32 %v446, 0.0
  %v587 = vmax.f32 %v449, 0.0
  %v588 = vmax.f32 %v454, 0.0
  %v589 = vmax.f32 %v457, 0.0
  %v590 = vmax.f32 %v462, 0.0
  %v591 = vmax.f32 %v465, 0.0
  %v592 = vmax.f32 %v470, 0.0
  %v593 = vmax.f32 %v473, 0.0
  %v594 = vmax.f32 %v478, 0.0
  %v595 = vmax.f32 %v481, 0.0
  %v596 = vmax.f32 %v486, 0.0
  %v597 = vmax.f32 %v489, 0.0
  %v598 = vmax.f32 %v494, 0.0
  %v599 = vmax.f32 %v497, 0.0
  %v600 = vmax.f32 %v502, 0.0
  %v601 = vmax.f32 %v505, 0.0
  %v602 = vmax.f32 %v510, 0.0
  %v603 = vmax.f32 %v513, 0.0
  %v604 = vmax.f32 %v518, 0.0
  %v605 = vmax.f32 %v521, 0.0
  %v606 = vmax.f32 %v526, 0.0
  %v607 = vmax.f32 %v529, 0.0
  %v608 = vmax.f32 %v534, 0.0
  %v609 = vmax.f32 %v537, 0.0
  %v610 = vmax.f32 %v542, 0.0
  %v611 = vmax.f32 %v545, 0.0
  %v612 = vmax.f32 %v550, 0.0
  %v613 = vmax.f32 %v553, 0.0
  %v614 = vmax.f32 %v558, 0.0
  %v615 = vmax.f32 %v561, 0.0
  %v616 = vmax.f32 %v564, %v577
  %v617 = vmax.f32 %v565, %v578
  %v618 = vmax.f32 %v566, %v579
  %v619 = vmax.f32 %v567, %v580
  %v620 = vmax.f32 %v568, %v581
  %v621 = vmax.f32 %v569, %v582
  %v622 = vmax.f32 %v570, %v583
  %v623 = vmax.f32 %v571, %v584
  %v624 = vmax.f32 %v572, %v585
  %v625 = vmax.f32 %v573, %v586
  %v626 = vmax.f32 %v574, %v587
  %v627 = vmax.f32 %v575, %v588
  %v628 = vmax.f32 %v576, %v589
  %v629 = vmax.f32 %v590, %v603
  %v630 = vmax.f32 %v591, %v604
  %v631 = vmax.f32 %v592, %v605
  %v632 = vmax.f32 %v593, %v606
  %v633 = vmax.f32 %v594, %v607
  %v634 = vmax.f32 %v595, %v608
  %v635 = vmax.f32 %v596, %v609
  %v636 = vmax.f32 %v597, %v610
  %v637 = vmax.f32 %v598, %v611
  %v638 = vmax.f32 %v599, %v612
  %v639 = vmax.f32 %v600, %v613
  %v640 = vmax.f32 %v601, %v614
  %v641 = vmax.f32 %v602, %v615
  %v642 = vmax.f32 %v616, %v629
  %v643 = vmax.f32 %v617, %v630
  %v644 = vmax.f32 %v618, %v631
  %v645 = vmax.f32 %v619, %v632
  %v646 = vmax.f32 %v620, %v633
  %v647 = vmax.f32 %v621, %v634
  %v648 = vmax.f32 %v622, %v635
  %v649 = vmax.f32 %v623, %v636
  %v650 = vmax.f32 %v624, %v637
  %v651 = vmax.f32 %v625, %v638
  %v652 = vmax.f32 %v626, %v639
  %v653 = vmax.f32 %v627, %v640
  %v654 = vmax.f32 %v628, %v641
  %v655 = vpack.c.bf16 %v643, %v642
  %v656 = vpack.c.bf16 %v645, %v644
  %v657 = vpack.c.bf16 %v647, %v646
  %v658 = vpack.c.bf16 %v649, %v648
  %v659 = vpack.c.bf16 %v651, %v650
  %v660 = vpack.c.bf16 %v653, %v652
  %v661 = vpack.c.bf16 %v654, %v654
  %v669 = vunpack.c.l.b16 %v655
  %v670 = vunpack.c.h.b16 %v655
  %v671 = vunpack.c.l.b16 %v656
  %v672 = vunpack.c.h.b16 %v656
  %v673 = vunpack.c.l.b16 %v657
  %v674 = vunpack.c.h.b16 %v657
  %v675 = vunpack.c.l.b16 %v658
  %v676 = vunpack.c.h.b16 %v658
  %v677 = vunpack.c.l.b16 %v659
  %v678 = vunpack.c.h.b16 %v659
  %v679 = vunpack.c.l.b16 %v660
  %v680 = vunpack.c.h.b16 %v660
  %v681 = vunpack.c.l.b16 %v661
  %v682 = vpack.c.b16 %v669, %v669
  %v683 = vpack.c.b16 %v670, %v670
  %v684 = vpack.c.b16 %v671, %v671
  %v685 = vpack.c.b16 %v672, %v672
  %v686 = vpack.c.b16 %v673, %v673
  %v687 = vpack.c.b16 %v674, %v674
  %v688 = vpack.c.b16 %v675, %v675
  %v689 = vpack.c.b16 %v676, %v676
  %v690 = vpack.c.b16 %v677, %v677
  %v691 = vpack.c.b16 %v678, %v678
  %v692 = vpack.c.b16 %v679, %v679
  %v693 = vpack.c.b16 %v680, %v680
  %v694 = vpack.c.b16 %v681, %v681
  %vm708 = vcmask 125952
  %709 = vst.msk [vmem:[%s3] sm:$0xf] %vm708, %v682
  %710 = vst.msk [vmem:[%s3 + $0x4] sm:$0xf] %vm708, %v683
  %711 = vst.msk [vmem:[%s3 + $0x8] sm:$0xf] %vm708, %v684
  %712 = vst.msk [vmem:[%s3 + $0xc] sm:$0xf] %vm708, %v685
  %713 = vst.msk [vmem:[%s3 + $0x10] sm:$0xf] %vm708, %v686
  %714 = vst.msk [vmem:[%s3 + $0x14] sm:$0xf] %vm708, %v687
  %715 = vst.msk [vmem:[%s3 + $0x18] sm:$0xf] %vm708, %v688
  %716 = vst.msk [vmem:[%s3 + $0x1c] sm:$0xf] %vm708, %v689
  %717 = vst.msk [vmem:[%s3 + $0x20] sm:$0xf] %vm708, %v690
  %718 = vst.msk [vmem:[%s3 + $0x24] sm:$0xf] %vm708, %v691
  %719 = vst.msk [vmem:[%s3 + $0x28] sm:$0xf] %vm708, %v692
  %720 = vst.msk [vmem:[%s3 + $0x2c] sm:$0xf] %vm708, %v693
  %721 = vst.msk [vmem:[%s3 + $0x30] sm:$0xf] %vm708, %v694
  // Predicated region
  $region14: #{convnet_forward.4} parent=0 // pred_check
    _
  $region15: #{convnet_forward.4} parent=0 // pred_check_branch
    %723 = sbr.rel (0) target = $region17
  $region16: #{convnet_forward.4} parent=0 // pred_region
    _
  $region17: #{convnet_forward.4} parent=0 // pred_fallthru
    _
  // Predicated region
  $region18: #{convnet_forward.4} parent=0 // pred_check
    _
  $region19: #{convnet_forward.4} parent=0 // pred_check_branch
    %725 = sbr.rel (0) target = $region21
  $region20: #{convnet_forward.4} parent=0 // pred_region
    _
  $region21: #{convnet_forward.4} parent=0 // pred_fallthru
    _

// kernel: convnet_forward.5
$region0: #{convnet_forward.5}
  #allocation0 [shape = 'u32[]', space=smem, size = 0x4, offset = 0x4, fixed_abs, tag = 'smem constant byte address 0x4 - core index']
  #allocation1 [shape = 'u32[144,128]{1,0:T(1,128)}', space=vmem, size = 0x12000, scoped, tag = 'internal scratch']
  #allocation2 [shape = 'f32[24,32]{1,0:T(8,128)}', space=vmem, size = 0x3000, scoped, tag = 'scratch operand']
  #allocation3 [shape = 'f32[2,288]{1,0:T(2,128)}', space=vmem, size = 0xc00, scoped, tag = 'scratch operand']
  %s0 = inlined_call_operand.vmem [shape: bf16[96,144], index: 0, kind: input, shape index: {}]
  %s1 = inlined_call_operand.vmem [shape: bf16[144,32], index: 1, kind: input, shape index: {}]
  %s2 = inlined_call_operand.vmem [shape: f32[1,32], index: 2, kind: input, shape index: {}]
  %s3 = inlined_call_operand.vmem [shape: bf16[288,64], index: 3, kind: input, shape index: {}]
  %s4 = inlined_call_operand.vmem [shape: f32[1,64], index: 4, kind: input, shape index: {}]
  %s5 = inlined_call_operand.vmem [shape: bf16[64,10], index: 5, kind: input, shape index: {}]
  %s6 = inlined_call_operand.vmem [shape: f32[1,10], index: 6, kind: input, shape index: {}]
  %s7 = inlined_call_operand.hbm [shape: f32[2,10], index: 7, kind: output, shape index: {}]
  %s8 = sld [smem:[#allocation0]]
  $region38: #{convnet_forward.5} parent=0
    _
  %s10 = ssub.s32 1, %s8
  %s11 = scalar_select 0, %s10, %s8
  $region1: #{convnet_forward.5} parent=0
    #allocation4 [shape = 'u8[1024]{0}', space=vmem, size = 0x400, scoped, tag = 'output window, operand 0, single buffered']
    #allocation5 [shape = 's32[1]{0}', space=sflag, size = 0x4, scoped, tag = 'scoped memory for convnet_forward.5']
    %12 = vsyncpa [#allocation5], 0
    // Predicated region
    $region2: #{convnet_forward.5} parent=1 // pred_check
      _
    $region3: #{convnet_forward.5} parent=1 // pred_check_branch
      %14 = sbr.rel (0) target = $region5
    $region4: #{convnet_forward.5} parent=1 // pred_region
      _
    $region5: #{convnet_forward.5} parent=1 // pred_fallthru
      _
    // Predicated region
    $region6: #{convnet_forward.5} parent=1 // pred_check
      _
    $region7: #{convnet_forward.5} parent=1 // pred_check_branch
      %16 = sbr.rel (0) target = $region9
    $region8: #{convnet_forward.5} parent=1 // pred_region
      _
    $region9: #{convnet_forward.5} parent=1 // pred_fallthru
      _
    // Predicated region
    $region10: #{convnet_forward.5} parent=1 // pred_check
      _
    $region11: #{convnet_forward.5} parent=1 // pred_check_branch
      %18 = sbr.rel (0) target = $region13
    $region12: #{convnet_forward.5} parent=1 // pred_region
      _
    $region13: #{convnet_forward.5} parent=1 // pred_fallthru
      _
    // Predicated region
    $region14: #{convnet_forward.5} parent=1 // pred_check
      _
    $region15: #{convnet_forward.5} parent=1 // pred_check_branch
      %20 = sbr.rel (0) target = $region17
    $region16: #{convnet_forward.5} parent=1 // pred_region
      _
    $region17: #{convnet_forward.5} parent=1 // pred_fallthru
      _
    // Predicated region
    $region18: #{convnet_forward.5} parent=1 // pred_check
      _
    $region19: #{convnet_forward.5} parent=1 // pred_check_branch
      %22 = sbr.rel (0) target = $region21
    $region20: #{convnet_forward.5} parent=1 // pred_region
      _
    $region21: #{convnet_forward.5} parent=1 // pred_fallthru
      _
    // Predicated region
    $region22: #{convnet_forward.5} parent=1 // pred_check
      _
    $region23: #{convnet_forward.5} parent=1 // pred_check_branch
      %24 = sbr.rel (0) target = $region25
    $region24: #{convnet_forward.5} parent=1 // pred_region
      _
    $region25: #{convnet_forward.5} parent=1 // pred_fallthru
      _
    // Predicated region
    $region26: #{convnet_forward.5} parent=1 // pred_check
      _
    $region27: #{convnet_forward.5} parent=1 // pred_check_branch
      %26 = sbr.rel (0) target = $region29
    $region28: #{convnet_forward.5} parent=1 // pred_region
      _
    $region29: #{convnet_forward.5} parent=1 // pred_fallthru
      _
    %v28 = vld [vmem:[%s0] sm:$0xff]
    %v29 = vld [vmem:[%s0 + $0x8] sm:$0xff]
    %v30 = vld [vmem:[%s0 + $0x10] sm:$0xff]
    %v31 = vld [vmem:[%s0 + $0x18] sm:$0xff]
    %v32 = vld [vmem:[%s0 + $0x20] sm:$0xff]
    %v33 = vld [vmem:[%s0 + $0x28] sm:$0xff]
    %v34 = vld [vmem:[%s0 + $0x30] sm:$0xff]
    %v35 = vld [vmem:[%s0 + $0x38] sm:$0xff]
    %v36 = vld [vmem:[%s0 + $0x40] sm:$0xff]
    %v37 = vld [vmem:[%s0 + $0x48] sm:$0xff]
    %v38 = vld [vmem:[%s0 + $0x50] sm:$0xff]
    %v39 = vld [vmem:[%s0 + $0x58] sm:$0xff]
    %v40 = vld [vmem:[%s1] sm:$0xf]
    %v41 = vld [vmem:[%s1 + $0x4] sm:$0xf]
    %v42 = vld [vmem:[%s1 + $0x8] sm:$0xf]
    %v43 = vld [vmem:[%s1 + $0xc] sm:$0xf]
    %v44 = vld [vmem:[%s1 + $0x10] sm:$0xf]
    %v45 = vld [vmem:[%s1 + $0x14] sm:$0xf]
    %v46 = vld [vmem:[%s1 + $0x18] sm:$0xf]
    %v47 = vld [vmem:[%s1 + $0x1c] sm:$0xf]
    %v48 = vld [vmem:[%s1 + $0x20] sm:$0xf]
    %v49 = vld [vmem:[%s1 + $0x24] sm:$0xf]
    %v50 = vld [vmem:[%s1 + $0x28] sm:$0xf]
    %v51 = vld [vmem:[%s1 + $0x2c] sm:$0xf]
    %v52 = vld [vmem:[%s1 + $0x30] sm:$0xf]
    %v53 = vld [vmem:[%s1 + $0x34] sm:$0xf]
    %v54 = vld [vmem:[%s1 + $0x38] sm:$0xf]
    %v55 = vld [vmem:[%s1 + $0x3c] sm:$0xf]
    %v56 = vld [vmem:[%s1 + $0x40] sm:$0xf]
    %v57 = vld [vmem:[%s1 + $0x44] sm:$0xf]
    %v58 = vld [vmem:[%s2] sm:$0x1]
    %v60 = vlaneseq
    %v61 = vshrl.u32 %v60, 7
    %v62 = vsub.s32 0, %v61
    %v63 = vrot.slane %v58, %v62
    %v77 = vunpack.c.l.b16 %v28
    %v78 = vunpack.c.h.b16 %v28
    %v79 = vunpack.c.l.b16 %v29
    %v80 = vunpack.c.h.b16 %v29
    %v81 = vunpack.c.l.b16 %v30
    %v82 = vunpack.c.h.b16 %v30
    %v83 = vunpack.c.l.b16 %v31
    %v84 = vunpack.c.h.b16 %v31
    %v85 = vunpack.c.l.b16 %v32
    %v86 = vunpack.c.h.b16 %v32
    %v87 = vunpack.c.l.b16 %v33
    %v88 = vunpack.c.h.b16 %v33
    %v89 = vunpack.c.l.b16 %v34
    %v90 = vunpack.c.h.b16 %v34
    %v91 = vunpack.c.l.b16 %v35
    %v92 = vunpack.c.h.b16 %v35
    %v93 = vunpack.c.l.b16 %v36
    %v94 = vunpack.c.h.b16 %v36
    %v95 = vunpack.c.l.b16 %v37
    %v96 = vunpack.c.h.b16 %v37
    %v97 = vunpack.c.l.b16 %v38
    %v98 = vunpack.c.h.b16 %v38
    %v99 = vunpack.c.l.b16 %v39
    %v100 = vunpack.c.h.b16 %v39
    %v101 = vpack.c.b16 %v79, %v77
    %v102 = vpack.c.b16 %v80, %v78
    %v103 = vpack.c.b16 %v83, %v81
    %v104 = vpack.c.b16 %v84, %v82
    %v105 = vpack.c.b16 %v87, %v85
    %v106 = vpack.c.b16 %v88, %v86
    %v107 = vpack.c.b16 %v91, %v89
    %v108 = vpack.c.b16 %v92, %v90
    %v109 = vpack.c.b16 %v95, %v93
    %v110 = vpack.c.b16 %v96, %v94
    %v111 = vpack.c.b16 %v99, %v97
    %v112 = vpack.c.b16 %v100, %v98
    %v137 = vunpack.c.l.b16 %v40
    %v138 = vunpack.c.l.b16 %v41
    %v139 = vunpack.c.l.b16 %v42
    %v140 = vunpack.c.l.b16 %v43
    %v141 = vunpack.c.l.b16 %v44
    %v142 = vunpack.c.l.b16 %v45
    %v143 = vunpack.c.l.b16 %v46
    %v144 = vunpack.c.l.b16 %v47
    %v145 = vunpack.c.l.b16 %v48
    %v146 = vunpack.c.l.b16 %v49
    %v147 = vunpack.c.l.b16 %v50
    %v148 = vunpack.c.l.b16 %v51
    %v149 = vunpack.c.l.b16 %v52
    %v150 = vunpack.c.l.b16 %v53
    %v151 = vunpack.c.l.b16 %v54
    %v152 = vunpack.c.l.b16 %v55
    %v153 = vunpack.c.l.b16 %v56
    %v154 = vunpack.c.l.b16 %v57
    %v155 = vpack.c.b16 %v138, %v137
    %v156 = vpack.c.b16 %v140, %v139
    %v157 = vpack.c.b16 %v142, %v141
    %v158 = vpack.c.b16 %v144, %v143
    %v159 = vpack.c.b16 %v146, %v145
    %v160 = vpack.c.b16 %v148, %v147
    %v161 = vpack.c.b16 %v150, %v149
    %v162 = vpack.c.b16 %v152, %v151
    %v163 = vpack.c.b16 %v154, %v153
    %vm173 = vcmask 130048
    %v175 = vsel %vm173, %v102, 0
    %v178 = vsel %vm173, %v104, 0
    %v181 = vsel %vm173, %v106, 0
    %v184 = vsel %vm173, %v108, 0
    %v187 = vsel %vm173, %v110, 0
    %v190 = vsel %vm173, %v112, 0
    %192 = vmatprep.subr.bf16.mxu0 0
    %193 = vmatpush1.bf16.msra.mxu0 %v155
    %194 = vmatprep.subr.bf16.mxu0 0
    %195 = vmatpush1.bf16.msra.mxu0 %v156
    %196 = vmatprep.subr.bf16.mxu0 0
    %197 = vmatpush1.bf16.msra.mxu0 %v157
    %198 = vmatprep.subr.bf16.mxu0 0
    %199 = vmatpush1.bf16.msra.mxu0 %v158
    %200 = vmatprep.subr.bf16.mxu0 0
    %201 = vmatpush1.bf16.msra.mxu0 %v159
    %202 = vmatprep.subr.bf16.mxu0 0
    %203 = vmatpush1.bf16.msra.mxu0 %v160
    %204 = vmatprep.subr.bf16.mxu0 0
    %205 = vmatpush1.bf16.msra.mxu0 %v161
    %206 = vmatprep.subr.bf16.mxu0 0
    %207 = vmatpush1.bf16.msra.mxu0 %v162
    %208 = vmatprep.subr.bf16.mxu0 0
    %209 = vmatpush1.bf16.msra.mxu0 %v163
    %210 = vmatprep.subr.bf16.mxu0 0
    %211 = vmatpush1.bf16.msra.mxu0 0
    %212 = vmatprep.subr.bf16.mxu0 0
    %213 = vmatpush1.bf16.msra.mxu0 0
    %214 = vmatprep.subr.bf16.mxu0 0
    %215 = vmatpush1.bf16.msra.mxu0 0
    %216 = vmatprep.subr.bf16.mxu0 0
    %217 = vmatpush1.bf16.msra.mxu0 0
    %218 = vmatprep.subr.bf16.mxu0 0
    %219 = vmatpush1.bf16.msra.mxu0 0
    %220 = vmatprep.subr.bf16.mxu0 0
    %221 = vmatpush1.bf16.msra.mxu0 0
    %222 = vmatprep.subr.bf16.mxu0 0
    %223 = vmatpush1.bf16.msra.mxu0 0
    %224 = vmatprep.mubr.bf16.mxu0 %v175
    %225 = vmatmul.mubr.bf16.gmra.mrb[0].mxu0 %v101
    %v226 = vpop.f32.mrb[0].mxu0
    %v227 = vadd.f32 %v63, %v226
    %v228 = vpop.f32.mrb[0].mxu0
    %v229 = vpop.f32.mrb[0].mxu0
    %v230 = vadd.f32 %v63, %v229
    %v231 = vpop.f32.mrb[0].mxu0
    %232 = vmatprep.mubr.bf16.mxu0 %v178
    %233 = vmatmul.mubr.bf16.gmra.mrb[0].mxu0 %v103
    %v234 = vpop.f32.mrb[0].mxu0
    %v235 = vadd.f32 %v63, %v234
    %v236 = vpop.f32.mrb[0].mxu0
    %v237 = vpop.f32.mrb[0].mxu0
    %v238 = vadd.f32 %v63, %v237
    %v239 = vpop.f32.mrb[0].mxu0
    %240 = vmatprep.mubr.bf16.mxu0 %v181
    %241 = vmatmul.mubr.bf16.gmra.mrb[0].mxu0 %v105
    %v242 = vpop.f32.mrb[0].mxu0
    %v243 = vadd.f32 %v63, %v242
    %v244 = vpop.f32.mrb[0].mxu0
    %v245 = vpop.f32.mrb[0].mxu0
    %v246 = vadd.f32 %v63, %v245
    %v247 = vpop.f32.mrb[0].mxu0
    %248 = vmatprep.mubr.bf16.mxu0 %v184
    %249 = vmatmul.mubr.bf16.gmra.mrb[0].mxu0 %v107
    %v250 = vpop.f32.mrb[0].mxu0
    %v251 = vadd.f32 %v63, %v250
    %v252 = vpop.f32.mrb[0].mxu0
    %v253 = vpop.f32.mrb[0].mxu0
    %v254 = vadd.f32 %v63, %v253
    %v255 = vpop.f32.mrb[0].mxu0
    %256 = vmatprep.mubr.bf16.mxu0 %v187
    %257 = vmatmul.mubr.bf16.gmra.mrb[0].mxu0 %v109
    %v258 = vpop.f32.mrb[0].mxu0
    %v259 = vadd.f32 %v63, %v258
    %v260 = vpop.f32.mrb[0].mxu0
    %v261 = vpop.f32.mrb[0].mxu0
    %v262 = vadd.f32 %v63, %v261
    %v263 = vpop.f32.mrb[0].mxu0
    %264 = vmatprep.mubr.bf16.mxu0 %v190
    %265 = vmatmul.mubr.bf16.gmra.mrb[0].mxu0 %v111
    %v266 = vpop.f32.mrb[0].mxu0
    %v267 = vadd.f32 %v63, %v266
    %v268 = vpop.f32.mrb[0].mxu0
    %v269 = vpop.f32.mrb[0].mxu0
    %v270 = vadd.f32 %v63, %v269
    %v271 = vpop.f32.mrb[0].mxu0
    %272 = vdwg.mxu0
    %v273 = vmax.f32 %v227, 0.0
    %v274 = vmax.f32 %v230, 0.0
    %v275 = vmax.f32 %v235, 0.0
    %v276 = vmax.f32 %v238, 0.0
    %v277 = vmax.f32 %v243, 0.0
    %v278 = vmax.f32 %v246, 0.0
    %v279 = vmax.f32 %v251, 0.0
    %v280 = vmax.f32 %v254, 0.0
    %v281 = vmax.f32 %v259, 0.0
    %v282 = vmax.f32 %v262, 0.0
    %v283 = vmax.f32 %v267, 0.0
    %v284 = vmax.f32 %v270, 0.0
    %v285 = vmax.f32 %v273, %v276
    %v286 = vmax.f32 %v274, %v277
    %v287 = vmax.f32 %v275, %v278
    %v288 = vmax.f32 %v279, %v282
    %v289 = vmax.f32 %v280, %v283
    %v290 = vmax.f32 %v281, %v284
    %v291 = vmax.f32 %v285, %v288
    %v292 = vmax.f32 %v286, %v289
    %v293 = vmax.f32 %v287, %v290
    %vm294 = vcmask 261120
    %295 = vst.msk [vmem:[#allocation2] sm:$0xff] %vm294, %v291
    %296 = vst.msk [vmem:[#allocation2 + $0x8] sm:$0xff] %vm294, %v292
    %297 = vst.msk [vmem:[#allocation2 + $0x10] sm:$0xff] %vm294, %v293
    %v298 = vld [vmem:[#allocation2] sm:$0x1]
    %vm299 = vcmask 253952
    %300 = vst.msk [vmem:[#allocation3] sm:$0x1] %vm299, %v298
    %v301 = vld [vmem:[#allocation2 + $0x1] sm:$0x1]
    %v304 = vunpack.c.l.s4 1983009808
    %v305 = vunpack.c.0.s8 %v304
    %v306 = vlaneseq
    %v307 = vshrl.u32 %v306, 7
    %v308 = vsub.s32 %v305, %v307
    %v309 = vrot.slane %v301, %v308
    %310 = vrot.lane.b32.xlu0 %v309, 32
    %v311 = vpop.permute.xlu0 %310
    %vm313 = vcmask 516352
    %314 = vst.msk [vmem:[#allocation3] sm:$0x1] %vm313, %v311
    %v315 = vld [vmem:[#allocation2 + $0x2] sm:$0x1]
    %v318 = vunpack.c.l.s4 1983009808
    %v319 = vunpack.c.0.s8 %v318
    %v320 = vlaneseq
    %v321 = vshrl.u32 %v320, 7
    %v322 = vsub.s32 %v319, %v321
    %v323 = vrot.slane %v315, %v322
    %324 = vrot.lane.b32.xlu0 %v323, 64
    %v325 = vpop.permute.xlu0 %324
    %vm327 = vcmask 778752
    %328 = vst.msk [vmem:[#allocation3] sm:$0x1] %vm327, %v325
    %v329 = vld [vmem:[#allocation2 + $0x3] sm:$0x1]
    %v332 = vunpack.c.l.s4 1983009808
    %v333 = vunpack.c.0.s8 %v332
    %v334 = vlaneseq
    %v335 = vshrl.u32 %v334, 7
    %v336 = vsub.s32 %v333, %v335
    %v337 = vrot.slane %v329, %v336
    %338 = vrot.lane.b32.xlu0 %v337, 96
    %v339 = vpop.permute.xlu0 %338
    %vm341 = vcmask 1041152
    %342 = vst.msk [vmem:[#allocation3] sm:$0x1] %vm341, %v339
    %v343 = vld [vmem:[#allocation2 + $0x4] sm:$0x1]
    %344 = vst.msk [vmem:[#allocation3 + $0x2] sm:$0x1] %vm299, %v343
    %v345 = vld [vmem:[#allocation2 + $0x5] sm:$0x1]
    %v348 = vunpack.c.l.s4 1983009808
    %v349 = vunpack.c.0.s8 %v348
    %v350 = vlaneseq
    %v351 = vshrl.u32 %v350, 7
    %v352 = vsub.s32 %v349, %v351
    %v353 = vrot.slane %v345, %v352
    %354 = vrot.lane.b32.xlu0 %v353, 32
    %v355 = vpop.permute.xlu0 %354
    %357 = vst.msk [vmem:[#allocation3 + $0x2] sm:$0x1] %vm313, %v355
    %v358 = vld [vmem:[#allocation2 + $0x6] sm:$0x1]
    %v361 = vunpack.c.l.s4 1983009808
    %v362 = vunpack.c.0.s8 %v361
    %v363 = vlaneseq
    %v364 = vshrl.u32 %v363, 7
    %v365 = vsub.s32 %v362, %v364
    %v366 = vrot.slane %v358, %v365
    %367 = vrot.lane.b32.xlu0 %v366, 64
    %v368 = vpop.permute.xlu0 %367
    %370 = vst.msk [vmem:[#allocation3 + $0x2] sm:$0x1] %vm327, %v368
    %v371 = vld [vmem:[#allocation2 + $0x7] sm:$0x1]
    %v374 = vunpack.c.l.s4 1983009808
    %v375 = vunpack.c.0.s8 %v374
    %v376 = vlaneseq
    %v377 = vshrl.u32 %v376, 7
    %v378 = vsub.s32 %v375, %v377
    %v379 = vrot.slane %v371, %v378
    %380 = vrot.lane.b32.xlu0 %v379, 96
    %v381 = vpop.permute.xlu0 %380
    %383 = vst.msk [vmem:[#allocation3 + $0x2] sm:$0x1] %vm341, %v381
    %v384 = vld [vmem:[#allocation2 + $0x8] sm:$0x1]
    %385 = vst.msk [vmem:[#allocation3 + $0x4] sm:$0x1] %vm299, %v384
    %v386 = vld [vmem:[#allocation2 + $0x9] sm:$0x1]
    %387 = vst.msk [vmem:[#allocation3 + $0x1] sm:$0x1] %vm299, %v386
    %v388 = vld [vmem:[#allocation2 + $0xa] sm:$0x1]
    %v391 = vunpack.c.l.s4 1983009808
    %v392 = vunpack.c.0.s8 %v391
    %v393 = vlaneseq
    %v394 = vshrl.u32 %v393, 7
    %v395 = vsub.s32 %v392, %v394
    %v396 = vrot.slane %v388, %v395
    %397 = vrot.lane.b32.xlu0 %v396, 32
    %v398 = vpop.permute.xlu0 %397
    %400 = vst.msk [vmem:[#allocation3 + $0x1] sm:$0x1] %vm313, %v398
    %v401 = vld [vmem:[#allocation2 + $0xb] sm:$0x1]
    %v404 = vunpack.c.l.s4 1983009808
    %v405 = vunpack.c.0.s8 %v404
    %v406 = vlaneseq
    %v407 = vshrl.u32 %v406, 7
    %v408 = vsub.s32 %v405, %v407
    %v409 = vrot.slane %v401, %v408
    %410 = vrot.lane.b32.xlu0 %v409, 64
    %v411 = vpop.permute.xlu0 %410
    %413 = vst.msk [vmem:[#allocation3 + $0x1] sm:$0x1] %vm327, %v411
    %v414 = vld [vmem:[#allocation2 + $0xc] sm:$0x1]
    %v417 = vunpack.c.l.s4 1983009808
    %v418 = vunpack.c.0.s8 %v417
    %v419 = vlaneseq
    %v420 = vshrl.u32 %v419, 7
    %v421 = vsub.s32 %v418, %v420
    %v422 = vrot.slane %v414, %v421
    %423 = vrot.lane.b32.xlu0 %v422, 96
    %v424 = vpop.permute.xlu0 %423
    %426 = vst.msk [vmem:[#allocation3 + $0x1] sm:$0x1] %vm341, %v424
    %v427 = vld [vmem:[#allocation2 + $0xd] sm:$0x1]
    %428 = vst.msk [vmem:[#allocation3 + $0x3] sm:$0x1] %vm299, %v427
    %v429 = vld [vmem:[#allocation2 + $0xe] sm:$0x1]
    %v432 = vunpack.c.l.s4 1983009808
    %v433 = vunpack.c.0.s8 %v432
    %v434 = vlaneseq
    %v435 = vshrl.u32 %v434, 7
    %v436 = vsub.s32 %v433, %v435
    %v437 = vrot.slane %v429, %v436
    %438 = vrot.lane.b32.xlu0 %v437, 32
    %v439 = vpop.permute.xlu0 %438
    %441 = vst.msk [vmem:[#allocation3 + $0x3] sm:$0x1] %vm313, %v439
    %v442 = vld [vmem:[#allocation2 + $0xf] sm:$0x1]
    %v445 = vunpack.c.l.s4 1983009808
    %v446 = vunpack.c.0.s8 %v445
    %v447 = vlaneseq
    %v448 = vshrl.u32 %v447, 7
    %v449 = vsub.s32 %v446, %v448
    %v450 = vrot.slane %v442, %v449
    %451 = vrot.lane.b32.xlu0 %v450, 64
    %v452 = vpop.permute.xlu0 %451
    %454 = vst.msk [vmem:[#allocation3 + $0x3] sm:$0x1] %vm327, %v452
    %v455 = vld [vmem:[#allocation2 + $0x10] sm:$0x1]
    %v458 = vunpack.c.l.s4 1983009808
    %v459 = vunpack.c.0.s8 %v458
    %v460 = vlaneseq
    %v461 = vshrl.u32 %v460, 7
    %v462 = vsub.s32 %v459, %v461
    %v463 = vrot.slane %v455, %v462
    %464 = vrot.lane.b32.xlu0 %v463, 96
    %v465 = vpop.permute.xlu0 %464
    %467 = vst.msk [vmem:[#allocation3 + $0x3] sm:$0x1] %vm341, %v465
    %v468 = vld [vmem:[#allocation2 + $0x11] sm:$0x1]
    %469 = vst.msk [vmem:[#allocation3 + $0x5] sm:$0x1] %vm299, %v468
    %v470 = vld [vmem:[#allocation3] sm:$0x3f]
    %v472 = vcombine.high %v470, %v470
    %v474 = vunpack.c.l.s4 1983009808
    %v475 = vunpack.c.0.s8 %v474
    %v476 = vlaneseq
    %v477 = vshrl.u32 %v476, 7
    %v478 = vsub.s32 %v475, %v477
    %v479 = vrot.slane %v470, %v478
    %v481 = vunpack.c.l.s4 1983009808
    %v482 = vunpack.c.0.s8 %v481
    %v483 = vlaneseq
    %v484 = vshrl.u32 %v483, 7
    %v485 = vsub.s32 %v482, %v484
    %v486 = vrot.slane %v472, %v485
    %v487 = vcombine.high %v479, %v479
    %v491 = vpack.c.bf16 %v479, %v479
    %v492 = vpack.c.bf16 %v487, %v487
    %v493 = vpack.c.bf16 %v486, %v486
    %v494 = vld [vmem:[%s3] sm:$0xf]
    %v495 = vld [vmem:[%s3 + $0x4] sm:$0xf]
    %v496 = vld [vmem:[%s3 + $0x8] sm:$0xf]
    %v497 = vld [vmem:[%s3 + $0xc] sm:$0xf]
    %v498 = vld [vmem:[%s3 + $0x10] sm:$0xf]
    %v499 = vld [vmem:[%s3 + $0x14] sm:$0xf]
    %v500 = vld [vmem:[%s3 + $0x18] sm:$0xf]
    %v501 = vld [vmem:[%s3 + $0x1c] sm:$0xf]
    %v502 = vld [vmem:[%s3 + $0x20] sm:$0xf]
    %v503 = vld [vmem:[%s3 + $0x24] sm:$0xf]
    %v504 = vld [vmem:[%s3 + $0x28] sm:$0xf]
    %v505 = vld [vmem:[%s3 + $0x2c] sm:$0xf]
    %v506 = vld [vmem:[%s3 + $0x30] sm:$0xf]
    %v507 = vld [vmem:[%s3 + $0x34] sm:$0xf]
    %v508 = vld [vmem:[%s3 + $0x38] sm:$0xf]
    %v509 = vld [vmem:[%s3 + $0x3c] sm:$0xf]
    %v510 = vld [vmem:[%s3 + $0x40] sm:$0xf]
    %v511 = vld [vmem:[%s3 + $0x44] sm:$0xf]
    %v512 = vld [vmem:[%s3 + $0x48] sm:$0xf]
    %v513 = vld [vmem:[%s3 + $0x4c] sm:$0xf]
    %v514 = vld [vmem:[%s3 + $0x50] sm:$0xf]
    %v515 = vld [vmem:[%s3 + $0x54] sm:$0xf]
    %v516 = vld [vmem:[%s3 + $0x58] sm:$0xf]
    %v517 = vld [vmem:[%s3 + $0x5c] sm:$0xf]
    %v518 = vld [vmem:[%s3 + $0x60] sm:$0xf]
    %v519 = vld [vmem:[%s3 + $0x64] sm:$0xf]
    %v520 = vld [vmem:[%s3 + $0x68] sm:$0xf]
    %v521 = vld [vmem:[%s3 + $0x6c] sm:$0xf]
    %v522 = vld [vmem:[%s3 + $0x70] sm:$0xf]
    %v523 = vld [vmem:[%s3 + $0x74] sm:$0xf]
    %v524 = vld [vmem:[%s3 + $0x78] sm:$0xf]
    %v525 = vld [vmem:[%s3 + $0x7c] sm:$0xf]
    %v526 = vld [vmem:[%s3 + $0x80] sm:$0xf]
    %v527 = vld [vmem:[%s3 + $0x84] sm:$0xf]
    %v528 = vld [vmem:[%s3 + $0x88] sm:$0xf]
    %v529 = vld [vmem:[%s3 + $0x8c] sm:$0xf]
    %v530 = vld [vmem:[%s4] sm:$0x1]
    %v532 = vlaneseq
    %v533 = vshrl.u32 %v532, 7
    %v534 = vsub.s32 0, %v533
    %v535 = vrot.slane %v530, %v534
    %v573 = vunpack.c.l.b16 %v494
    %v574 = vunpack.c.l.b16 %v495
    %v575 = vunpack.c.l.b16 %v496
    %v576 = vunpack.c.l.b16 %v497
    %v577 = vunpack.c.l.b16 %v498
    %v578 = vunpack.c.l.b16 %v499
    %v579 = vunpack.c.l.b16 %v500
    %v580 = vunpack.c.l.b16 %v501
    %v581 = vunpack.c.l.b16 %v502
    %v582 = vunpack.c.l.b16 %v503
    %v583 = vunpack.c.l.b16 %v504
    %v584 = vunpack.c.l.b16 %v505
    %v585 = vunpack.c.l.b16 %v506
    %v586 = vunpack.c.l.b16 %v507
    %v587 = vunpack.c.l.b16 %v508
    %v588 = vunpack.c.l.b16 %v509
    %v589 = vunpack.c.l.b16 %v510
    %v590 = vunpack.c.l.b16 %v511
    %v591 = vunpack.c.l.b16 %v512
    %v592 = vunpack.c.l.b16 %v513
    %v593 = vunpack.c.l.b16 %v514
    %v594 = vunpack.c.l.b16 %v515
    %v595 = vunpack.c.l.b16 %v516
    %v596 = vunpack.c.l.b16 %v517
    %v597 = vunpack.c.l.b16 %v518
    %v598 = vunpack.c.l.b16 %v519
    %v599 = vunpack.c.l.b16 %v520
    %v600 = vunpack.c.l.b16 %v521
    %v601 = vunpack.c.l.b16 %v522
    %v602 = vunpack.c.l.b16 %v523
    %v603 = vunpack.c.l.b16 %v524
    %v604 = vunpack.c.l.b16 %v525
    %v605 = vunpack.c.l.b16 %v526
    %v606 = vunpack.c.l.b16 %v527
    %v607 = vunpack.c.l.b16 %v528
    %v608 = vunpack.c.l.b16 %v529
    %v609 = vpack.c.b16 %v574, %v573
    %v610 = vpack.c.b16 %v576, %v575
    %v611 = vpack.c.b16 %v578, %v577
    %v612 = vpack.c.b16 %v580, %v579
    %v613 = vpack.c.b16 %v582, %v581
    %v614 = vpack.c.b16 %v584, %v583
    %v615 = vpack.c.b16 %v586, %v585
    %v616 = vpack.c.b16 %v588, %v587
    %v617 = vpack.c.b16 %v590, %v589
    %v618 = vpack.c.b16 %v592, %v591
    %v619 = vpack.c.b16 %v594, %v593
    %v620 = vpack.c.b16 %v596, %v595
    %v621 = vpack.c.b16 %v598, %v597
    %v622 = vpack.c.b16 %v600, %v599
    %v623 = vpack.c.b16 %v602, %v601
    %v624 = vpack.c.b16 %v604, %v603
    %v625 = vpack.c.b16 %v606, %v605
    %v626 = vpack.c.b16 %v608, %v607
    %v646 = vsel %vm294, %v493, 0
    %648 = vmatprep.subr.bf16.mxu0 0
    %649 = vmatpush1.bf16.msra.mxu0 %v609
    %650 = vmatprep.subr.bf16.mxu0 0
    %651 = vmatpush1.bf16.msra.mxu0 %v610
    %652 = vmatprep.subr.bf16.mxu0 0
    %653 = vmatpush1.bf16.msra.mxu0 %v611
    %654 = vmatprep.subr.bf16.mxu0 0
    %655 = vmatpush1.bf16.msra.mxu0 %v612
    %656 = vmatprep.subr.bf16.mxu0 0
    %657 = vmatpush1.bf16.msra.mxu0 %v613
    %658 = vmatprep.subr.bf16.mxu0 0
    %659 = vmatpush1.bf16.msra.mxu0 %v614
    %660 = vmatprep.subr.bf16.mxu0 0
    %661 = vmatpush1.bf16.msra.mxu0 %v615
    %662 = vmatprep.subr.bf16.mxu0 0
    %663 = vmatpush1.bf16.msra.mxu0 %v616
    %664 = vmatprep.subr.bf16.mxu0 0
    %665 = vmatpush1.bf16.msra.mxu0 %v617
    %666 = vmatprep.subr.bf16.mxu0 0
    %667 = vmatpush1.bf16.msra.mxu0 %v618
    %668 = vmatprep.subr.bf16.mxu0 0
    %669 = vmatpush1.bf16.msra.mxu0 %v619
    %670 = vmatprep.subr.bf16.mxu0 0
    %671 = vmatpush1.bf16.msra.mxu0 %v620
    %672 = vmatprep.subr.bf16.mxu0 0
    %673 = vmatpush1.bf16.msra.mxu0 %v621
    %674 = vmatprep.subr.bf16.mxu0 0
    %675 = vmatpush1.bf16.msra.mxu0 %v622
    %676 = vmatprep.subr.bf16.mxu0 0
    %677 = vmatpush1.bf16.msra.mxu0 %v623
    %678 = vmatprep.subr.bf16.mxu0 0
    %679 = vmatpush1.bf16.msra.mxu0 %v624
    %680 = vmatprep.mubr.bf16.mxu0 %v492
    %681 = vmatmul.mubr.bf16.gmra.mrb[0].mxu0 %v491
    %v682 = vpop.f32.mrb[0].mxu0
    %v683 = vadd.f32 %v535, %v682
    %v684 = vpop.f32.mrb[0].mxu0
    %v685 = vpop.f32.mrb[0].mxu0
    %v686 = vpop.f32.mrb[0].mxu0
    %687 = vdwg.mxu0
    %688 = vmatprep.subr.bf16.mxu0 0
    %689 = vmatpush1.bf16.msra.mxu0 %v625
    %690 = vmatprep.subr.bf16.mxu0 0
    %691 = vmatpush1.bf16.msra.mxu0 %v626
    %692 = vmatprep.subr.bf16.mxu0 0
    %693 = vmatpush1.bf16.msra.mxu0 0
    %694 = vmatprep.subr.bf16.mxu0 0
    %695 = vmatpush1.bf16.msra.mxu0 0
    %696 = vmatprep.subr.bf16.mxu0 0
    %697 = vmatpush1.bf16.msra.mxu0 0
    %698 = vmatprep.subr.bf16.mxu0 0
    %699 = vmatpush1.bf16.msra.mxu0 0
    %700 = vmatprep.subr.bf16.mxu0 0
    %701 = vmatpush1.bf16.msra.mxu0 0
    %702 = vmatprep.subr.bf16.mxu0 0
    %703 = vmatpush1.bf16.msra.mxu0 0
    %704 = vmatprep.subr.bf16.mxu0 0
    %705 = vmatpush1.bf16.msra.mxu0 0
    %706 = vmatprep.subr.bf16.mxu0 0
    %707 = vmatpush1.bf16.msra.mxu0 0
    %708 = vmatprep.subr.bf16.mxu0 0
    %709 = vmatpush1.bf16.msra.mxu0 0
    %710 = vmatprep.subr.bf16.mxu0 0
    %711 = vmatpush1.bf16.msra.mxu0 0
    %712 = vmatprep.subr.bf16.mxu0 0
    %713 = vmatpush1.bf16.msra.mxu0 0
    %714 = vmatprep.subr.bf16.mxu0 0
    %715 = vmatpush1.bf16.msra.mxu0 0
    %716 = vmatprep.subr.bf16.mxu0 0
    %717 = vmatpush1.bf16.msra.mxu0 0
    %718 = vmatprep.subr.bf16.mxu0 0
    %719 = vmatpush1.bf16.msra.mxu0 0
    %720 = vmatprep.mubr.bf16.mxu0 0
    %721 = vmatmul.mubr.bf16.gmra.mrb[0].mxu0 %v646
    %v722 = vpop.f32.mrb[0].mxu0
    %v723 = vadd.f32 %v683, %v722
    %v724 = vpop.f32.mrb[0].mxu0
    %v725 = vpop.f32.mrb[0].mxu0
    %v726 = vpop.f32.mrb[0].mxu0
    %727 = vdwg.mxu0
    %v728 = vmax.f32 %v723, 0.0
    %v729 = vpack.c.bf16 %v728, %v728
    %v730 = vld [vmem:[%s5] sm:$0xf]
    %v731 = vld [vmem:[%s5 + $0x4] sm:$0xf]
    %v732 = vld [vmem:[%s5 + $0x8] sm:$0xf]
    %v733 = vld [vmem:[%s5 + $0xc] sm:$0xf]
    %v734 = vld [vmem:[%s5 + $0x10] sm:$0xf]
    %v735 = vld [vmem:[%s5 + $0x14] sm:$0xf]
    %v736 = vld [vmem:[%s5 + $0x18] sm:$0xf]
    %v737 = vld [vmem:[%s5 + $0x1c] sm:$0xf]
    %v738 = vld [vmem:[%s6] sm:$0x1]
    %v740 = vlaneseq
    %v741 = vshrl.u32 %v740, 7
    %v742 = vsub.s32 0, %v741
    %v743 = vrot.slane %v738, %v742
    %v753 = vunpack.c.l.b16 %v730
    %v754 = vunpack.c.l.b16 %v731
    %v755 = vunpack.c.l.b16 %v732
    %v756 = vunpack.c.l.b16 %v733
    %v757 = vunpack.c.l.b16 %v734
    %v758 = vunpack.c.l.b16 %v735
    %v759 = vunpack.c.l.b16 %v736
    %v760 = vunpack.c.l.b16 %v737
    %v761 = vpack.c.b16 %v754, %v753
    %v762 = vpack.c.b16 %v756, %v755
    %v763 = vpack.c.b16 %v758, %v757
    %v764 = vpack.c.b16 %v760, %v759
    %vm769 = vcmask 523264
    %v771 = vsel %vm769, %v729, 0
    %773 = vmatprep.subr.bf16.mxu0 0
    %774 = vmatpush1.bf16.msra.mxu0 %v761
    %775 = vmatprep.subr.bf16.mxu0 0
    %776 = vmatpush1.bf16.msra.mxu0 %v762
    %777 = vmatprep.subr.bf16.mxu0 0
    %778 = vmatpush1.bf16.msra.mxu0 %v763
    %779 = vmatprep.subr.bf16.mxu0 0
    %780 = vmatpush1.bf16.msra.mxu0 %v764
    %781 = vmatprep.subr.bf16.mxu0 0
    %782 = vmatpush1.bf16.msra.mxu0 0
    %783 = vmatprep.subr.bf16.mxu0 0
    %784 = vmatpush1.bf16.msra.mxu0 0
    %785 = vmatprep.subr.bf16.mxu0 0
    %786 = vmatpush1.bf16.msra.mxu0 0
    %787 = vmatprep.subr.bf16.mxu0 0
    %788 = vmatpush1.bf16.msra.mxu0 0
    %789 = vmatprep.subr.bf16.mxu0 0
    %790 = vmatpush1.bf16.msra.mxu0 0
    %791 = vmatprep.subr.bf16.mxu0 0
    %792 = vmatpush1.bf16.msra.mxu0 0
    %793 = vmatprep.subr.bf16.mxu0 0
    %794 = vmatpush1.bf16.msra.mxu0 0
    %795 = vmatprep.subr.bf16.mxu0 0
    %796 = vmatpush1.bf16.msra.mxu0 0
    %797 = vmatprep.subr.bf16.mxu0 0
    %798 = vmatpush1.bf16.msra.mxu0 0
    %799 = vmatprep.subr.bf16.mxu0 0
    %800 = vmatpush1.bf16.msra.mxu0 0
    %801 = vmatprep.subr.bf16.mxu0 0
    %802 = vmatpush1.bf16.msra.mxu0 0
    %803 = vmatprep.subr.bf16.mxu0 0
    %804 = vmatpush1.bf16.msra.mxu0 0
    %805 = vmatprep.mubr.bf16.mxu0 0
    %806 = vmatmul.mubr.bf16.gmra.mrb[0].mxu0 %v771
    %v807 = vpop.f32.mrb[0].mxu0
    %v808 = vadd.f32 %v743, %v807
    %v809 = vpop.f32.mrb[0].mxu0
    %v810 = vpop.f32.mrb[0].mxu0
    %v811 = vpop.f32.mrb[0].mxu0
    %812 = vdwg.mxu0
    %vm813 = vcmask 74752
    %814 = vst.msk [vmem:[#allocation4] sm:$0x3] %vm813, %v808
    // Predicated region
    $region30: #{convnet_forward.5} parent=1 // pred_check
      _
    $region31: #{convnet_forward.5} parent=1 // pred_check_branch
      %816 = sbr.rel (0) target = $region33
    $region32: #{convnet_forward.5} parent=1 // pred_region
      %s818 = ssub.s32 32, 32
      %819 = vsyncadd [#allocation5], %s818
      %s821 = sshll.u32 [#allocation4], 4
      %s822 = int_to_ptr.vmem [resolvable:$true] %s821
      %824 = dma.vmem_to_hbm [thread:$0]  %s822, 32, %s7, [#allocation5]
    $region33: #{convnet_forward.5} parent=1 // pred_fallthru
      _
    // Predicated region
    $region34: #{convnet_forward.5} parent=1 // pred_check
      _
    $region35: #{convnet_forward.5} parent=1 // pred_check_branch
      %826 = sbr.rel (0) target = $region37
    $region36: #{convnet_forward.5} parent=1 // pred_region
      %827 = dma.done [#allocation5], 32
    $region37: #{convnet_forward.5} parent=1 // pred_fallthru
      _
    %828 = vsyncpa [#allocation5], 1

</llo_original>
